<compile_context>
chip_gen: v6e
topology: v6e:2x2x1
jax: 0.10.0
libtpu: 0.0.40
codegen_flags: <defaults>
</compile_context>

<pallas_src>
import functools

import jax
import jax.numpy as jnp
from jax.experimental import pallas as pl
from jax.experimental.pallas import tpu as pltpu

# Transconfig (model sizes fixed by the reference module)
D_MODEL = 7
D_K = 128            # == d_v
N_HEADS = 8
D_FF = 2048
EPS = 1e-5           # torch.nn.LayerNorm default (fresh LN: gamma=1, beta=0)

# dot_general dimension numbers for "A @ B.T" (contract last dims, no batch).
_DN_CONTRACT_LAST = (((1,), (1,)), ((), ()))


def _layernorm(x):
    # LayerNorm over last dim with identity affine params (the module builds a
    # fresh, untrained nn.LayerNorm inside forward). Biased variance = torch.
    mean = jnp.mean(x, axis=-1, keepdims=True)
    var = jnp.mean((x - mean) ** 2, axis=-1, keepdims=True)
    return (x - mean) * jax.lax.rsqrt(var + EPS)


def encoder_layer_kernel(x_ref, wqkv_ref, wo_t_ref, w1_ref, w2_t_ref,
                         out_ref, attn_ref, *, batch, seq):
    x = x_ref[...]                                             # (B*S, D_MODEL)

    # Fused Q/K/V projection: one wide matmul instead of three K=7 passes.
    qkv = jnp.dot(x, wqkv_ref[...], preferred_element_type=jnp.float32)
    hd = N_HEADS * D_K
    q = qkv[:, :hd]
    k = qkv[:, hd:2 * hd]
    v = qkv[:, 2 * hd:]

    scale = 1.0 / jnp.sqrt(jnp.float32(D_K))

    attn_blocks = []       # B*H blocks of (S, S) -> lane-dense (S, B*H*S) slab
    ctx_rows = []          # per-batch (S, H*Dk), kept entirely in vregs
    for b in range(batch):
        rows = slice(b * seq, (b + 1) * seq)
        ctx_heads = []
        for h in range(N_HEADS):
            cols = slice(h * D_K, (h + 1) * D_K)
            qh = q[rows, cols]                                 # (S, Dk)
            kh = k[rows, cols]                                 # (S, Dk)
            vh = v[rows, cols]                                 # (S, Dv)
            # Q @ K^T without materializing the transpose.
            scores = jax.lax.dot_general(
                qh, kh, _DN_CONTRACT_LAST,
                preferred_element_type=jnp.float32) * scale
            scores = scores - jnp.max(scores, axis=-1, keepdims=True)
            e = jnp.exp(scores)
            inv_denom = pl.reciprocal(
                jnp.sum(e, axis=-1, keepdims=True), approx=True)
            attn_h = e * inv_denom                             # (S, S)
            attn_blocks.append(attn_h)
            ctx_heads.append(
                jnp.dot(attn_h, vh, preferred_element_type=jnp.float32))
        ctx_rows.append(jnp.concatenate(ctx_heads, axis=1))    # (S, H*Dk)

    # Lane-dense attention-probability output: (S, B*H*S) == (8, 128) here.
    attn_ref[...] = jnp.concatenate(attn_blocks, axis=1)

    ctx = jnp.concatenate(ctx_rows, axis=0)                    # (B*S, H*Dk)

    # Output projection (wo stored transposed -> contract the 1024 axis),
    # residual + LayerNorm.
    attn_out = jax.lax.dot_general(ctx, wo_t_ref[...], _DN_CONTRACT_LAST,
                                   preferred_element_type=jnp.float32)
    y1 = _layernorm(attn_out + x)

    # Position-wise FFN (w2 stored transposed), residual + LayerNorm.
    hdn = jnp.maximum(
        jnp.dot(y1, w1_ref[...], preferred_element_type=jnp.float32), 0.0)
    ffn = jax.lax.dot_general(hdn, w2_t_ref[...], _DN_CONTRACT_LAST,
                              preferred_element_type=jnp.float32)
    out_ref[...] = _layernorm(ffn + y1)


@jax.jit
def encoder_layer(x, wq, wk, wv, wo, w1, w2):
    B, S, _ = x.shape
    x2d = x.reshape(B * S, D_MODEL)
    wqkv = jnp.concatenate([wq, wk, wv], axis=1)     # (D_MODEL, 3*H*Dk)
    wo_t = wo.T                                      # (D_MODEL, H*Dv)
    w2_t = w2.T                                      # (D_MODEL, D_FF)

    kernel = functools.partial(encoder_layer_kernel, batch=B, seq=S)
    full = lambda shape: pl.BlockSpec(shape, lambda i: (0,) * len(shape))

    out2d, attn_flat = pl.pallas_call(
        kernel,
        out_shape=(
            jax.ShapeDtypeStruct((B * S, D_MODEL), jnp.float32),
            jax.ShapeDtypeStruct((S, B * N_HEADS * S), jnp.float32),
        ),
        grid_spec=pltpu.PrefetchScalarGridSpec(
            num_scalar_prefetch=0,
            grid=(1,),
            in_specs=[
                full((B * S, D_MODEL)),              # x (batch folded into M)
                full((D_MODEL, 3 * N_HEADS * D_K)),  # fused W_QKV
                full((D_MODEL, N_HEADS * D_K)),      # fc weight, transposed
                full((D_MODEL, D_FF)),               # ffn W1
                full((D_MODEL, D_FF)),               # ffn W2, transposed
            ],
            out_specs=[
                full((B * S, D_MODEL)),
                full((S, B * N_HEADS * S)),          # lane-dense attn slab
            ],
        ),
        compiler_params=pltpu.CompilerParams(
            dimension_semantics=("arbitrary",)),
    )(x2d, wqkv, wo_t, w1, w2_t)

    out = out2d.reshape(B, S, D_MODEL)
    # (S, B*H*S) -> (S, B, H, S) -> (B, H, S, S): wrapper-side layout plumbing.
    attn = attn_flat.reshape(S, B, N_HEADS, S).transpose(1, 2, 0, 3)
    return out, attn


def reference(x, wq, wk, wv, wo, w1, w2):
    """Pure-JAX reference mirroring the PyTorch forward pass."""
    B, S, _ = x.shape
    q = (x @ wq).reshape(B, S, N_HEADS, D_K).transpose(0, 2, 1, 3)
    k = (x @ wk).reshape(B, S, N_HEADS, D_K).transpose(0, 2, 1, 3)
    v = (x @ wv).reshape(B, S, N_HEADS, D_K).transpose(0, 2, 1, 3)
    scores = jnp.einsum("bhqd,bhkd->bhqk", q, k) / jnp.sqrt(jnp.float32(D_K))
    attn = jax.nn.softmax(scores, axis=-1)
    ctx = jnp.einsum("bhqk,bhkd->bhqd", attn, v)
    ctx = ctx.transpose(0, 2, 1, 3).reshape(B, S, N_HEADS * D_K)
    y1 = _layernorm(ctx @ wo + x)
    ffn = jnp.maximum(y1 @ w1, 0.0) @ w2
    y2 = _layernorm(ffn + y1)
    return y2, attn


if __name__ == "__main__":
    key = jax.random.PRNGKey(0)
    kx, kq, kk, kv, ko, k1, k2 = jax.random.split(key, 7)

    B, S = 2, 8  # small batch / sequence length
    x = jax.random.normal(kx, (B, S, D_MODEL), dtype=jnp.float32)

    # Deterministic synthetic weights (stored [in, out]).
    init = lambda k, shape: (jax.random.normal(k, shape, jnp.float32) * 0.05)
    wq = init(kq, (D_MODEL, N_HEADS * D_K))
    wk = init(kk, (D_MODEL, N_HEADS * D_K))
    wv = init(kv, (D_MODEL, N_HEADS * D_K))
    wo = init(ko, (N_HEADS * D_K, D_MODEL))
    w1 = init(k1, (D_MODEL, D_FF))
    w2 = init(k2, (D_FF, D_MODEL))

    enc_out, attn = encoder_layer(x, wq, wk, wv, wo, w1, w2)
    enc_out, attn = jax.block_until_ready((enc_out, attn))

    ref_out, ref_attn = reference(x, wq, wk, wv, wo, w1, w2)
    # Tolerance leaves margin for the EUP approximate reciprocal in softmax.
    assert jnp.allclose(enc_out, ref_out, atol=2e-3, rtol=2e-3)
    assert jnp.allclose(attn, ref_attn, atol=2e-3, rtol=2e-3)

    print("KERNEL_OK")
</pallas_src>

<mosaic_0001>
module attributes {stable_mosaic.version = 11 : i64} {
  func.func @encoder_layer_kernel(%arg0: i32, %arg1: memref<16x7xf32, #tpu.memory_space<vmem>>, %arg2: memref<7x3072xf32, #tpu.memory_space<vmem>>, %arg3: memref<7x1024xf32, #tpu.memory_space<vmem>>, %arg4: memref<7x2048xf32, #tpu.memory_space<vmem>>, %arg5: memref<7x2048xf32, #tpu.memory_space<vmem>>, %arg6: memref<16x7xf32, #tpu.memory_space<vmem>>, %arg7: memref<8x128xf32, #tpu.memory_space<vmem>>) attributes {dimension_semantics = [#tpu.dimension_semantics<arbitrary>], iteration_bounds = array<i64: 1>, scalar_prefetch = 0 : i64, scratch_operands = 0 : i64, tpu.core_type = #tpu.core_type<tc>, window_params = [{pipeline_mode = #tpu.pipeline_mode<synchronous>, transform_indices = @transform_0, window_bounds = array<i64: 16, 7>}, {pipeline_mode = #tpu.pipeline_mode<synchronous>, transform_indices = @transform_1, window_bounds = array<i64: 7, 3072>}, {pipeline_mode = #tpu.pipeline_mode<synchronous>, transform_indices = @transform_2, window_bounds = array<i64: 7, 1024>}, {pipeline_mode = #tpu.pipeline_mode<synchronous>, transform_indices = @transform_3, window_bounds = array<i64: 7, 2048>}, {pipeline_mode = #tpu.pipeline_mode<synchronous>, transform_indices = @transform_4, window_bounds = array<i64: 7, 2048>}, {pipeline_mode = #tpu.pipeline_mode<synchronous>, transform_indices = @transform_5, window_bounds = array<i64: 16, 7>}, {pipeline_mode = #tpu.pipeline_mode<synchronous>, transform_indices = @transform_6, window_bounds = array<i64: 8, 128>}]} {
    %c0 = arith.constant 0 : index
    %c0_0 = arith.constant 0 : index
    %0 = vector.load %arg1[%c0, %c0_0] : memref<16x7xf32, #tpu.memory_space<vmem>>, vector<16x7xf32>
    %c0_1 = arith.constant 0 : index
    %c0_2 = arith.constant 0 : index
    %1 = vector.load %arg2[%c0_1, %c0_2] : memref<7x3072xf32, #tpu.memory_space<vmem>>, vector<7x3072xf32>
    %cst = arith.constant dense<0.000000e+00> : vector<16x3072xf32>
    %2 = tpu.matmul %0, %1, %cst {dimension_numbers = #tpu.dot_dimension_numbers<[1], [0], [0], [1], [0, 0, 1, 1], [], []>} : vector<16x7xf32>, vector<7x3072xf32>, vector<16x3072xf32> -> vector<16x3072xf32>
    %3 = vector.extract_strided_slice %2 {offsets = [0, 0], sizes = [16, 1024], strides = [1, 1]} : vector<16x3072xf32> to vector<16x1024xf32>
    %4 = vector.extract_strided_slice %2 {offsets = [0, 1024], sizes = [16, 1024], strides = [1, 1]} : vector<16x3072xf32> to vector<16x1024xf32>
    %5 = vector.extract_strided_slice %2 {offsets = [0, 2048], sizes = [16, 1024], strides = [1, 1]} : vector<16x3072xf32> to vector<16x1024xf32>
    %cst_3 = arith.constant 1.280000e+02 : f32
    %6 = math.sqrt %cst_3 : f32
    %cst_4 = arith.constant 1.000000e+00 : f32
    %7 = arith.divf %cst_4, %6 : f32
    %8 = vector.extract_strided_slice %3 {offsets = [0, 0], sizes = [8, 128], strides = [1, 1]} : vector<16x1024xf32> to vector<8x128xf32>
    %9 = vector.extract_strided_slice %4 {offsets = [0, 0], sizes = [8, 128], strides = [1, 1]} : vector<16x1024xf32> to vector<8x128xf32>
    %10 = vector.extract_strided_slice %5 {offsets = [0, 0], sizes = [8, 128], strides = [1, 1]} : vector<16x1024xf32> to vector<8x128xf32>
    %cst_5 = arith.constant dense<0.000000e+00> : vector<8x8xf32>
    %11 = tpu.matmul %8, %9, %cst_5 {dimension_numbers = #tpu.dot_dimension_numbers<[1], [1], [0], [0], [0, 0, 1, 0], [], []>} : vector<8x128xf32>, vector<8x128xf32>, vector<8x8xf32> -> vector<8x8xf32>
    %12 = vector.broadcast %7 : f32 to vector<8x8xf32>
    %13 = arith.mulf %11, %12 : vector<8x8xf32>
    %cst_6 = arith.constant dense<0xFF800000> : vector<8xf32>
    %14 = vector.multi_reduction <maximumf>, %13, %cst_6 [1] : vector<8x8xf32> to vector<8xf32>
    %15 = vector.shape_cast %14 : vector<8xf32> to vector<8x1xf32>
    %16 = vector.broadcast %15 : vector<8x1xf32> to vector<8x8xf32>
    %17 = arith.subf %13, %16 : vector<8x8xf32>
    %18 = math.exp %17 : vector<8x8xf32>
    %cst_7 = arith.constant dense<0.000000e+00> : vector<8xf32>
    %19 = vector.multi_reduction <add>, %18, %cst_7 [1] : vector<8x8xf32> to vector<8xf32>
    %20 = vector.shape_cast %19 : vector<8xf32> to vector<8x1xf32>
    %21 = tpu.reciprocal %20 {approx = true} : vector<8x1xf32> -> vector<8x1xf32>
    %22 = vector.broadcast %21 : vector<8x1xf32> to vector<8x8xf32>
    %23 = arith.mulf %18, %22 : vector<8x8xf32>
    %cst_8 = arith.constant dense<0.000000e+00> : vector<8x128xf32>
    %24 = tpu.matmul %23, %10, %cst_8 {dimension_numbers = #tpu.dot_dimension_numbers<[1], [0], [0], [1], [0, 0, 1, 1], [], []>} : vector<8x8xf32>, vector<8x128xf32>, vector<8x128xf32> -> vector<8x128xf32>
    %25 = vector.extract_strided_slice %3 {offsets = [0, 128], sizes = [8, 128], strides = [1, 1]} : vector<16x1024xf32> to vector<8x128xf32>
    %26 = vector.extract_strided_slice %4 {offsets = [0, 128], sizes = [8, 128], strides = [1, 1]} : vector<16x1024xf32> to vector<8x128xf32>
    %27 = vector.extract_strided_slice %5 {offsets = [0, 128], sizes = [8, 128], strides = [1, 1]} : vector<16x1024xf32> to vector<8x128xf32>
    %cst_9 = arith.constant dense<0.000000e+00> : vector<8x8xf32>
    %28 = tpu.matmul %25, %26, %cst_9 {dimension_numbers = #tpu.dot_dimension_numbers<[1], [1], [0], [0], [0, 0, 1, 0], [], []>} : vector<8x128xf32>, vector<8x128xf32>, vector<8x8xf32> -> vector<8x8xf32>
    %29 = vector.broadcast %7 : f32 to vector<8x8xf32>
    %30 = arith.mulf %28, %29 : vector<8x8xf32>
    %cst_10 = arith.constant dense<0xFF800000> : vector<8xf32>
    %31 = vector.multi_reduction <maximumf>, %30, %cst_10 [1] : vector<8x8xf32> to vector<8xf32>
    %32 = vector.shape_cast %31 : vector<8xf32> to vector<8x1xf32>
    %33 = vector.broadcast %32 : vector<8x1xf32> to vector<8x8xf32>
    %34 = arith.subf %30, %33 : vector<8x8xf32>
    %35 = math.exp %34 : vector<8x8xf32>
    %cst_11 = arith.constant dense<0.000000e+00> : vector<8xf32>
    %36 = vector.multi_reduction <add>, %35, %cst_11 [1] : vector<8x8xf32> to vector<8xf32>
    %37 = vector.shape_cast %36 : vector<8xf32> to vector<8x1xf32>
    %38 = tpu.reciprocal %37 {approx = true} : vector<8x1xf32> -> vector<8x1xf32>
    %39 = vector.broadcast %38 : vector<8x1xf32> to vector<8x8xf32>
    %40 = arith.mulf %35, %39 : vector<8x8xf32>
    %cst_12 = arith.constant dense<0.000000e+00> : vector<8x128xf32>
    %41 = tpu.matmul %40, %27, %cst_12 {dimension_numbers = #tpu.dot_dimension_numbers<[1], [0], [0], [1], [0, 0, 1, 1], [], []>} : vector<8x8xf32>, vector<8x128xf32>, vector<8x128xf32> -> vector<8x128xf32>
    %42 = vector.extract_strided_slice %3 {offsets = [0, 256], sizes = [8, 128], strides = [1, 1]} : vector<16x1024xf32> to vector<8x128xf32>
    %43 = vector.extract_strided_slice %4 {offsets = [0, 256], sizes = [8, 128], strides = [1, 1]} : vector<16x1024xf32> to vector<8x128xf32>
    %44 = vector.extract_strided_slice %5 {offsets = [0, 256], sizes = [8, 128], strides = [1, 1]} : vector<16x1024xf32> to vector<8x128xf32>
    %cst_13 = arith.constant dense<0.000000e+00> : vector<8x8xf32>
    %45 = tpu.matmul %42, %43, %cst_13 {dimension_numbers = #tpu.dot_dimension_numbers<[1], [1], [0], [0], [0, 0, 1, 0], [], []>} : vector<8x128xf32>, vector<8x128xf32>, vector<8x8xf32> -> vector<8x8xf32>
    %46 = vector.broadcast %7 : f32 to vector<8x8xf32>
    %47 = arith.mulf %45, %46 : vector<8x8xf32>
    %cst_14 = arith.constant dense<0xFF800000> : vector<8xf32>
    %48 = vector.multi_reduction <maximumf>, %47, %cst_14 [1] : vector<8x8xf32> to vector<8xf32>
    %49 = vector.shape_cast %48 : vector<8xf32> to vector<8x1xf32>
    %50 = vector.broadcast %49 : vector<8x1xf32> to vector<8x8xf32>
    %51 = arith.subf %47, %50 : vector<8x8xf32>
    %52 = math.exp %51 : vector<8x8xf32>
    %cst_15 = arith.constant dense<0.000000e+00> : vector<8xf32>
    %53 = vector.multi_reduction <add>, %52, %cst_15 [1] : vector<8x8xf32> to vector<8xf32>
    %54 = vector.shape_cast %53 : vector<8xf32> to vector<8x1xf32>
    %55 = tpu.reciprocal %54 {approx = true} : vector<8x1xf32> -> vector<8x1xf32>
    %56 = vector.broadcast %55 : vector<8x1xf32> to vector<8x8xf32>
    %57 = arith.mulf %52, %56 : vector<8x8xf32>
    %cst_16 = arith.constant dense<0.000000e+00> : vector<8x128xf32>
    %58 = tpu.matmul %57, %44, %cst_16 {dimension_numbers = #tpu.dot_dimension_numbers<[1], [0], [0], [1], [0, 0, 1, 1], [], []>} : vector<8x8xf32>, vector<8x128xf32>, vector<8x128xf32> -> vector<8x128xf32>
    %59 = vector.extract_strided_slice %3 {offsets = [0, 384], sizes = [8, 128], strides = [1, 1]} : vector<16x1024xf32> to vector<8x128xf32>
    %60 = vector.extract_strided_slice %4 {offsets = [0, 384], sizes = [8, 128], strides = [1, 1]} : vector<16x1024xf32> to vector<8x128xf32>
    %61 = vector.extract_strided_slice %5 {offsets = [0, 384], sizes = [8, 128], strides = [1, 1]} : vector<16x1024xf32> to vector<8x128xf32>
    %cst_17 = arith.constant dense<0.000000e+00> : vector<8x8xf32>
    %62 = tpu.matmul %59, %60, %cst_17 {dimension_numbers = #tpu.dot_dimension_numbers<[1], [1], [0], [0], [0, 0, 1, 0], [], []>} : vector<8x128xf32>, vector<8x128xf32>, vector<8x8xf32> -> vector<8x8xf32>
    %63 = vector.broadcast %7 : f32 to vector<8x8xf32>
    %64 = arith.mulf %62, %63 : vector<8x8xf32>
    %cst_18 = arith.constant dense<0xFF800000> : vector<8xf32>
    %65 = vector.multi_reduction <maximumf>, %64, %cst_18 [1] : vector<8x8xf32> to vector<8xf32>
    %66 = vector.shape_cast %65 : vector<8xf32> to vector<8x1xf32>
    %67 = vector.broadcast %66 : vector<8x1xf32> to vector<8x8xf32>
    %68 = arith.subf %64, %67 : vector<8x8xf32>
    %69 = math.exp %68 : vector<8x8xf32>
    %cst_19 = arith.constant dense<0.000000e+00> : vector<8xf32>
    %70 = vector.multi_reduction <add>, %69, %cst_19 [1] : vector<8x8xf32> to vector<8xf32>
    %71 = vector.shape_cast %70 : vector<8xf32> to vector<8x1xf32>
    %72 = tpu.reciprocal %71 {approx = true} : vector<8x1xf32> -> vector<8x1xf32>
    %73 = vector.broadcast %72 : vector<8x1xf32> to vector<8x8xf32>
    %74 = arith.mulf %69, %73 : vector<8x8xf32>
    %cst_20 = arith.constant dense<0.000000e+00> : vector<8x128xf32>
    %75 = tpu.matmul %74, %61, %cst_20 {dimension_numbers = #tpu.dot_dimension_numbers<[1], [0], [0], [1], [0, 0, 1, 1], [], []>} : vector<8x8xf32>, vector<8x128xf32>, vector<8x128xf32> -> vector<8x128xf32>
    %76 = vector.extract_strided_slice %3 {offsets = [0, 512], sizes = [8, 128], strides = [1, 1]} : vector<16x1024xf32> to vector<8x128xf32>
    %77 = vector.extract_strided_slice %4 {offsets = [0, 512], sizes = [8, 128], strides = [1, 1]} : vector<16x1024xf32> to vector<8x128xf32>
    %78 = vector.extract_strided_slice %5 {offsets = [0, 512], sizes = [8, 128], strides = [1, 1]} : vector<16x1024xf32> to vector<8x128xf32>
    %cst_21 = arith.constant dense<0.000000e+00> : vector<8x8xf32>
    %79 = tpu.matmul %76, %77, %cst_21 {dimension_numbers = #tpu.dot_dimension_numbers<[1], [1], [0], [0], [0, 0, 1, 0], [], []>} : vector<8x128xf32>, vector<8x128xf32>, vector<8x8xf32> -> vector<8x8xf32>
    %80 = vector.broadcast %7 : f32 to vector<8x8xf32>
    %81 = arith.mulf %79, %80 : vector<8x8xf32>
    %cst_22 = arith.constant dense<0xFF800000> : vector<8xf32>
    %82 = vector.multi_reduction <maximumf>, %81, %cst_22 [1] : vector<8x8xf32> to vector<8xf32>
    %83 = vector.shape_cast %82 : vector<8xf32> to vector<8x1xf32>
    %84 = vector.broadcast %83 : vector<8x1xf32> to vector<8x8xf32>
    %85 = arith.subf %81, %84 : vector<8x8xf32>
    %86 = math.exp %85 : vector<8x8xf32>
    %cst_23 = arith.constant dense<0.000000e+00> : vector<8xf32>
    %87 = vector.multi_reduction <add>, %86, %cst_23 [1] : vector<8x8xf32> to vector<8xf32>
    %88 = vector.shape_cast %87 : vector<8xf32> to vector<8x1xf32>
    %89 = tpu.reciprocal %88 {approx = true} : vector<8x1xf32> -> vector<8x1xf32>
    %90 = vector.broadcast %89 : vector<8x1xf32> to vector<8x8xf32>
    %91 = arith.mulf %86, %90 : vector<8x8xf32>
    %cst_24 = arith.constant dense<0.000000e+00> : vector<8x128xf32>
    %92 = tpu.matmul %91, %78, %cst_24 {dimension_numbers = #tpu.dot_dimension_numbers<[1], [0], [0], [1], [0, 0, 1, 1], [], []>} : vector<8x8xf32>, vector<8x128xf32>, vector<8x128xf32> -> vector<8x128xf32>
    %93 = vector.extract_strided_slice %3 {offsets = [0, 640], sizes = [8, 128], strides = [1, 1]} : vector<16x1024xf32> to vector<8x128xf32>
    %94 = vector.extract_strided_slice %4 {offsets = [0, 640], sizes = [8, 128], strides = [1, 1]} : vector<16x1024xf32> to vector<8x128xf32>
    %95 = vector.extract_strided_slice %5 {offsets = [0, 640], sizes = [8, 128], strides = [1, 1]} : vector<16x1024xf32> to vector<8x128xf32>
    %cst_25 = arith.constant dense<0.000000e+00> : vector<8x8xf32>
    %96 = tpu.matmul %93, %94, %cst_25 {dimension_numbers = #tpu.dot_dimension_numbers<[1], [1], [0], [0], [0, 0, 1, 0], [], []>} : vector<8x128xf32>, vector<8x128xf32>, vector<8x8xf32> -> vector<8x8xf32>
    %97 = vector.broadcast %7 : f32 to vector<8x8xf32>
    %98 = arith.mulf %96, %97 : vector<8x8xf32>
    %cst_26 = arith.constant dense<0xFF800000> : vector<8xf32>
    %99 = vector.multi_reduction <maximumf>, %98, %cst_26 [1] : vector<8x8xf32> to vector<8xf32>
    %100 = vector.shape_cast %99 : vector<8xf32> to vector<8x1xf32>
    %101 = vector.broadcast %100 : vector<8x1xf32> to vector<8x8xf32>
    %102 = arith.subf %98, %101 : vector<8x8xf32>
    %103 = math.exp %102 : vector<8x8xf32>
    %cst_27 = arith.constant dense<0.000000e+00> : vector<8xf32>
    %104 = vector.multi_reduction <add>, %103, %cst_27 [1] : vector<8x8xf32> to vector<8xf32>
    %105 = vector.shape_cast %104 : vector<8xf32> to vector<8x1xf32>
    %106 = tpu.reciprocal %105 {approx = true} : vector<8x1xf32> -> vector<8x1xf32>
    %107 = vector.broadcast %106 : vector<8x1xf32> to vector<8x8xf32>
    %108 = arith.mulf %103, %107 : vector<8x8xf32>
    %cst_28 = arith.constant dense<0.000000e+00> : vector<8x128xf32>
    %109 = tpu.matmul %108, %95, %cst_28 {dimension_numbers = #tpu.dot_dimension_numbers<[1], [0], [0], [1], [0, 0, 1, 1], [], []>} : vector<8x8xf32>, vector<8x128xf32>, vector<8x128xf32> -> vector<8x128xf32>
    %110 = vector.extract_strided_slice %3 {offsets = [0, 768], sizes = [8, 128], strides = [1, 1]} : vector<16x1024xf32> to vector<8x128xf32>
    %111 = vector.extract_strided_slice %4 {offsets = [0, 768], sizes = [8, 128], strides = [1, 1]} : vector<16x1024xf32> to vector<8x128xf32>
    %112 = vector.extract_strided_slice %5 {offsets = [0, 768], sizes = [8, 128], strides = [1, 1]} : vector<16x1024xf32> to vector<8x128xf32>
    %cst_29 = arith.constant dense<0.000000e+00> : vector<8x8xf32>
    %113 = tpu.matmul %110, %111, %cst_29 {dimension_numbers = #tpu.dot_dimension_numbers<[1], [1], [0], [0], [0, 0, 1, 0], [], []>} : vector<8x128xf32>, vector<8x128xf32>, vector<8x8xf32> -> vector<8x8xf32>
    %114 = vector.broadcast %7 : f32 to vector<8x8xf32>
    %115 = arith.mulf %113, %114 : vector<8x8xf32>
    %cst_30 = arith.constant dense<0xFF800000> : vector<8xf32>
    %116 = vector.multi_reduction <maximumf>, %115, %cst_30 [1] : vector<8x8xf32> to vector<8xf32>
    %117 = vector.shape_cast %116 : vector<8xf32> to vector<8x1xf32>
    %118 = vector.broadcast %117 : vector<8x1xf32> to vector<8x8xf32>
    %119 = arith.subf %115, %118 : vector<8x8xf32>
    %120 = math.exp %119 : vector<8x8xf32>
    %cst_31 = arith.constant dense<0.000000e+00> : vector<8xf32>
    %121 = vector.multi_reduction <add>, %120, %cst_31 [1] : vector<8x8xf32> to vector<8xf32>
    %122 = vector.shape_cast %121 : vector<8xf32> to vector<8x1xf32>
    %123 = tpu.reciprocal %122 {approx = true} : vector<8x1xf32> -> vector<8x1xf32>
    %124 = vector.broadcast %123 : vector<8x1xf32> to vector<8x8xf32>
    %125 = arith.mulf %120, %124 : vector<8x8xf32>
    %cst_32 = arith.constant dense<0.000000e+00> : vector<8x128xf32>
    %126 = tpu.matmul %125, %112, %cst_32 {dimension_numbers = #tpu.dot_dimension_numbers<[1], [0], [0], [1], [0, 0, 1, 1], [], []>} : vector<8x8xf32>, vector<8x128xf32>, vector<8x128xf32> -> vector<8x128xf32>
    %127 = vector.extract_strided_slice %3 {offsets = [0, 896], sizes = [8, 128], strides = [1, 1]} : vector<16x1024xf32> to vector<8x128xf32>
    %128 = vector.extract_strided_slice %4 {offsets = [0, 896], sizes = [8, 128], strides = [1, 1]} : vector<16x1024xf32> to vector<8x128xf32>
    %129 = vector.extract_strided_slice %5 {offsets = [0, 896], sizes = [8, 128], strides = [1, 1]} : vector<16x1024xf32> to vector<8x128xf32>
    %cst_33 = arith.constant dense<0.000000e+00> : vector<8x8xf32>
    %130 = tpu.matmul %127, %128, %cst_33 {dimension_numbers = #tpu.dot_dimension_numbers<[1], [1], [0], [0], [0, 0, 1, 0], [], []>} : vector<8x128xf32>, vector<8x128xf32>, vector<8x8xf32> -> vector<8x8xf32>
    %131 = vector.broadcast %7 : f32 to vector<8x8xf32>
    %132 = arith.mulf %130, %131 : vector<8x8xf32>
    %cst_34 = arith.constant dense<0xFF800000> : vector<8xf32>
    %133 = vector.multi_reduction <maximumf>, %132, %cst_34 [1] : vector<8x8xf32> to vector<8xf32>
    %134 = vector.shape_cast %133 : vector<8xf32> to vector<8x1xf32>
    %135 = vector.broadcast %134 : vector<8x1xf32> to vector<8x8xf32>
    %136 = arith.subf %132, %135 : vector<8x8xf32>
    %137 = math.exp %136 : vector<8x8xf32>
    %cst_35 = arith.constant dense<0.000000e+00> : vector<8xf32>
    %138 = vector.multi_reduction <add>, %137, %cst_35 [1] : vector<8x8xf32> to vector<8xf32>
    %139 = vector.shape_cast %138 : vector<8xf32> to vector<8x1xf32>
    %140 = tpu.reciprocal %139 {approx = true} : vector<8x1xf32> -> vector<8x1xf32>
    %141 = vector.broadcast %140 : vector<8x1xf32> to vector<8x8xf32>
    %142 = arith.mulf %137, %141 : vector<8x8xf32>
    %cst_36 = arith.constant dense<0.000000e+00> : vector<8x128xf32>
    %143 = tpu.matmul %142, %129, %cst_36 {dimension_numbers = #tpu.dot_dimension_numbers<[1], [0], [0], [1], [0, 0, 1, 1], [], []>} : vector<8x8xf32>, vector<8x128xf32>, vector<8x128xf32> -> vector<8x128xf32>
    %144 = tpu.concatenate %24, %41, %58, %75, %92, %109, %126, %143 in 1 : vector<8x128xf32>, vector<8x128xf32>, vector<8x128xf32>, vector<8x128xf32>, vector<8x128xf32>, vector<8x128xf32>, vector<8x128xf32>, vector<8x128xf32> -> vector<8x1024xf32>
    %145 = vector.extract_strided_slice %3 {offsets = [8, 0], sizes = [8, 128], strides = [1, 1]} : vector<16x1024xf32> to vector<8x128xf32>
    %146 = vector.extract_strided_slice %4 {offsets = [8, 0], sizes = [8, 128], strides = [1, 1]} : vector<16x1024xf32> to vector<8x128xf32>
    %147 = vector.extract_strided_slice %5 {offsets = [8, 0], sizes = [8, 128], strides = [1, 1]} : vector<16x1024xf32> to vector<8x128xf32>
    %cst_37 = arith.constant dense<0.000000e+00> : vector<8x8xf32>
    %148 = tpu.matmul %145, %146, %cst_37 {dimension_numbers = #tpu.dot_dimension_numbers<[1], [1], [0], [0], [0, 0, 1, 0], [], []>} : vector<8x128xf32>, vector<8x128xf32>, vector<8x8xf32> -> vector<8x8xf32>
    %149 = vector.broadcast %7 : f32 to vector<8x8xf32>
    %150 = arith.mulf %148, %149 : vector<8x8xf32>
    %cst_38 = arith.constant dense<0xFF800000> : vector<8xf32>
    %151 = vector.multi_reduction <maximumf>, %150, %cst_38 [1] : vector<8x8xf32> to vector<8xf32>
    %152 = vector.shape_cast %151 : vector<8xf32> to vector<8x1xf32>
    %153 = vector.broadcast %152 : vector<8x1xf32> to vector<8x8xf32>
    %154 = arith.subf %150, %153 : vector<8x8xf32>
    %155 = math.exp %154 : vector<8x8xf32>
    %cst_39 = arith.constant dense<0.000000e+00> : vector<8xf32>
    %156 = vector.multi_reduction <add>, %155, %cst_39 [1] : vector<8x8xf32> to vector<8xf32>
    %157 = vector.shape_cast %156 : vector<8xf32> to vector<8x1xf32>
    %158 = tpu.reciprocal %157 {approx = true} : vector<8x1xf32> -> vector<8x1xf32>
    %159 = vector.broadcast %158 : vector<8x1xf32> to vector<8x8xf32>
    %160 = arith.mulf %155, %159 : vector<8x8xf32>
    %cst_40 = arith.constant dense<0.000000e+00> : vector<8x128xf32>
    %161 = tpu.matmul %160, %147, %cst_40 {dimension_numbers = #tpu.dot_dimension_numbers<[1], [0], [0], [1], [0, 0, 1, 1], [], []>} : vector<8x8xf32>, vector<8x128xf32>, vector<8x128xf32> -> vector<8x128xf32>
    %162 = vector.extract_strided_slice %3 {offsets = [8, 128], sizes = [8, 128], strides = [1, 1]} : vector<16x1024xf32> to vector<8x128xf32>
    %163 = vector.extract_strided_slice %4 {offsets = [8, 128], sizes = [8, 128], strides = [1, 1]} : vector<16x1024xf32> to vector<8x128xf32>
    %164 = vector.extract_strided_slice %5 {offsets = [8, 128], sizes = [8, 128], strides = [1, 1]} : vector<16x1024xf32> to vector<8x128xf32>
    %cst_41 = arith.constant dense<0.000000e+00> : vector<8x8xf32>
    %165 = tpu.matmul %162, %163, %cst_41 {dimension_numbers = #tpu.dot_dimension_numbers<[1], [1], [0], [0], [0, 0, 1, 0], [], []>} : vector<8x128xf32>, vector<8x128xf32>, vector<8x8xf32> -> vector<8x8xf32>
    %166 = vector.broadcast %7 : f32 to vector<8x8xf32>
    %167 = arith.mulf %165, %166 : vector<8x8xf32>
    %cst_42 = arith.constant dense<0xFF800000> : vector<8xf32>
    %168 = vector.multi_reduction <maximumf>, %167, %cst_42 [1] : vector<8x8xf32> to vector<8xf32>
    %169 = vector.shape_cast %168 : vector<8xf32> to vector<8x1xf32>
    %170 = vector.broadcast %169 : vector<8x1xf32> to vector<8x8xf32>
    %171 = arith.subf %167, %170 : vector<8x8xf32>
    %172 = math.exp %171 : vector<8x8xf32>
    %cst_43 = arith.constant dense<0.000000e+00> : vector<8xf32>
    %173 = vector.multi_reduction <add>, %172, %cst_43 [1] : vector<8x8xf32> to vector<8xf32>
    %174 = vector.shape_cast %173 : vector<8xf32> to vector<8x1xf32>
    %175 = tpu.reciprocal %174 {approx = true} : vector<8x1xf32> -> vector<8x1xf32>
    %176 = vector.broadcast %175 : vector<8x1xf32> to vector<8x8xf32>
    %177 = arith.mulf %172, %176 : vector<8x8xf32>
    %cst_44 = arith.constant dense<0.000000e+00> : vector<8x128xf32>
    %178 = tpu.matmul %177, %164, %cst_44 {dimension_numbers = #tpu.dot_dimension_numbers<[1], [0], [0], [1], [0, 0, 1, 1], [], []>} : vector<8x8xf32>, vector<8x128xf32>, vector<8x128xf32> -> vector<8x128xf32>
    %179 = vector.extract_strided_slice %3 {offsets = [8, 256], sizes = [8, 128], strides = [1, 1]} : vector<16x1024xf32> to vector<8x128xf32>
    %180 = vector.extract_strided_slice %4 {offsets = [8, 256], sizes = [8, 128], strides = [1, 1]} : vector<16x1024xf32> to vector<8x128xf32>
    %181 = vector.extract_strided_slice %5 {offsets = [8, 256], sizes = [8, 128], strides = [1, 1]} : vector<16x1024xf32> to vector<8x128xf32>
    %cst_45 = arith.constant dense<0.000000e+00> : vector<8x8xf32>
    %182 = tpu.matmul %179, %180, %cst_45 {dimension_numbers = #tpu.dot_dimension_numbers<[1], [1], [0], [0], [0, 0, 1, 0], [], []>} : vector<8x128xf32>, vector<8x128xf32>, vector<8x8xf32> -> vector<8x8xf32>
    %183 = vector.broadcast %7 : f32 to vector<8x8xf32>
    %184 = arith.mulf %182, %183 : vector<8x8xf32>
    %cst_46 = arith.constant dense<0xFF800000> : vector<8xf32>
    %185 = vector.multi_reduction <maximumf>, %184, %cst_46 [1] : vector<8x8xf32> to vector<8xf32>
    %186 = vector.shape_cast %185 : vector<8xf32> to vector<8x1xf32>
    %187 = vector.broadcast %186 : vector<8x1xf32> to vector<8x8xf32>
    %188 = arith.subf %184, %187 : vector<8x8xf32>
    %189 = math.exp %188 : vector<8x8xf32>
    %cst_47 = arith.constant dense<0.000000e+00> : vector<8xf32>
    %190 = vector.multi_reduction <add>, %189, %cst_47 [1] : vector<8x8xf32> to vector<8xf32>
    %191 = vector.shape_cast %190 : vector<8xf32> to vector<8x1xf32>
    %192 = tpu.reciprocal %191 {approx = true} : vector<8x1xf32> -> vector<8x1xf32>
    %193 = vector.broadcast %192 : vector<8x1xf32> to vector<8x8xf32>
    %194 = arith.mulf %189, %193 : vector<8x8xf32>
    %cst_48 = arith.constant dense<0.000000e+00> : vector<8x128xf32>
    %195 = tpu.matmul %194, %181, %cst_48 {dimension_numbers = #tpu.dot_dimension_numbers<[1], [0], [0], [1], [0, 0, 1, 1], [], []>} : vector<8x8xf32>, vector<8x128xf32>, vector<8x128xf32> -> vector<8x128xf32>
    %196 = vector.extract_strided_slice %3 {offsets = [8, 384], sizes = [8, 128], strides = [1, 1]} : vector<16x1024xf32> to vector<8x128xf32>
    %197 = vector.extract_strided_slice %4 {offsets = [8, 384], sizes = [8, 128], strides = [1, 1]} : vector<16x1024xf32> to vector<8x128xf32>
    %198 = vector.extract_strided_slice %5 {offsets = [8, 384], sizes = [8, 128], strides = [1, 1]} : vector<16x1024xf32> to vector<8x128xf32>
    %cst_49 = arith.constant dense<0.000000e+00> : vector<8x8xf32>
    %199 = tpu.matmul %196, %197, %cst_49 {dimension_numbers = #tpu.dot_dimension_numbers<[1], [1], [0], [0], [0, 0, 1, 0], [], []>} : vector<8x128xf32>, vector<8x128xf32>, vector<8x8xf32> -> vector<8x8xf32>
    %200 = vector.broadcast %7 : f32 to vector<8x8xf32>
    %201 = arith.mulf %199, %200 : vector<8x8xf32>
    %cst_50 = arith.constant dense<0xFF800000> : vector<8xf32>
    %202 = vector.multi_reduction <maximumf>, %201, %cst_50 [1] : vector<8x8xf32> to vector<8xf32>
    %203 = vector.shape_cast %202 : vector<8xf32> to vector<8x1xf32>
    %204 = vector.broadcast %203 : vector<8x1xf32> to vector<8x8xf32>
    %205 = arith.subf %201, %204 : vector<8x8xf32>
    %206 = math.exp %205 : vector<8x8xf32>
    %cst_51 = arith.constant dense<0.000000e+00> : vector<8xf32>
    %207 = vector.multi_reduction <add>, %206, %cst_51 [1] : vector<8x8xf32> to vector<8xf32>
    %208 = vector.shape_cast %207 : vector<8xf32> to vector<8x1xf32>
    %209 = tpu.reciprocal %208 {approx = true} : vector<8x1xf32> -> vector<8x1xf32>
    %210 = vector.broadcast %209 : vector<8x1xf32> to vector<8x8xf32>
    %211 = arith.mulf %206, %210 : vector<8x8xf32>
    %cst_52 = arith.constant dense<0.000000e+00> : vector<8x128xf32>
    %212 = tpu.matmul %211, %198, %cst_52 {dimension_numbers = #tpu.dot_dimension_numbers<[1], [0], [0], [1], [0, 0, 1, 1], [], []>} : vector<8x8xf32>, vector<8x128xf32>, vector<8x128xf32> -> vector<8x128xf32>
    %213 = vector.extract_strided_slice %3 {offsets = [8, 512], sizes = [8, 128], strides = [1, 1]} : vector<16x1024xf32> to vector<8x128xf32>
    %214 = vector.extract_strided_slice %4 {offsets = [8, 512], sizes = [8, 128], strides = [1, 1]} : vector<16x1024xf32> to vector<8x128xf32>
    %215 = vector.extract_strided_slice %5 {offsets = [8, 512], sizes = [8, 128], strides = [1, 1]} : vector<16x1024xf32> to vector<8x128xf32>
    %cst_53 = arith.constant dense<0.000000e+00> : vector<8x8xf32>
    %216 = tpu.matmul %213, %214, %cst_53 {dimension_numbers = #tpu.dot_dimension_numbers<[1], [1], [0], [0], [0, 0, 1, 0], [], []>} : vector<8x128xf32>, vector<8x128xf32>, vector<8x8xf32> -> vector<8x8xf32>
    %217 = vector.broadcast %7 : f32 to vector<8x8xf32>
    %218 = arith.mulf %216, %217 : vector<8x8xf32>
    %cst_54 = arith.constant dense<0xFF800000> : vector<8xf32>
    %219 = vector.multi_reduction <maximumf>, %218, %cst_54 [1] : vector<8x8xf32> to vector<8xf32>
    %220 = vector.shape_cast %219 : vector<8xf32> to vector<8x1xf32>
    %221 = vector.broadcast %220 : vector<8x1xf32> to vector<8x8xf32>
    %222 = arith.subf %218, %221 : vector<8x8xf32>
    %223 = math.exp %222 : vector<8x8xf32>
    %cst_55 = arith.constant dense<0.000000e+00> : vector<8xf32>
    %224 = vector.multi_reduction <add>, %223, %cst_55 [1] : vector<8x8xf32> to vector<8xf32>
    %225 = vector.shape_cast %224 : vector<8xf32> to vector<8x1xf32>
    %226 = tpu.reciprocal %225 {approx = true} : vector<8x1xf32> -> vector<8x1xf32>
    %227 = vector.broadcast %226 : vector<8x1xf32> to vector<8x8xf32>
    %228 = arith.mulf %223, %227 : vector<8x8xf32>
    %cst_56 = arith.constant dense<0.000000e+00> : vector<8x128xf32>
    %229 = tpu.matmul %228, %215, %cst_56 {dimension_numbers = #tpu.dot_dimension_numbers<[1], [0], [0], [1], [0, 0, 1, 1], [], []>} : vector<8x8xf32>, vector<8x128xf32>, vector<8x128xf32> -> vector<8x128xf32>
    %230 = vector.extract_strided_slice %3 {offsets = [8, 640], sizes = [8, 128], strides = [1, 1]} : vector<16x1024xf32> to vector<8x128xf32>
    %231 = vector.extract_strided_slice %4 {offsets = [8, 640], sizes = [8, 128], strides = [1, 1]} : vector<16x1024xf32> to vector<8x128xf32>
    %232 = vector.extract_strided_slice %5 {offsets = [8, 640], sizes = [8, 128], strides = [1, 1]} : vector<16x1024xf32> to vector<8x128xf32>
    %cst_57 = arith.constant dense<0.000000e+00> : vector<8x8xf32>
    %233 = tpu.matmul %230, %231, %cst_57 {dimension_numbers = #tpu.dot_dimension_numbers<[1], [1], [0], [0], [0, 0, 1, 0], [], []>} : vector<8x128xf32>, vector<8x128xf32>, vector<8x8xf32> -> vector<8x8xf32>
    %234 = vector.broadcast %7 : f32 to vector<8x8xf32>
    %235 = arith.mulf %233, %234 : vector<8x8xf32>
    %cst_58 = arith.constant dense<0xFF800000> : vector<8xf32>
    %236 = vector.multi_reduction <maximumf>, %235, %cst_58 [1] : vector<8x8xf32> to vector<8xf32>
    %237 = vector.shape_cast %236 : vector<8xf32> to vector<8x1xf32>
    %238 = vector.broadcast %237 : vector<8x1xf32> to vector<8x8xf32>
    %239 = arith.subf %235, %238 : vector<8x8xf32>
    %240 = math.exp %239 : vector<8x8xf32>
    %cst_59 = arith.constant dense<0.000000e+00> : vector<8xf32>
    %241 = vector.multi_reduction <add>, %240, %cst_59 [1] : vector<8x8xf32> to vector<8xf32>
    %242 = vector.shape_cast %241 : vector<8xf32> to vector<8x1xf32>
    %243 = tpu.reciprocal %242 {approx = true} : vector<8x1xf32> -> vector<8x1xf32>
    %244 = vector.broadcast %243 : vector<8x1xf32> to vector<8x8xf32>
    %245 = arith.mulf %240, %244 : vector<8x8xf32>
    %cst_60 = arith.constant dense<0.000000e+00> : vector<8x128xf32>
    %246 = tpu.matmul %245, %232, %cst_60 {dimension_numbers = #tpu.dot_dimension_numbers<[1], [0], [0], [1], [0, 0, 1, 1], [], []>} : vector<8x8xf32>, vector<8x128xf32>, vector<8x128xf32> -> vector<8x128xf32>
    %247 = vector.extract_strided_slice %3 {offsets = [8, 768], sizes = [8, 128], strides = [1, 1]} : vector<16x1024xf32> to vector<8x128xf32>
    %248 = vector.extract_strided_slice %4 {offsets = [8, 768], sizes = [8, 128], strides = [1, 1]} : vector<16x1024xf32> to vector<8x128xf32>
    %249 = vector.extract_strided_slice %5 {offsets = [8, 768], sizes = [8, 128], strides = [1, 1]} : vector<16x1024xf32> to vector<8x128xf32>
    %cst_61 = arith.constant dense<0.000000e+00> : vector<8x8xf32>
    %250 = tpu.matmul %247, %248, %cst_61 {dimension_numbers = #tpu.dot_dimension_numbers<[1], [1], [0], [0], [0, 0, 1, 0], [], []>} : vector<8x128xf32>, vector<8x128xf32>, vector<8x8xf32> -> vector<8x8xf32>
    %251 = vector.broadcast %7 : f32 to vector<8x8xf32>
    %252 = arith.mulf %250, %251 : vector<8x8xf32>
    %cst_62 = arith.constant dense<0xFF800000> : vector<8xf32>
    %253 = vector.multi_reduction <maximumf>, %252, %cst_62 [1] : vector<8x8xf32> to vector<8xf32>
    %254 = vector.shape_cast %253 : vector<8xf32> to vector<8x1xf32>
    %255 = vector.broadcast %254 : vector<8x1xf32> to vector<8x8xf32>
    %256 = arith.subf %252, %255 : vector<8x8xf32>
    %257 = math.exp %256 : vector<8x8xf32>
    %cst_63 = arith.constant dense<0.000000e+00> : vector<8xf32>
    %258 = vector.multi_reduction <add>, %257, %cst_63 [1] : vector<8x8xf32> to vector<8xf32>
    %259 = vector.shape_cast %258 : vector<8xf32> to vector<8x1xf32>
    %260 = tpu.reciprocal %259 {approx = true} : vector<8x1xf32> -> vector<8x1xf32>
    %261 = vector.broadcast %260 : vector<8x1xf32> to vector<8x8xf32>
    %262 = arith.mulf %257, %261 : vector<8x8xf32>
    %cst_64 = arith.constant dense<0.000000e+00> : vector<8x128xf32>
    %263 = tpu.matmul %262, %249, %cst_64 {dimension_numbers = #tpu.dot_dimension_numbers<[1], [0], [0], [1], [0, 0, 1, 1], [], []>} : vector<8x8xf32>, vector<8x128xf32>, vector<8x128xf32> -> vector<8x128xf32>
    %264 = vector.extract_strided_slice %3 {offsets = [8, 896], sizes = [8, 128], strides = [1, 1]} : vector<16x1024xf32> to vector<8x128xf32>
    %265 = vector.extract_strided_slice %4 {offsets = [8, 896], sizes = [8, 128], strides = [1, 1]} : vector<16x1024xf32> to vector<8x128xf32>
    %266 = vector.extract_strided_slice %5 {offsets = [8, 896], sizes = [8, 128], strides = [1, 1]} : vector<16x1024xf32> to vector<8x128xf32>
    %cst_65 = arith.constant dense<0.000000e+00> : vector<8x8xf32>
    %267 = tpu.matmul %264, %265, %cst_65 {dimension_numbers = #tpu.dot_dimension_numbers<[1], [1], [0], [0], [0, 0, 1, 0], [], []>} : vector<8x128xf32>, vector<8x128xf32>, vector<8x8xf32> -> vector<8x8xf32>
    %268 = vector.broadcast %7 : f32 to vector<8x8xf32>
    %269 = arith.mulf %267, %268 : vector<8x8xf32>
    %cst_66 = arith.constant dense<0xFF800000> : vector<8xf32>
    %270 = vector.multi_reduction <maximumf>, %269, %cst_66 [1] : vector<8x8xf32> to vector<8xf32>
    %271 = vector.shape_cast %270 : vector<8xf32> to vector<8x1xf32>
    %272 = vector.broadcast %271 : vector<8x1xf32> to vector<8x8xf32>
    %273 = arith.subf %269, %272 : vector<8x8xf32>
    %274 = math.exp %273 : vector<8x8xf32>
    %cst_67 = arith.constant dense<0.000000e+00> : vector<8xf32>
    %275 = vector.multi_reduction <add>, %274, %cst_67 [1] : vector<8x8xf32> to vector<8xf32>
    %276 = vector.shape_cast %275 : vector<8xf32> to vector<8x1xf32>
    %277 = tpu.reciprocal %276 {approx = true} : vector<8x1xf32> -> vector<8x1xf32>
    %278 = vector.broadcast %277 : vector<8x1xf32> to vector<8x8xf32>
    %279 = arith.mulf %274, %278 : vector<8x8xf32>
    %cst_68 = arith.constant dense<0.000000e+00> : vector<8x128xf32>
    %280 = tpu.matmul %279, %266, %cst_68 {dimension_numbers = #tpu.dot_dimension_numbers<[1], [0], [0], [1], [0, 0, 1, 1], [], []>} : vector<8x8xf32>, vector<8x128xf32>, vector<8x128xf32> -> vector<8x128xf32>
    %281 = tpu.concatenate %161, %178, %195, %212, %229, %246, %263, %280 in 1 : vector<8x128xf32>, vector<8x128xf32>, vector<8x128xf32>, vector<8x128xf32>, vector<8x128xf32>, vector<8x128xf32>, vector<8x128xf32>, vector<8x128xf32> -> vector<8x1024xf32>
    %282 = tpu.concatenate %23, %40, %57, %74, %91, %108, %125, %142, %160, %177, %194, %211, %228, %245, %262, %279 in 1 : vector<8x8xf32>, vector<8x8xf32>, vector<8x8xf32>, vector<8x8xf32>, vector<8x8xf32>, vector<8x8xf32>, vector<8x8xf32>, vector<8x8xf32>, vector<8x8xf32>, vector<8x8xf32>, vector<8x8xf32>, vector<8x8xf32>, vector<8x8xf32>, vector<8x8xf32>, vector<8x8xf32>, vector<8x8xf32> -> vector<8x128xf32>
    %c0_69 = arith.constant 0 : index
    %c0_70 = arith.constant 0 : index
    %283 = vector.load %arg7[%c0_69, %c0_70] : memref<8x128xf32, #tpu.memory_space<vmem>>, vector<8x128xf32>
    tpu.vector_store %arg7[%c0_69, %c0_70], %282 {strides = array<i32>} : memref<8x128xf32, #tpu.memory_space<vmem>>, vector<8x128xf32>,
    %284 = tpu.concatenate %144, %281 in 0 : vector<8x1024xf32>, vector<8x1024xf32> -> vector<16x1024xf32>
    %c0_71 = arith.constant 0 : index
    %c0_72 = arith.constant 0 : index
    %285 = vector.load %arg3[%c0_71, %c0_72] : memref<7x1024xf32, #tpu.memory_space<vmem>>, vector<7x1024xf32>
    %cst_73 = arith.constant dense<0.000000e+00> : vector<16x7xf32>
    %286 = tpu.matmul %284, %285, %cst_73 {dimension_numbers = #tpu.dot_dimension_numbers<[1], [1], [0], [0], [0, 0, 1, 0], [], []>} : vector<16x1024xf32>, vector<7x1024xf32>, vector<16x7xf32> -> vector<16x7xf32>
    %287 = arith.addf %286, %0 : vector<16x7xf32>
    %cst_74 = arith.constant dense<0.000000e+00> : vector<16xf32>
    %288 = vector.multi_reduction <add>, %287, %cst_74 [1] : vector<16x7xf32> to vector<16xf32>
    %289 = vector.shape_cast %288 : vector<16xf32> to vector<16x1xf32>
    %cst_75 = arith.constant 7.000000e+00 : f32
    %290 = vector.broadcast %cst_75 : f32 to vector<16x1xf32>
    %291 = arith.divf %289, %290 : vector<16x1xf32>
    %292 = vector.broadcast %291 : vector<16x1xf32> to vector<16x7xf32>
    %293 = arith.subf %287, %292 : vector<16x7xf32>
    %294 = arith.mulf %293, %293 : vector<16x7xf32>
    %cst_76 = arith.constant dense<0.000000e+00> : vector<16xf32>
    %295 = vector.multi_reduction <add>, %294, %cst_76 [1] : vector<16x7xf32> to vector<16xf32>
    %296 = vector.shape_cast %295 : vector<16xf32> to vector<16x1xf32>
    %cst_77 = arith.constant 7.000000e+00 : f32
    %297 = vector.broadcast %cst_77 : f32 to vector<16x1xf32>
    %298 = arith.divf %296, %297 : vector<16x1xf32>
    %299 = vector.broadcast %291 : vector<16x1xf32> to vector<16x7xf32>
    %300 = arith.subf %287, %299 : vector<16x7xf32>
    %cst_78 = arith.constant 9.99999974E-6 : f32
    %301 = vector.broadcast %cst_78 : f32 to vector<16x1xf32>
    %302 = arith.addf %298, %301 : vector<16x1xf32>
    %303 = math.rsqrt %302 : vector<16x1xf32>
    %304 = vector.broadcast %303 : vector<16x1xf32> to vector<16x7xf32>
    %305 = arith.mulf %300, %304 : vector<16x7xf32>
    %c0_79 = arith.constant 0 : index
    %c0_80 = arith.constant 0 : index
    %306 = vector.load %arg4[%c0_79, %c0_80] : memref<7x2048xf32, #tpu.memory_space<vmem>>, vector<7x2048xf32>
    %cst_81 = arith.constant dense<0.000000e+00> : vector<16x2048xf32>
    %307 = tpu.matmul %305, %306, %cst_81 {dimension_numbers = #tpu.dot_dimension_numbers<[1], [0], [0], [1], [0, 0, 1, 1], [], []>} : vector<16x7xf32>, vector<7x2048xf32>, vector<16x2048xf32> -> vector<16x2048xf32>
    %cst_82 = arith.constant 0.000000e+00 : f32
    %308 = vector.broadcast %cst_82 : f32 to vector<16x2048xf32>
    %309 = arith.maximumf %307, %308 : vector<16x2048xf32>
    %c0_83 = arith.constant 0 : index
    %c0_84 = arith.constant 0 : index
    %310 = vector.load %arg5[%c0_83, %c0_84] : memref<7x2048xf32, #tpu.memory_space<vmem>>, vector<7x2048xf32>
    %cst_85 = arith.constant dense<0.000000e+00> : vector<16x7xf32>
    %311 = tpu.matmul %309, %310, %cst_85 {dimension_numbers = #tpu.dot_dimension_numbers<[1], [1], [0], [0], [0, 0, 1, 0], [], []>} : vector<16x2048xf32>, vector<7x2048xf32>, vector<16x7xf32> -> vector<16x7xf32>
    %312 = arith.addf %311, %305 : vector<16x7xf32>
    %cst_86 = arith.constant dense<0.000000e+00> : vector<16xf32>
    %313 = vector.multi_reduction <add>, %312, %cst_86 [1] : vector<16x7xf32> to vector<16xf32>
    %314 = vector.shape_cast %313 : vector<16xf32> to vector<16x1xf32>
    %cst_87 = arith.constant 7.000000e+00 : f32
    %315 = vector.broadcast %cst_87 : f32 to vector<16x1xf32>
    %316 = arith.divf %314, %315 : vector<16x1xf32>
    %317 = vector.broadcast %316 : vector<16x1xf32> to vector<16x7xf32>
    %318 = arith.subf %312, %317 : vector<16x7xf32>
    %319 = arith.mulf %318, %318 : vector<16x7xf32>
    %cst_88 = arith.constant dense<0.000000e+00> : vector<16xf32>
    %320 = vector.multi_reduction <add>, %319, %cst_88 [1] : vector<16x7xf32> to vector<16xf32>
    %321 = vector.shape_cast %320 : vector<16xf32> to vector<16x1xf32>
    %cst_89 = arith.constant 7.000000e+00 : f32
    %322 = vector.broadcast %cst_89 : f32 to vector<16x1xf32>
    %323 = arith.divf %321, %322 : vector<16x1xf32>
    %324 = vector.broadcast %316 : vector<16x1xf32> to vector<16x7xf32>
    %325 = arith.subf %312, %324 : vector<16x7xf32>
    %cst_90 = arith.constant 9.99999974E-6 : f32
    %326 = vector.broadcast %cst_90 : f32 to vector<16x1xf32>
    %327 = arith.addf %323, %326 : vector<16x1xf32>
    %328 = math.rsqrt %327 : vector<16x1xf32>
    %329 = vector.broadcast %328 : vector<16x1xf32> to vector<16x7xf32>
    %330 = arith.mulf %325, %329 : vector<16x7xf32>
    %c0_91 = arith.constant 0 : index
    %c0_92 = arith.constant 0 : index
    %331 = vector.load %arg6[%c0_91, %c0_92] : memref<16x7xf32, #tpu.memory_space<vmem>>, vector<16x7xf32>
    tpu.vector_store %arg6[%c0_91, %c0_92], %330 {strides = array<i32>} : memref<16x7xf32, #tpu.memory_space<vmem>>, vector<16x7xf32>,
    return
  }
  func.func @transform_0(%arg0: i32) -> (i32, i32) {
    %c0_i32 = arith.constant 0 : i32
    %c0_i32_0 = arith.constant 0 : i32
    %c0_i32_1 = arith.constant 0 : i32
    return %c0_i32, %c0_i32_0 : i32, i32
  }
  func.func @transform_1(%arg0: i32) -> (i32, i32) {
    %c0_i32 = arith.constant 0 : i32
    %c0_i32_0 = arith.constant 0 : i32
    %c0_i32_1 = arith.constant 0 : i32
    return %c0_i32, %c0_i32_0 : i32, i32
  }
  func.func @transform_2(%arg0: i32) -> (i32, i32) {
    %c0_i32 = arith.constant 0 : i32
    %c0_i32_0 = arith.constant 0 : i32
    %c0_i32_1 = arith.constant 0 : i32
    return %c0_i32, %c0_i32_0 : i32, i32
  }
  func.func @transform_3(%arg0: i32) -> (i32, i32) {
    %c0_i32 = arith.constant 0 : i32
    %c0_i32_0 = arith.constant 0 : i32
    %c0_i32_1 = arith.constant 0 : i32
    return %c0_i32, %c0_i32_0 : i32, i32
  }
  func.func @transform_4(%arg0: i32) -> (i32, i32) {
    %c0_i32 = arith.constant 0 : i32
    %c0_i32_0 = arith.constant 0 : i32
    %c0_i32_1 = arith.constant 0 : i32
    return %c0_i32, %c0_i32_0 : i32, i32
  }
  func.func @transform_5(%arg0: i32) -> (i32, i32) {
    %c0_i32 = arith.constant 0 : i32
    %c0_i32_0 = arith.constant 0 : i32
    %c0_i32_1 = arith.constant 0 : i32
    return %c0_i32, %c0_i32_0 : i32, i32
  }
  func.func @transform_6(%arg0: i32) -> (i32, i32) {
    %c0_i32 = arith.constant 0 : i32
    %c0_i32_0 = arith.constant 0 : i32
    %c0_i32_1 = arith.constant 0 : i32
    return %c0_i32, %c0_i32_0 : i32, i32
  }
}

</mosaic_0001>

<llo_original>
// kernel: encoder_layer.1
$region0: #{encoder_layer.1}
  #allocation0 [shape = 'u32[]', space=smem, size = 0x4, offset = 0x4, fixed_abs, tag = 'smem constant byte address 0x4 - core index']
  #allocation1 [shape = 'u32[144,128]{1,0:T(1,128)}', space=vmem, size = 0x12000, scoped, tag = 'internal scratch']
  %s0 = inlined_call_operand.vmem [shape: f32[16,7], index: 0, kind: input, shape index: {}]
  %s1 = inlined_call_operand.vmem [shape: f32[7,3072], index: 1, kind: input, shape index: {}]
  %s2 = inlined_call_operand.vmem [shape: f32[7,1024], index: 2, kind: input, shape index: {}]
  %s3 = inlined_call_operand.vmem [shape: f32[7,2048], index: 3, kind: input, shape index: {}]
  %s4 = inlined_call_operand.vmem [shape: f32[7,2048], index: 4, kind: input, shape index: {}]
  %s5 = inlined_call_operand.vmem [shape: f32[16,7], index: 5, kind: output, shape index: {0}]
  %s6 = inlined_call_operand.vmem [shape: f32[8,128], index: 6, kind: output, shape index: {1}]
  %7 = xla_tuple %s5, %s6
  %s8 = sld [smem:[#allocation0]]
  $region38: #{encoder_layer.1} parent=0
    _
  %s10 = ssub.s32 1, %s8
  %s11 = scalar_select 0, %s10, %s8
  // Predicated region
  $region2: #{encoder_layer.1} parent=0 // pred_check
    _
  $region3: #{encoder_layer.1} parent=0 // pred_check_branch
    %13 = sbr.rel (0) target = $region5
  $region4: #{encoder_layer.1} parent=0 // pred_region
    _
  $region5: #{encoder_layer.1} parent=0 // pred_fallthru
    _
  // Predicated region
  $region6: #{encoder_layer.1} parent=0 // pred_check
    _
  $region7: #{encoder_layer.1} parent=0 // pred_check_branch
    %15 = sbr.rel (0) target = $region9
  $region8: #{encoder_layer.1} parent=0 // pred_region
    _
  $region9: #{encoder_layer.1} parent=0 // pred_fallthru
    _
  // Predicated region
  $region10: #{encoder_layer.1} parent=0 // pred_check
    _
  $region11: #{encoder_layer.1} parent=0 // pred_check_branch
    %17 = sbr.rel (0) target = $region13
  $region12: #{encoder_layer.1} parent=0 // pred_region
    _
  $region13: #{encoder_layer.1} parent=0 // pred_fallthru
    _
  // Predicated region
  $region14: #{encoder_layer.1} parent=0 // pred_check
    _
  $region15: #{encoder_layer.1} parent=0 // pred_check_branch
    %19 = sbr.rel (0) target = $region17
  $region16: #{encoder_layer.1} parent=0 // pred_region
    _
  $region17: #{encoder_layer.1} parent=0 // pred_fallthru
    _
  // Predicated region
  $region18: #{encoder_layer.1} parent=0 // pred_check
    _
  $region19: #{encoder_layer.1} parent=0 // pred_check_branch
    %21 = sbr.rel (0) target = $region21
  $region20: #{encoder_layer.1} parent=0 // pred_region
    _
  $region21: #{encoder_layer.1} parent=0 // pred_fallthru
    _
  %v22 = vld [vmem:[%s0] sm:$0xff]
  %v23 = vld [vmem:[%s0 + $0x8] sm:$0xff]
  %v24 = vld [vmem:[%s1] sm:$0x7f]
  %v25 = vld [vmem:[%s1 + $0x8] sm:$0x7f]
  %v26 = vld [vmem:[%s1 + $0x10] sm:$0x7f]
  %v27 = vld [vmem:[%s1 + $0x18] sm:$0x7f]
  %v28 = vld [vmem:[%s1 + $0x20] sm:$0x7f]
  %v29 = vld [vmem:[%s1 + $0x28] sm:$0x7f]
  %v30 = vld [vmem:[%s1 + $0x30] sm:$0x7f]
  %v31 = vld [vmem:[%s1 + $0x38] sm:$0x7f]
  %v32 = vld [vmem:[%s1 + $0x40] sm:$0x7f]
  %v33 = vld [vmem:[%s1 + $0x48] sm:$0x7f]
  %v34 = vld [vmem:[%s1 + $0x50] sm:$0x7f]
  %v35 = vld [vmem:[%s1 + $0x58] sm:$0x7f]
  %v36 = vld [vmem:[%s1 + $0x60] sm:$0x7f]
  %v37 = vld [vmem:[%s1 + $0x68] sm:$0x7f]
  %v38 = vld [vmem:[%s1 + $0x70] sm:$0x7f]
  %v39 = vld [vmem:[%s1 + $0x78] sm:$0x7f]
  %v40 = vld [vmem:[%s1 + $0x80] sm:$0x7f]
  %v41 = vld [vmem:[%s1 + $0x88] sm:$0x7f]
  %v42 = vld [vmem:[%s1 + $0x90] sm:$0x7f]
  %v43 = vld [vmem:[%s1 + $0x98] sm:$0x7f]
  %v44 = vld [vmem:[%s1 + $0xa0] sm:$0x7f]
  %v45 = vld [vmem:[%s1 + $0xa8] sm:$0x7f]
  %v46 = vld [vmem:[%s1 + $0xb0] sm:$0x7f]
  %v47 = vld [vmem:[%s1 + $0xb8] sm:$0x7f]
  %vm48 = vcmask 56320
  %v50 = vsel %vm48, %v22, 0
  %v53 = vsel %vm48, %v23, 0
  %vm55 = vcmask 1046528
  %v57 = vsel %vm55, %v24, 0
  %v60 = vsel %vm55, %v25, 0
  %v63 = vsel %vm55, %v26, 0
  %v66 = vsel %vm55, %v27, 0
  %v69 = vsel %vm55, %v28, 0
  %v72 = vsel %vm55, %v29, 0
  %v75 = vsel %vm55, %v30, 0
  %v78 = vsel %vm55, %v31, 0
  %v81 = vsel %vm55, %v32, 0
  %v84 = vsel %vm55, %v33, 0
  %v87 = vsel %vm55, %v34, 0
  %v90 = vsel %vm55, %v35, 0
  %v93 = vsel %vm55, %v36, 0
  %v96 = vsel %vm55, %v37, 0
  %v99 = vsel %vm55, %v38, 0
  %v102 = vsel %vm55, %v39, 0
  %v105 = vsel %vm55, %v40, 0
  %v108 = vsel %vm55, %v41, 0
  %v111 = vsel %vm55, %v42, 0
  %v114 = vsel %vm55, %v43, 0
  %v117 = vsel %vm55, %v44, 0
  %v120 = vsel %vm55, %v45, 0
  %v123 = vsel %vm55, %v46, 0
  %v126 = vsel %vm55, %v47, 0
  %128 = vmatprep.subr.mxu0 0.0
  %129 = vmatpush1.msra.mxu0 0.0
  %130 = vmatprep.subr.mxu0 0.0
  %131 = vmatpush1.msra.mxu0 0.0
  %132 = vmatprep.subr.mxu0 0.0
  %133 = vmatpush1.msra.mxu0 0.0
  %134 = vmatprep.subr.mxu0 0.0
  %135 = vmatpush1.msra.mxu0 0.0
  %136 = vmatprep.subr.mxu0 0.0
  %137 = vmatpush1.msra.mxu0 0.0
  %138 = vmatprep.subr.mxu0 0.0
  %139 = vmatpush1.msra.mxu0 0.0
  %140 = vmatprep.subr.mxu0 0.0
  %141 = vmatpush1.msra.mxu0 0.0
  %142 = vmatprep.subr.mxu0 0.0
  %143 = vmatpush1.msra.mxu0 0.0
  %144 = vmatprep.subr.mxu0 0.0
  %145 = vmatpush1.msra.mxu0 0.0
  %146 = vmatprep.subr.mxu0 0.0
  %147 = vmatpush1.msra.mxu0 0.0
  %148 = vmatprep.subr.mxu0 0.0
  %149 = vmatpush1.msra.mxu0 0.0
  %150 = vmatprep.subr.mxu0 0.0
  %151 = vmatpush1.msra.mxu0 0.0
  %152 = vmatprep.subr.mxu0 0.0
  %153 = vmatpush1.msra.mxu0 0.0
  %154 = vmatprep.subr.mxu0 0.0
  %155 = vmatpush1.msra.mxu0 0.0
  %156 = vmatprep.subr.mxu0 0.0
  %157 = vmatpush1.msra.mxu0 0.0
  %158 = vmatprep.subr.mxu0 %v60
  %159 = vmatpush1.msra.mxu0 %v57
  %160 = vmatprep.subr.mxu0 0.0
  %161 = vmatpush2.msra.mxu0 0.0
  %162 = vmatprep.subr.mxu0 0.0
  %163 = vmatpush2.msra.mxu0 0.0
  %164 = vmatprep.subr.mxu0 0.0
  %165 = vmatpush2.msra.mxu0 0.0
  %166 = vmatprep.subr.mxu0 0.0
  %167 = vmatpush2.msra.mxu0 0.0
  %168 = vmatprep.subr.mxu0 0.0
  %169 = vmatpush2.msra.mxu0 0.0
  %170 = vmatprep.subr.mxu0 0.0
  %171 = vmatpush2.msra.mxu0 0.0
  %172 = vmatprep.subr.mxu0 0.0
  %173 = vmatpush2.msra.mxu0 0.0
  %174 = vmatprep.subr.mxu0 0.0
  %175 = vmatpush2.msra.mxu0 0.0
  %176 = vmatprep.subr.mxu0 0.0
  %177 = vmatpush2.msra.mxu0 0.0
  %178 = vmatprep.subr.mxu0 0.0
  %179 = vmatpush2.msra.mxu0 0.0
  %180 = vmatprep.subr.mxu0 0.0
  %181 = vmatpush2.msra.mxu0 0.0
  %182 = vmatprep.subr.mxu0 0.0
  %183 = vmatpush2.msra.mxu0 0.0
  %184 = vmatprep.subr.mxu0 0.0
  %185 = vmatpush2.msra.mxu0 0.0
  %186 = vmatprep.subr.mxu0 0.0
  %187 = vmatpush2.msra.mxu0 0.0
  %188 = vmatprep.subr.mxu0 0.0
  %189 = vmatpush2.msra.mxu0 0.0
  %190 = vmatprep.subr.mxu0 0.0
  %191 = vmatpush2.msra.mxu0 0.0
  %192 = vmatprep.mubr.f32.mxu0 0.0
  %193 = vmatmul.mubr.f32.gmra.mxu0 %v50
  %v194 = vpop.f32.mrf.mxu0
  %v195 = vadd.f32 0.0, %v194
  %v196 = vpop.f32.mrf.mxu0
  %v197 = vadd.f32 0.0, %v196
  %198 = vmatprep.mubr.f32.mxu0 0.0
  %199 = vmatmul.mubr.f32.gmra.mxu0 %v53
  %v200 = vpop.f32.mrf.mxu0
  %v201 = vadd.f32 0.0, %v200
  %v202 = vpop.f32.mrf.mxu0
  %v203 = vadd.f32 0.0, %v202
  %204 = vdwg.mxu0
  %205 = vmatprep.subr.mxu0 0.0
  %206 = vmatpush1.msra.mxu0 0.0
  %207 = vmatprep.subr.mxu0 0.0
  %208 = vmatpush1.msra.mxu0 0.0
  %209 = vmatprep.subr.mxu0 0.0
  %210 = vmatpush1.msra.mxu0 0.0
  %211 = vmatprep.subr.mxu0 0.0
  %212 = vmatpush1.msra.mxu0 0.0
  %213 = vmatprep.subr.mxu0 0.0
  %214 = vmatpush1.msra.mxu0 0.0
  %215 = vmatprep.subr.mxu0 0.0
  %216 = vmatpush1.msra.mxu0 0.0
  %217 = vmatprep.subr.mxu0 0.0
  %218 = vmatpush1.msra.mxu0 0.0
  %219 = vmatprep.subr.mxu0 0.0
  %220 = vmatpush1.msra.mxu0 0.0
  %221 = vmatprep.subr.mxu0 0.0
  %222 = vmatpush1.msra.mxu0 0.0
  %223 = vmatprep.subr.mxu0 0.0
  %224 = vmatpush1.msra.mxu0 0.0
  %225 = vmatprep.subr.mxu0 0.0
  %226 = vmatpush1.msra.mxu0 0.0
  %227 = vmatprep.subr.mxu0 0.0
  %228 = vmatpush1.msra.mxu0 0.0
  %229 = vmatprep.subr.mxu0 0.0
  %230 = vmatpush1.msra.mxu0 0.0
  %231 = vmatprep.subr.mxu0 0.0
  %232 = vmatpush1.msra.mxu0 0.0
  %233 = vmatprep.subr.mxu0 0.0
  %234 = vmatpush1.msra.mxu0 0.0
  %235 = vmatprep.subr.mxu0 %v66
  %236 = vmatpush1.msra.mxu0 %v63
  %237 = vmatprep.subr.mxu0 0.0
  %238 = vmatpush2.msra.mxu0 0.0
  %239 = vmatprep.subr.mxu0 0.0
  %240 = vmatpush2.msra.mxu0 0.0
  %241 = vmatprep.subr.mxu0 0.0
  %242 = vmatpush2.msra.mxu0 0.0
  %243 = vmatprep.subr.mxu0 0.0
  %244 = vmatpush2.msra.mxu0 0.0
  %245 = vmatprep.subr.mxu0 0.0
  %246 = vmatpush2.msra.mxu0 0.0
  %247 = vmatprep.subr.mxu0 0.0
  %248 = vmatpush2.msra.mxu0 0.0
  %249 = vmatprep.subr.mxu0 0.0
  %250 = vmatpush2.msra.mxu0 0.0
  %251 = vmatprep.subr.mxu0 0.0
  %252 = vmatpush2.msra.mxu0 0.0
  %253 = vmatprep.subr.mxu0 0.0
  %254 = vmatpush2.msra.mxu0 0.0
  %255 = vmatprep.subr.mxu0 0.0
  %256 = vmatpush2.msra.mxu0 0.0
  %257 = vmatprep.subr.mxu0 0.0
  %258 = vmatpush2.msra.mxu0 0.0
  %259 = vmatprep.subr.mxu0 0.0
  %260 = vmatpush2.msra.mxu0 0.0
  %261 = vmatprep.subr.mxu0 0.0
  %262 = vmatpush2.msra.mxu0 0.0
  %263 = vmatprep.subr.mxu0 0.0
  %264 = vmatpush2.msra.mxu0 0.0
  %265 = vmatprep.subr.mxu0 0.0
  %266 = vmatpush2.msra.mxu0 0.0
  %267 = vmatprep.subr.mxu0 0.0
  %268 = vmatpush2.msra.mxu0 0.0
  %269 = vmatprep.mubr.f32.mxu0 0.0
  %270 = vmatmul.mubr.f32.gmra.mxu0 %v50
  %v271 = vpop.f32.mrf.mxu0
  %v272 = vadd.f32 0.0, %v271
  %v273 = vpop.f32.mrf.mxu0
  %v274 = vadd.f32 0.0, %v273
  %275 = vmatprep.mubr.f32.mxu0 0.0
  %276 = vmatmul.mubr.f32.gmra.mxu0 %v53
  %v277 = vpop.f32.mrf.mxu0
  %v278 = vadd.f32 0.0, %v277
  %v279 = vpop.f32.mrf.mxu0
  %v280 = vadd.f32 0.0, %v279
  %281 = vdwg.mxu0
  %282 = vmatprep.subr.mxu0 0.0
  %283 = vmatpush1.msra.mxu0 0.0
  %284 = vmatprep.subr.mxu0 0.0
  %285 = vmatpush1.msra.mxu0 0.0
  %286 = vmatprep.subr.mxu0 0.0
  %287 = vmatpush1.msra.mxu0 0.0
  %288 = vmatprep.subr.mxu0 0.0
  %289 = vmatpush1.msra.mxu0 0.0
  %290 = vmatprep.subr.mxu0 0.0
  %291 = vmatpush1.msra.mxu0 0.0
  %292 = vmatprep.subr.mxu0 0.0
  %293 = vmatpush1.msra.mxu0 0.0
  %294 = vmatprep.subr.mxu0 0.0
  %295 = vmatpush1.msra.mxu0 0.0
  %296 = vmatprep.subr.mxu0 0.0
  %297 = vmatpush1.msra.mxu0 0.0
  %298 = vmatprep.subr.mxu0 0.0
  %299 = vmatpush1.msra.mxu0 0.0
  %300 = vmatprep.subr.mxu0 0.0
  %301 = vmatpush1.msra.mxu0 0.0
  %302 = vmatprep.subr.mxu0 0.0
  %303 = vmatpush1.msra.mxu0 0.0
  %304 = vmatprep.subr.mxu0 0.0
  %305 = vmatpush1.msra.mxu0 0.0
  %306 = vmatprep.subr.mxu0 0.0
  %307 = vmatpush1.msra.mxu0 0.0
  %308 = vmatprep.subr.mxu0 0.0
  %309 = vmatpush1.msra.mxu0 0.0
  %310 = vmatprep.subr.mxu0 0.0
  %311 = vmatpush1.msra.mxu0 0.0
  %312 = vmatprep.subr.mxu0 %v72
  %313 = vmatpush1.msra.mxu0 %v69
  %314 = vmatprep.subr.mxu0 0.0
  %315 = vmatpush2.msra.mxu0 0.0
  %316 = vmatprep.subr.mxu0 0.0
  %317 = vmatpush2.msra.mxu0 0.0
  %318 = vmatprep.subr.mxu0 0.0
  %319 = vmatpush2.msra.mxu0 0.0
  %320 = vmatprep.subr.mxu0 0.0
  %321 = vmatpush2.msra.mxu0 0.0
  %322 = vmatprep.subr.mxu0 0.0
  %323 = vmatpush2.msra.mxu0 0.0
  %324 = vmatprep.subr.mxu0 0.0
  %325 = vmatpush2.msra.mxu0 0.0
  %326 = vmatprep.subr.mxu0 0.0
  %327 = vmatpush2.msra.mxu0 0.0
  %328 = vmatprep.subr.mxu0 0.0
  %329 = vmatpush2.msra.mxu0 0.0
  %330 = vmatprep.subr.mxu0 0.0
  %331 = vmatpush2.msra.mxu0 0.0
  %332 = vmatprep.subr.mxu0 0.0
  %333 = vmatpush2.msra.mxu0 0.0
  %334 = vmatprep.subr.mxu0 0.0
  %335 = vmatpush2.msra.mxu0 0.0
  %336 = vmatprep.subr.mxu0 0.0
  %337 = vmatpush2.msra.mxu0 0.0
  %338 = vmatprep.subr.mxu0 0.0
  %339 = vmatpush2.msra.mxu0 0.0
  %340 = vmatprep.subr.mxu0 0.0
  %341 = vmatpush2.msra.mxu0 0.0
  %342 = vmatprep.subr.mxu0 0.0
  %343 = vmatpush2.msra.mxu0 0.0
  %344 = vmatprep.subr.mxu0 0.0
  %345 = vmatpush2.msra.mxu0 0.0
  %346 = vmatprep.mubr.f32.mxu0 0.0
  %347 = vmatmul.mubr.f32.gmra.mxu0 %v50
  %v348 = vpop.f32.mrf.mxu0
  %v349 = vadd.f32 0.0, %v348
  %v350 = vpop.f32.mrf.mxu0
  %v351 = vadd.f32 0.0, %v350
  %352 = vmatprep.mubr.f32.mxu0 0.0
  %353 = vmatmul.mubr.f32.gmra.mxu0 %v53
  %v354 = vpop.f32.mrf.mxu0
  %v355 = vadd.f32 0.0, %v354
  %v356 = vpop.f32.mrf.mxu0
  %v357 = vadd.f32 0.0, %v356
  %358 = vdwg.mxu0
  %359 = vmatprep.subr.mxu0 0.0
  %360 = vmatpush1.msra.mxu0 0.0
  %361 = vmatprep.subr.mxu0 0.0
  %362 = vmatpush1.msra.mxu0 0.0
  %363 = vmatprep.subr.mxu0 0.0
  %364 = vmatpush1.msra.mxu0 0.0
  %365 = vmatprep.subr.mxu0 0.0
  %366 = vmatpush1.msra.mxu0 0.0
  %367 = vmatprep.subr.mxu0 0.0
  %368 = vmatpush1.msra.mxu0 0.0
  %369 = vmatprep.subr.mxu0 0.0
  %370 = vmatpush1.msra.mxu0 0.0
  %371 = vmatprep.subr.mxu0 0.0
  %372 = vmatpush1.msra.mxu0 0.0
  %373 = vmatprep.subr.mxu0 0.0
  %374 = vmatpush1.msra.mxu0 0.0
  %375 = vmatprep.subr.mxu0 0.0
  %376 = vmatpush1.msra.mxu0 0.0
  %377 = vmatprep.subr.mxu0 0.0
  %378 = vmatpush1.msra.mxu0 0.0
  %379 = vmatprep.subr.mxu0 0.0
  %380 = vmatpush1.msra.mxu0 0.0
  %381 = vmatprep.subr.mxu0 0.0
  %382 = vmatpush1.msra.mxu0 0.0
  %383 = vmatprep.subr.mxu0 0.0
  %384 = vmatpush1.msra.mxu0 0.0
  %385 = vmatprep.subr.mxu0 0.0
  %386 = vmatpush1.msra.mxu0 0.0
  %387 = vmatprep.subr.mxu0 0.0
  %388 = vmatpush1.msra.mxu0 0.0
  %389 = vmatprep.subr.mxu0 %v78
  %390 = vmatpush1.msra.mxu0 %v75
  %391 = vmatprep.subr.mxu0 0.0
  %392 = vmatpush2.msra.mxu0 0.0
  %393 = vmatprep.subr.mxu0 0.0
  %394 = vmatpush2.msra.mxu0 0.0
  %395 = vmatprep.subr.mxu0 0.0
  %396 = vmatpush2.msra.mxu0 0.0
  %397 = vmatprep.subr.mxu0 0.0
  %398 = vmatpush2.msra.mxu0 0.0
  %399 = vmatprep.subr.mxu0 0.0
  %400 = vmatpush2.msra.mxu0 0.0
  %401 = vmatprep.subr.mxu0 0.0
  %402 = vmatpush2.msra.mxu0 0.0
  %403 = vmatprep.subr.mxu0 0.0
  %404 = vmatpush2.msra.mxu0 0.0
  %405 = vmatprep.subr.mxu0 0.0
  %406 = vmatpush2.msra.mxu0 0.0
  %407 = vmatprep.subr.mxu0 0.0
  %408 = vmatpush2.msra.mxu0 0.0
  %409 = vmatprep.subr.mxu0 0.0
  %410 = vmatpush2.msra.mxu0 0.0
  %411 = vmatprep.subr.mxu0 0.0
  %412 = vmatpush2.msra.mxu0 0.0
  %413 = vmatprep.subr.mxu0 0.0
  %414 = vmatpush2.msra.mxu0 0.0
  %415 = vmatprep.subr.mxu0 0.0
  %416 = vmatpush2.msra.mxu0 0.0
  %417 = vmatprep.subr.mxu0 0.0
  %418 = vmatpush2.msra.mxu0 0.0
  %419 = vmatprep.subr.mxu0 0.0
  %420 = vmatpush2.msra.mxu0 0.0
  %421 = vmatprep.subr.mxu0 0.0
  %422 = vmatpush2.msra.mxu0 0.0
  %423 = vmatprep.mubr.f32.mxu0 0.0
  %424 = vmatmul.mubr.f32.gmra.mxu0 %v50
  %v425 = vpop.f32.mrf.mxu0
  %v426 = vadd.f32 0.0, %v425
  %v427 = vpop.f32.mrf.mxu0
  %v428 = vadd.f32 0.0, %v427
  %429 = vmatprep.mubr.f32.mxu0 0.0
  %430 = vmatmul.mubr.f32.gmra.mxu0 %v53
  %v431 = vpop.f32.mrf.mxu0
  %v432 = vadd.f32 0.0, %v431
  %v433 = vpop.f32.mrf.mxu0
  %v434 = vadd.f32 0.0, %v433
  %435 = vdwg.mxu0
  %436 = vmatprep.subr.mxu0 0.0
  %437 = vmatpush1.msra.mxu0 0.0
  %438 = vmatprep.subr.mxu0 0.0
  %439 = vmatpush1.msra.mxu0 0.0
  %440 = vmatprep.subr.mxu0 0.0
  %441 = vmatpush1.msra.mxu0 0.0
  %442 = vmatprep.subr.mxu0 0.0
  %443 = vmatpush1.msra.mxu0 0.0
  %444 = vmatprep.subr.mxu0 0.0
  %445 = vmatpush1.msra.mxu0 0.0
  %446 = vmatprep.subr.mxu0 0.0
  %447 = vmatpush1.msra.mxu0 0.0
  %448 = vmatprep.subr.mxu0 0.0
  %449 = vmatpush1.msra.mxu0 0.0
  %450 = vmatprep.subr.mxu0 0.0
  %451 = vmatpush1.msra.mxu0 0.0
  %452 = vmatprep.subr.mxu0 0.0
  %453 = vmatpush1.msra.mxu0 0.0
  %454 = vmatprep.subr.mxu0 0.0
  %455 = vmatpush1.msra.mxu0 0.0
  %456 = vmatprep.subr.mxu0 0.0
  %457 = vmatpush1.msra.mxu0 0.0
  %458 = vmatprep.subr.mxu0 0.0
  %459 = vmatpush1.msra.mxu0 0.0
  %460 = vmatprep.subr.mxu0 0.0
  %461 = vmatpush1.msra.mxu0 0.0
  %462 = vmatprep.subr.mxu0 0.0
  %463 = vmatpush1.msra.mxu0 0.0
  %464 = vmatprep.subr.mxu0 0.0
  %465 = vmatpush1.msra.mxu0 0.0
  %466 = vmatprep.subr.mxu0 %v84
  %467 = vmatpush1.msra.mxu0 %v81
  %468 = vmatprep.subr.mxu0 0.0
  %469 = vmatpush2.msra.mxu0 0.0
  %470 = vmatprep.subr.mxu0 0.0
  %471 = vmatpush2.msra.mxu0 0.0
  %472 = vmatprep.subr.mxu0 0.0
  %473 = vmatpush2.msra.mxu0 0.0
  %474 = vmatprep.subr.mxu0 0.0
  %475 = vmatpush2.msra.mxu0 0.0
  %476 = vmatprep.subr.mxu0 0.0
  %477 = vmatpush2.msra.mxu0 0.0
  %478 = vmatprep.subr.mxu0 0.0
  %479 = vmatpush2.msra.mxu0 0.0
  %480 = vmatprep.subr.mxu0 0.0
  %481 = vmatpush2.msra.mxu0 0.0
  %482 = vmatprep.subr.mxu0 0.0
  %483 = vmatpush2.msra.mxu0 0.0
  %484 = vmatprep.subr.mxu0 0.0
  %485 = vmatpush2.msra.mxu0 0.0
  %486 = vmatprep.subr.mxu0 0.0
  %487 = vmatpush2.msra.mxu0 0.0
  %488 = vmatprep.subr.mxu0 0.0
  %489 = vmatpush2.msra.mxu0 0.0
  %490 = vmatprep.subr.mxu0 0.0
  %491 = vmatpush2.msra.mxu0 0.0
  %492 = vmatprep.subr.mxu0 0.0
  %493 = vmatpush2.msra.mxu0 0.0
  %494 = vmatprep.subr.mxu0 0.0
  %495 = vmatpush2.msra.mxu0 0.0
  %496 = vmatprep.subr.mxu0 0.0
  %497 = vmatpush2.msra.mxu0 0.0
  %498 = vmatprep.subr.mxu0 0.0
  %499 = vmatpush2.msra.mxu0 0.0
  %500 = vmatprep.mubr.f32.mxu0 0.0
  %501 = vmatmul.mubr.f32.gmra.mxu0 %v50
  %v502 = vpop.f32.mrf.mxu0
  %v503 = vadd.f32 0.0, %v502
  %v504 = vpop.f32.mrf.mxu0
  %v505 = vadd.f32 0.0, %v504
  %506 = vmatprep.mubr.f32.mxu0 0.0
  %507 = vmatmul.mubr.f32.gmra.mxu0 %v53
  %v508 = vpop.f32.mrf.mxu0
  %v509 = vadd.f32 0.0, %v508
  %v510 = vpop.f32.mrf.mxu0
  %v511 = vadd.f32 0.0, %v510
  %512 = vdwg.mxu0
  %513 = vmatprep.subr.mxu0 0.0
  %514 = vmatpush1.msra.mxu0 0.0
  %515 = vmatprep.subr.mxu0 0.0
  %516 = vmatpush1.msra.mxu0 0.0
  %517 = vmatprep.subr.mxu0 0.0
  %518 = vmatpush1.msra.mxu0 0.0
  %519 = vmatprep.subr.mxu0 0.0
  %520 = vmatpush1.msra.mxu0 0.0
  %521 = vmatprep.subr.mxu0 0.0
  %522 = vmatpush1.msra.mxu0 0.0
  %523 = vmatprep.subr.mxu0 0.0
  %524 = vmatpush1.msra.mxu0 0.0
  %525 = vmatprep.subr.mxu0 0.0
  %526 = vmatpush1.msra.mxu0 0.0
  %527 = vmatprep.subr.mxu0 0.0
  %528 = vmatpush1.msra.mxu0 0.0
  %529 = vmatprep.subr.mxu0 0.0
  %530 = vmatpush1.msra.mxu0 0.0
  %531 = vmatprep.subr.mxu0 0.0
  %532 = vmatpush1.msra.mxu0 0.0
  %533 = vmatprep.subr.mxu0 0.0
  %534 = vmatpush1.msra.mxu0 0.0
  %535 = vmatprep.subr.mxu0 0.0
  %536 = vmatpush1.msra.mxu0 0.0
  %537 = vmatprep.subr.mxu0 0.0
  %538 = vmatpush1.msra.mxu0 0.0
  %539 = vmatprep.subr.mxu0 0.0
  %540 = vmatpush1.msra.mxu0 0.0
  %541 = vmatprep.subr.mxu0 0.0
  %542 = vmatpush1.msra.mxu0 0.0
  %543 = vmatprep.subr.mxu0 %v90
  %544 = vmatpush1.msra.mxu0 %v87
  %545 = vmatprep.subr.mxu0 0.0
  %546 = vmatpush2.msra.mxu0 0.0
  %547 = vmatprep.subr.mxu0 0.0
  %548 = vmatpush2.msra.mxu0 0.0
  %549 = vmatprep.subr.mxu0 0.0
  %550 = vmatpush2.msra.mxu0 0.0
  %551 = vmatprep.subr.mxu0 0.0
  %552 = vmatpush2.msra.mxu0 0.0
  %553 = vmatprep.subr.mxu0 0.0
  %554 = vmatpush2.msra.mxu0 0.0
  %555 = vmatprep.subr.mxu0 0.0
  %556 = vmatpush2.msra.mxu0 0.0
  %557 = vmatprep.subr.mxu0 0.0
  %558 = vmatpush2.msra.mxu0 0.0
  %559 = vmatprep.subr.mxu0 0.0
  %560 = vmatpush2.msra.mxu0 0.0
  %561 = vmatprep.subr.mxu0 0.0
  %562 = vmatpush2.msra.mxu0 0.0
  %563 = vmatprep.subr.mxu0 0.0
  %564 = vmatpush2.msra.mxu0 0.0
  %565 = vmatprep.subr.mxu0 0.0
  %566 = vmatpush2.msra.mxu0 0.0
  %567 = vmatprep.subr.mxu0 0.0
  %568 = vmatpush2.msra.mxu0 0.0
  %569 = vmatprep.subr.mxu0 0.0
  %570 = vmatpush2.msra.mxu0 0.0
  %571 = vmatprep.subr.mxu0 0.0
  %572 = vmatpush2.msra.mxu0 0.0
  %573 = vmatprep.subr.mxu0 0.0
  %574 = vmatpush2.msra.mxu0 0.0
  %575 = vmatprep.subr.mxu0 0.0
  %576 = vmatpush2.msra.mxu0 0.0
  %577 = vmatprep.mubr.f32.mxu0 0.0
  %578 = vmatmul.mubr.f32.gmra.mxu0 %v50
  %v579 = vpop.f32.mrf.mxu0
  %v580 = vadd.f32 0.0, %v579
  %v581 = vpop.f32.mrf.mxu0
  %v582 = vadd.f32 0.0, %v581
  %583 = vmatprep.mubr.f32.mxu0 0.0
  %584 = vmatmul.mubr.f32.gmra.mxu0 %v53
  %v585 = vpop.f32.mrf.mxu0
  %v586 = vadd.f32 0.0, %v585
  %v587 = vpop.f32.mrf.mxu0
  %v588 = vadd.f32 0.0, %v587
  %589 = vdwg.mxu0
  %590 = vmatprep.subr.mxu0 0.0
  %591 = vmatpush1.msra.mxu0 0.0
  %592 = vmatprep.subr.mxu0 0.0
  %593 = vmatpush1.msra.mxu0 0.0
  %594 = vmatprep.subr.mxu0 0.0
  %595 = vmatpush1.msra.mxu0 0.0
  %596 = vmatprep.subr.mxu0 0.0
  %597 = vmatpush1.msra.mxu0 0.0
  %598 = vmatprep.subr.mxu0 0.0
  %599 = vmatpush1.msra.mxu0 0.0
  %600 = vmatprep.subr.mxu0 0.0
  %601 = vmatpush1.msra.mxu0 0.0
  %602 = vmatprep.subr.mxu0 0.0
  %603 = vmatpush1.msra.mxu0 0.0
  %604 = vmatprep.subr.mxu0 0.0
  %605 = vmatpush1.msra.mxu0 0.0
  %606 = vmatprep.subr.mxu0 0.0
  %607 = vmatpush1.msra.mxu0 0.0
  %608 = vmatprep.subr.mxu0 0.0
  %609 = vmatpush1.msra.mxu0 0.0
  %610 = vmatprep.subr.mxu0 0.0
  %611 = vmatpush1.msra.mxu0 0.0
  %612 = vmatprep.subr.mxu0 0.0
  %613 = vmatpush1.msra.mxu0 0.0
  %614 = vmatprep.subr.mxu0 0.0
  %615 = vmatpush1.msra.mxu0 0.0
  %616 = vmatprep.subr.mxu0 0.0
  %617 = vmatpush1.msra.mxu0 0.0
  %618 = vmatprep.subr.mxu0 0.0
  %619 = vmatpush1.msra.mxu0 0.0
  %620 = vmatprep.subr.mxu0 %v96
  %621 = vmatpush1.msra.mxu0 %v93
  %622 = vmatprep.subr.mxu0 0.0
  %623 = vmatpush2.msra.mxu0 0.0
  %624 = vmatprep.subr.mxu0 0.0
  %625 = vmatpush2.msra.mxu0 0.0
  %626 = vmatprep.subr.mxu0 0.0
  %627 = vmatpush2.msra.mxu0 0.0
  %628 = vmatprep.subr.mxu0 0.0
  %629 = vmatpush2.msra.mxu0 0.0
  %630 = vmatprep.subr.mxu0 0.0
  %631 = vmatpush2.msra.mxu0 0.0
  %632 = vmatprep.subr.mxu0 0.0
  %633 = vmatpush2.msra.mxu0 0.0
  %634 = vmatprep.subr.mxu0 0.0
  %635 = vmatpush2.msra.mxu0 0.0
  %636 = vmatprep.subr.mxu0 0.0
  %637 = vmatpush2.msra.mxu0 0.0
  %638 = vmatprep.subr.mxu0 0.0
  %639 = vmatpush2.msra.mxu0 0.0
  %640 = vmatprep.subr.mxu0 0.0
  %641 = vmatpush2.msra.mxu0 0.0
  %642 = vmatprep.subr.mxu0 0.0
  %643 = vmatpush2.msra.mxu0 0.0
  %644 = vmatprep.subr.mxu0 0.0
  %645 = vmatpush2.msra.mxu0 0.0
  %646 = vmatprep.subr.mxu0 0.0
  %647 = vmatpush2.msra.mxu0 0.0
  %648 = vmatprep.subr.mxu0 0.0
  %649 = vmatpush2.msra.mxu0 0.0
  %650 = vmatprep.subr.mxu0 0.0
  %651 = vmatpush2.msra.mxu0 0.0
  %652 = vmatprep.subr.mxu0 0.0
  %653 = vmatpush2.msra.mxu0 0.0
  %654 = vmatprep.mubr.f32.mxu0 0.0
  %655 = vmatmul.mubr.f32.gmra.mxu0 %v50
  %v656 = vpop.f32.mrf.mxu0
  %v657 = vadd.f32 0.0, %v656
  %v658 = vpop.f32.mrf.mxu0
  %v659 = vadd.f32 0.0, %v658
  %660 = vmatprep.mubr.f32.mxu0 0.0
  %661 = vmatmul.mubr.f32.gmra.mxu0 %v53
  %v662 = vpop.f32.mrf.mxu0
  %v663 = vadd.f32 0.0, %v662
  %v664 = vpop.f32.mrf.mxu0
  %v665 = vadd.f32 0.0, %v664
  %666 = vdwg.mxu0
  %667 = vmatprep.subr.mxu0 0.0
  %668 = vmatpush1.msra.mxu0 0.0
  %669 = vmatprep.subr.mxu0 0.0
  %670 = vmatpush1.msra.mxu0 0.0
  %671 = vmatprep.subr.mxu0 0.0
  %672 = vmatpush1.msra.mxu0 0.0
  %673 = vmatprep.subr.mxu0 0.0
  %674 = vmatpush1.msra.mxu0 0.0
  %675 = vmatprep.subr.mxu0 0.0
  %676 = vmatpush1.msra.mxu0 0.0
  %677 = vmatprep.subr.mxu0 0.0
  %678 = vmatpush1.msra.mxu0 0.0
  %679 = vmatprep.subr.mxu0 0.0
  %680 = vmatpush1.msra.mxu0 0.0
  %681 = vmatprep.subr.mxu0 0.0
  %682 = vmatpush1.msra.mxu0 0.0
  %683 = vmatprep.subr.mxu0 0.0
  %684 = vmatpush1.msra.mxu0 0.0
  %685 = vmatprep.subr.mxu0 0.0
  %686 = vmatpush1.msra.mxu0 0.0
  %687 = vmatprep.subr.mxu0 0.0
  %688 = vmatpush1.msra.mxu0 0.0
  %689 = vmatprep.subr.mxu0 0.0
  %690 = vmatpush1.msra.mxu0 0.0
  %691 = vmatprep.subr.mxu0 0.0
  %692 = vmatpush1.msra.mxu0 0.0
  %693 = vmatprep.subr.mxu0 0.0
  %694 = vmatpush1.msra.mxu0 0.0
  %695 = vmatprep.subr.mxu0 0.0
  %696 = vmatpush1.msra.mxu0 0.0
  %697 = vmatprep.subr.mxu0 %v102
  %698 = vmatpush1.msra.mxu0 %v99
  %699 = vmatprep.subr.mxu0 0.0
  %700 = vmatpush2.msra.mxu0 0.0
  %701 = vmatprep.subr.mxu0 0.0
  %702 = vmatpush2.msra.mxu0 0.0
  %703 = vmatprep.subr.mxu0 0.0
  %704 = vmatpush2.msra.mxu0 0.0
  %705 = vmatprep.subr.mxu0 0.0
  %706 = vmatpush2.msra.mxu0 0.0
  %707 = vmatprep.subr.mxu0 0.0
  %708 = vmatpush2.msra.mxu0 0.0
  %709 = vmatprep.subr.mxu0 0.0
  %710 = vmatpush2.msra.mxu0 0.0
  %711 = vmatprep.subr.mxu0 0.0
  %712 = vmatpush2.msra.mxu0 0.0
  %713 = vmatprep.subr.mxu0 0.0
  %714 = vmatpush2.msra.mxu0 0.0
  %715 = vmatprep.subr.mxu0 0.0
  %716 = vmatpush2.msra.mxu0 0.0
  %717 = vmatprep.subr.mxu0 0.0
  %718 = vmatpush2.msra.mxu0 0.0
  %719 = vmatprep.subr.mxu0 0.0
  %720 = vmatpush2.msra.mxu0 0.0
  %721 = vmatprep.subr.mxu0 0.0
  %722 = vmatpush2.msra.mxu0 0.0
  %723 = vmatprep.subr.mxu0 0.0
  %724 = vmatpush2.msra.mxu0 0.0
  %725 = vmatprep.subr.mxu0 0.0
  %726 = vmatpush2.msra.mxu0 0.0
  %727 = vmatprep.subr.mxu0 0.0
  %728 = vmatpush2.msra.mxu0 0.0
  %729 = vmatprep.subr.mxu0 0.0
  %730 = vmatpush2.msra.mxu0 0.0
  %731 = vmatprep.mubr.f32.mxu0 0.0
  %732 = vmatmul.mubr.f32.gmra.mxu0 %v50
  %v733 = vpop.f32.mrf.mxu0
  %v734 = vadd.f32 0.0, %v733
  %v735 = vpop.f32.mrf.mxu0
  %v736 = vadd.f32 0.0, %v735
  %737 = vmatprep.mubr.f32.mxu0 0.0
  %738 = vmatmul.mubr.f32.gmra.mxu0 %v53
  %v739 = vpop.f32.mrf.mxu0
  %v740 = vadd.f32 0.0, %v739
  %v741 = vpop.f32.mrf.mxu0
  %v742 = vadd.f32 0.0, %v741
  %743 = vdwg.mxu0
  %744 = vmatprep.subr.mxu0 0.0
  %745 = vmatpush1.msra.mxu0 0.0
  %746 = vmatprep.subr.mxu0 0.0
  %747 = vmatpush1.msra.mxu0 0.0
  %748 = vmatprep.subr.mxu0 0.0
  %749 = vmatpush1.msra.mxu0 0.0
  %750 = vmatprep.subr.mxu0 0.0
  %751 = vmatpush1.msra.mxu0 0.0
  %752 = vmatprep.subr.mxu0 0.0
  %753 = vmatpush1.msra.mxu0 0.0
  %754 = vmatprep.subr.mxu0 0.0
  %755 = vmatpush1.msra.mxu0 0.0
  %756 = vmatprep.subr.mxu0 0.0
  %757 = vmatpush1.msra.mxu0 0.0
  %758 = vmatprep.subr.mxu0 0.0
  %759 = vmatpush1.msra.mxu0 0.0
  %760 = vmatprep.subr.mxu0 0.0
  %761 = vmatpush1.msra.mxu0 0.0
  %762 = vmatprep.subr.mxu0 0.0
  %763 = vmatpush1.msra.mxu0 0.0
  %764 = vmatprep.subr.mxu0 0.0
  %765 = vmatpush1.msra.mxu0 0.0
  %766 = vmatprep.subr.mxu0 0.0
  %767 = vmatpush1.msra.mxu0 0.0
  %768 = vmatprep.subr.mxu0 0.0
  %769 = vmatpush1.msra.mxu0 0.0
  %770 = vmatprep.subr.mxu0 0.0
  %771 = vmatpush1.msra.mxu0 0.0
  %772 = vmatprep.subr.mxu0 0.0
  %773 = vmatpush1.msra.mxu0 0.0
  %774 = vmatprep.subr.mxu0 %v108
  %775 = vmatpush1.msra.mxu0 %v105
  %776 = vmatprep.subr.mxu0 0.0
  %777 = vmatpush2.msra.mxu0 0.0
  %778 = vmatprep.subr.mxu0 0.0
  %779 = vmatpush2.msra.mxu0 0.0
  %780 = vmatprep.subr.mxu0 0.0
  %781 = vmatpush2.msra.mxu0 0.0
  %782 = vmatprep.subr.mxu0 0.0
  %783 = vmatpush2.msra.mxu0 0.0
  %784 = vmatprep.subr.mxu0 0.0
  %785 = vmatpush2.msra.mxu0 0.0
  %786 = vmatprep.subr.mxu0 0.0
  %787 = vmatpush2.msra.mxu0 0.0
  %788 = vmatprep.subr.mxu0 0.0
  %789 = vmatpush2.msra.mxu0 0.0
  %790 = vmatprep.subr.mxu0 0.0
  %791 = vmatpush2.msra.mxu0 0.0
  %792 = vmatprep.subr.mxu0 0.0
  %793 = vmatpush2.msra.mxu0 0.0
  %794 = vmatprep.subr.mxu0 0.0
  %795 = vmatpush2.msra.mxu0 0.0
  %796 = vmatprep.subr.mxu0 0.0
  %797 = vmatpush2.msra.mxu0 0.0
  %798 = vmatprep.subr.mxu0 0.0
  %799 = vmatpush2.msra.mxu0 0.0
  %800 = vmatprep.subr.mxu0 0.0
  %801 = vmatpush2.msra.mxu0 0.0
  %802 = vmatprep.subr.mxu0 0.0
  %803 = vmatpush2.msra.mxu0 0.0
  %804 = vmatprep.subr.mxu0 0.0
  %805 = vmatpush2.msra.mxu0 0.0
  %806 = vmatprep.subr.mxu0 0.0
  %807 = vmatpush2.msra.mxu0 0.0
  %808 = vmatprep.mubr.f32.mxu0 0.0
  %809 = vmatmul.mubr.f32.gmra.mxu0 %v50
  %v810 = vpop.f32.mrf.mxu0
  %v811 = vadd.f32 0.0, %v810
  %v812 = vpop.f32.mrf.mxu0
  %v813 = vadd.f32 0.0, %v812
  %814 = vmatprep.mubr.f32.mxu0 0.0
  %815 = vmatmul.mubr.f32.gmra.mxu0 %v53
  %v816 = vpop.f32.mrf.mxu0
  %v817 = vadd.f32 0.0, %v816
  %v818 = vpop.f32.mrf.mxu0
  %v819 = vadd.f32 0.0, %v818
  %820 = vdwg.mxu0
  %821 = vmatprep.subr.mxu0 0.0
  %822 = vmatpush1.msra.mxu0 0.0
  %823 = vmatprep.subr.mxu0 0.0
  %824 = vmatpush1.msra.mxu0 0.0
  %825 = vmatprep.subr.mxu0 0.0
  %826 = vmatpush1.msra.mxu0 0.0
  %827 = vmatprep.subr.mxu0 0.0
  %828 = vmatpush1.msra.mxu0 0.0
  %829 = vmatprep.subr.mxu0 0.0
  %830 = vmatpush1.msra.mxu0 0.0
  %831 = vmatprep.subr.mxu0 0.0
  %832 = vmatpush1.msra.mxu0 0.0
  %833 = vmatprep.subr.mxu0 0.0
  %834 = vmatpush1.msra.mxu0 0.0
  %835 = vmatprep.subr.mxu0 0.0
  %836 = vmatpush1.msra.mxu0 0.0
  %837 = vmatprep.subr.mxu0 0.0
  %838 = vmatpush1.msra.mxu0 0.0
  %839 = vmatprep.subr.mxu0 0.0
  %840 = vmatpush1.msra.mxu0 0.0
  %841 = vmatprep.subr.mxu0 0.0
  %842 = vmatpush1.msra.mxu0 0.0
  %843 = vmatprep.subr.mxu0 0.0
  %844 = vmatpush1.msra.mxu0 0.0
  %845 = vmatprep.subr.mxu0 0.0
  %846 = vmatpush1.msra.mxu0 0.0
  %847 = vmatprep.subr.mxu0 0.0
  %848 = vmatpush1.msra.mxu0 0.0
  %849 = vmatprep.subr.mxu0 0.0
  %850 = vmatpush1.msra.mxu0 0.0
  %851 = vmatprep.subr.mxu0 %v114
  %852 = vmatpush1.msra.mxu0 %v111
  %853 = vmatprep.subr.mxu0 0.0
  %854 = vmatpush2.msra.mxu0 0.0
  %855 = vmatprep.subr.mxu0 0.0
  %856 = vmatpush2.msra.mxu0 0.0
  %857 = vmatprep.subr.mxu0 0.0
  %858 = vmatpush2.msra.mxu0 0.0
  %859 = vmatprep.subr.mxu0 0.0
  %860 = vmatpush2.msra.mxu0 0.0
  %861 = vmatprep.subr.mxu0 0.0
  %862 = vmatpush2.msra.mxu0 0.0
  %863 = vmatprep.subr.mxu0 0.0
  %864 = vmatpush2.msra.mxu0 0.0
  %865 = vmatprep.subr.mxu0 0.0
  %866 = vmatpush2.msra.mxu0 0.0
  %867 = vmatprep.subr.mxu0 0.0
  %868 = vmatpush2.msra.mxu0 0.0
  %869 = vmatprep.subr.mxu0 0.0
  %870 = vmatpush2.msra.mxu0 0.0
  %871 = vmatprep.subr.mxu0 0.0
  %872 = vmatpush2.msra.mxu0 0.0
  %873 = vmatprep.subr.mxu0 0.0
  %874 = vmatpush2.msra.mxu0 0.0
  %875 = vmatprep.subr.mxu0 0.0
  %876 = vmatpush2.msra.mxu0 0.0
  %877 = vmatprep.subr.mxu0 0.0
  %878 = vmatpush2.msra.mxu0 0.0
  %879 = vmatprep.subr.mxu0 0.0
  %880 = vmatpush2.msra.mxu0 0.0
  %881 = vmatprep.subr.mxu0 0.0
  %882 = vmatpush2.msra.mxu0 0.0
  %883 = vmatprep.subr.mxu0 0.0
  %884 = vmatpush2.msra.mxu0 0.0
  %885 = vmatprep.mubr.f32.mxu0 0.0
  %886 = vmatmul.mubr.f32.gmra.mxu0 %v50
  %v887 = vpop.f32.mrf.mxu0
  %v888 = vadd.f32 0.0, %v887
  %v889 = vpop.f32.mrf.mxu0
  %v890 = vadd.f32 0.0, %v889
  %891 = vmatprep.mubr.f32.mxu0 0.0
  %892 = vmatmul.mubr.f32.gmra.mxu0 %v53
  %v893 = vpop.f32.mrf.mxu0
  %v894 = vadd.f32 0.0, %v893
  %v895 = vpop.f32.mrf.mxu0
  %v896 = vadd.f32 0.0, %v895
  %897 = vdwg.mxu0
  %898 = vmatprep.subr.mxu0 0.0
  %899 = vmatpush1.msra.mxu0 0.0
  %900 = vmatprep.subr.mxu0 0.0
  %901 = vmatpush1.msra.mxu0 0.0
  %902 = vmatprep.subr.mxu0 0.0
  %903 = vmatpush1.msra.mxu0 0.0
  %904 = vmatprep.subr.mxu0 0.0
  %905 = vmatpush1.msra.mxu0 0.0
  %906 = vmatprep.subr.mxu0 0.0
  %907 = vmatpush1.msra.mxu0 0.0
  %908 = vmatprep.subr.mxu0 0.0
  %909 = vmatpush1.msra.mxu0 0.0
  %910 = vmatprep.subr.mxu0 0.0
  %911 = vmatpush1.msra.mxu0 0.0
  %912 = vmatprep.subr.mxu0 0.0
  %913 = vmatpush1.msra.mxu0 0.0
  %914 = vmatprep.subr.mxu0 0.0
  %915 = vmatpush1.msra.mxu0 0.0
  %916 = vmatprep.subr.mxu0 0.0
  %917 = vmatpush1.msra.mxu0 0.0
  %918 = vmatprep.subr.mxu0 0.0
  %919 = vmatpush1.msra.mxu0 0.0
  %920 = vmatprep.subr.mxu0 0.0
  %921 = vmatpush1.msra.mxu0 0.0
  %922 = vmatprep.subr.mxu0 0.0
  %923 = vmatpush1.msra.mxu0 0.0
  %924 = vmatprep.subr.mxu0 0.0
  %925 = vmatpush1.msra.mxu0 0.0
  %926 = vmatprep.subr.mxu0 0.0
  %927 = vmatpush1.msra.mxu0 0.0
  %928 = vmatprep.subr.mxu0 %v120
  %929 = vmatpush1.msra.mxu0 %v117
  %930 = vmatprep.subr.mxu0 0.0
  %931 = vmatpush2.msra.mxu0 0.0
  %932 = vmatprep.subr.mxu0 0.0
  %933 = vmatpush2.msra.mxu0 0.0
  %934 = vmatprep.subr.mxu0 0.0
  %935 = vmatpush2.msra.mxu0 0.0
  %936 = vmatprep.subr.mxu0 0.0
  %937 = vmatpush2.msra.mxu0 0.0
  %938 = vmatprep.subr.mxu0 0.0
  %939 = vmatpush2.msra.mxu0 0.0
  %940 = vmatprep.subr.mxu0 0.0
  %941 = vmatpush2.msra.mxu0 0.0
  %942 = vmatprep.subr.mxu0 0.0
  %943 = vmatpush2.msra.mxu0 0.0
  %944 = vmatprep.subr.mxu0 0.0
  %945 = vmatpush2.msra.mxu0 0.0
  %946 = vmatprep.subr.mxu0 0.0
  %947 = vmatpush2.msra.mxu0 0.0
  %948 = vmatprep.subr.mxu0 0.0
  %949 = vmatpush2.msra.mxu0 0.0
  %950 = vmatprep.subr.mxu0 0.0
  %951 = vmatpush2.msra.mxu0 0.0
  %952 = vmatprep.subr.mxu0 0.0
  %953 = vmatpush2.msra.mxu0 0.0
  %954 = vmatprep.subr.mxu0 0.0
  %955 = vmatpush2.msra.mxu0 0.0
  %956 = vmatprep.subr.mxu0 0.0
  %957 = vmatpush2.msra.mxu0 0.0
  %958 = vmatprep.subr.mxu0 0.0
  %959 = vmatpush2.msra.mxu0 0.0
  %960 = vmatprep.subr.mxu0 0.0
  %961 = vmatpush2.msra.mxu0 0.0
  %962 = vmatprep.mubr.f32.mxu0 0.0
  %963 = vmatmul.mubr.f32.gmra.mxu0 %v50
  %v964 = vpop.f32.mrf.mxu0
  %v965 = vadd.f32 0.0, %v964
  %v966 = vpop.f32.mrf.mxu0
  %v967 = vadd.f32 0.0, %v966
  %968 = vmatprep.mubr.f32.mxu0 0.0
  %969 = vmatmul.mubr.f32.gmra.mxu0 %v53
  %v970 = vpop.f32.mrf.mxu0
  %v971 = vadd.f32 0.0, %v970
  %v972 = vpop.f32.mrf.mxu0
  %v973 = vadd.f32 0.0, %v972
  %974 = vdwg.mxu0
  %975 = vmatprep.subr.mxu0 0.0
  %976 = vmatpush1.msra.mxu0 0.0
  %977 = vmatprep.subr.mxu0 0.0
  %978 = vmatpush1.msra.mxu0 0.0
  %979 = vmatprep.subr.mxu0 0.0
  %980 = vmatpush1.msra.mxu0 0.0
  %981 = vmatprep.subr.mxu0 0.0
  %982 = vmatpush1.msra.mxu0 0.0
  %983 = vmatprep.subr.mxu0 0.0
  %984 = vmatpush1.msra.mxu0 0.0
  %985 = vmatprep.subr.mxu0 0.0
  %986 = vmatpush1.msra.mxu0 0.0
  %987 = vmatprep.subr.mxu0 0.0
  %988 = vmatpush1.msra.mxu0 0.0
  %989 = vmatprep.subr.mxu0 0.0
  %990 = vmatpush1.msra.mxu0 0.0
  %991 = vmatprep.subr.mxu0 0.0
  %992 = vmatpush1.msra.mxu0 0.0
  %993 = vmatprep.subr.mxu0 0.0
  %994 = vmatpush1.msra.mxu0 0.0
  %995 = vmatprep.subr.mxu0 0.0
  %996 = vmatpush1.msra.mxu0 0.0
  %997 = vmatprep.subr.mxu0 0.0
  %998 = vmatpush1.msra.mxu0 0.0
  %999 = vmatprep.subr.mxu0 0.0
  %1000 = vmatpush1.msra.mxu0 0.0
  %1001 = vmatprep.subr.mxu0 0.0
  %1002 = vmatpush1.msra.mxu0 0.0
  %1003 = vmatprep.subr.mxu0 0.0
  %1004 = vmatpush1.msra.mxu0 0.0
  %1005 = vmatprep.subr.mxu0 %v126
  %1006 = vmatpush1.msra.mxu0 %v123
  %1007 = vmatprep.subr.mxu0 0.0
  %1008 = vmatpush2.msra.mxu0 0.0
  %1009 = vmatprep.subr.mxu0 0.0
  %1010 = vmatpush2.msra.mxu0 0.0
  %1011 = vmatprep.subr.mxu0 0.0
  %1012 = vmatpush2.msra.mxu0 0.0
  %1013 = vmatprep.subr.mxu0 0.0
  %1014 = vmatpush2.msra.mxu0 0.0
  %1015 = vmatprep.subr.mxu0 0.0
  %1016 = vmatpush2.msra.mxu0 0.0
  %1017 = vmatprep.subr.mxu0 0.0
  %1018 = vmatpush2.msra.mxu0 0.0
  %1019 = vmatprep.subr.mxu0 0.0
  %1020 = vmatpush2.msra.mxu0 0.0
  %1021 = vmatprep.subr.mxu0 0.0
  %1022 = vmatpush2.msra.mxu0 0.0
  %1023 = vmatprep.subr.mxu0 0.0
  %1024 = vmatpush2.msra.mxu0 0.0
  %1025 = vmatprep.subr.mxu0 0.0
  %1026 = vmatpush2.msra.mxu0 0.0
  %1027 = vmatprep.subr.mxu0 0.0
  %1028 = vmatpush2.msra.mxu0 0.0
  %1029 = vmatprep.subr.mxu0 0.0
  %1030 = vmatpush2.msra.mxu0 0.0
  %1031 = vmatprep.subr.mxu0 0.0
  %1032 = vmatpush2.msra.mxu0 0.0
  %1033 = vmatprep.subr.mxu0 0.0
  %1034 = vmatpush2.msra.mxu0 0.0
  %1035 = vmatprep.subr.mxu0 0.0
  %1036 = vmatpush2.msra.mxu0 0.0
  %1037 = vmatprep.subr.mxu0 0.0
  %1038 = vmatpush2.msra.mxu0 0.0
  %1039 = vmatprep.mubr.f32.mxu0 0.0
  %1040 = vmatmul.mubr.f32.gmra.mxu0 %v50
  %v1041 = vpop.f32.mrf.mxu0
  %v1042 = vadd.f32 0.0, %v1041
  %v1043 = vpop.f32.mrf.mxu0
  %v1044 = vadd.f32 0.0, %v1043
  %1045 = vmatprep.mubr.f32.mxu0 0.0
  %1046 = vmatmul.mubr.f32.gmra.mxu0 %v53
  %v1047 = vpop.f32.mrf.mxu0
  %v1048 = vadd.f32 0.0, %v1047
  %v1049 = vpop.f32.mrf.mxu0
  %v1050 = vadd.f32 0.0, %v1049
  %1051 = vdwg.mxu0
  %1052 = vmatprep.subr.mxu0 0.0
  %1053 = vmatpush1.xpose.msra.mxu0 0.0
  %1054 = vmatprep.subr.mxu0 0.0
  %1055 = vmatpush1.xpose.msra.mxu0 0.0
  %1056 = vmatprep.subr.mxu0 0.0
  %1057 = vmatpush1.xpose.msra.mxu0 0.0
  %1058 = vmatprep.subr.mxu0 0.0
  %1059 = vmatpush1.xpose.msra.mxu0 0.0
  %1060 = vmatprep.subr.mxu0 0.0
  %1061 = vmatpush1.xpose.msra.mxu0 0.0
  %1062 = vmatprep.subr.mxu0 0.0
  %1063 = vmatpush1.xpose.msra.mxu0 0.0
  %1064 = vmatprep.subr.mxu0 0.0
  %1065 = vmatpush1.xpose.msra.mxu0 0.0
  %1066 = vmatprep.subr.mxu0 0.0
  %1067 = vmatpush1.xpose.msra.mxu0 0.0
  %1068 = vmatprep.subr.mxu0 0.0
  %1069 = vmatpush1.xpose.msra.mxu0 0.0
  %1070 = vmatprep.subr.mxu0 0.0
  %1071 = vmatpush1.xpose.msra.mxu0 0.0
  %1072 = vmatprep.subr.mxu0 0.0
  %1073 = vmatpush1.xpose.msra.mxu0 0.0
  %1074 = vmatprep.subr.mxu0 0.0
  %1075 = vmatpush1.xpose.msra.mxu0 0.0
  %1076 = vmatprep.subr.mxu0 0.0
  %1077 = vmatpush1.xpose.msra.mxu0 0.0
  %1078 = vmatprep.subr.mxu0 0.0
  %1079 = vmatpush1.xpose.msra.mxu0 0.0
  %1080 = vmatprep.subr.mxu0 0.0
  %1081 = vmatpush1.xpose.msra.mxu0 0.0
  %1082 = vmatprep.subr.mxu0 0.0
  %1083 = vmatpush1.xpose.msra.mxu0 %v503
  %1084 = vmatprep.subr.mxu0 0.0
  %1085 = vmatpush2.xpose.msra.mxu0 0.0
  %1086 = vmatprep.subr.mxu0 0.0
  %1087 = vmatpush2.xpose.msra.mxu0 0.0
  %1088 = vmatprep.subr.mxu0 0.0
  %1089 = vmatpush2.xpose.msra.mxu0 0.0
  %1090 = vmatprep.subr.mxu0 0.0
  %1091 = vmatpush2.xpose.msra.mxu0 0.0
  %1092 = vmatprep.subr.mxu0 0.0
  %1093 = vmatpush2.xpose.msra.mxu0 0.0
  %1094 = vmatprep.subr.mxu0 0.0
  %1095 = vmatpush2.xpose.msra.mxu0 0.0
  %1096 = vmatprep.subr.mxu0 0.0
  %1097 = vmatpush2.xpose.msra.mxu0 0.0
  %1098 = vmatprep.subr.mxu0 0.0
  %1099 = vmatpush2.xpose.msra.mxu0 0.0
  %1100 = vmatprep.subr.mxu0 0.0
  %1101 = vmatpush2.xpose.msra.mxu0 0.0
  %1102 = vmatprep.subr.mxu0 0.0
  %1103 = vmatpush2.xpose.msra.mxu0 0.0
  %1104 = vmatprep.subr.mxu0 0.0
  %1105 = vmatpush2.xpose.msra.mxu0 0.0
  %1106 = vmatprep.subr.mxu0 0.0
  %1107 = vmatpush2.xpose.msra.mxu0 0.0
  %1108 = vmatprep.subr.mxu0 0.0
  %1109 = vmatpush2.xpose.msra.mxu0 0.0
  %1110 = vmatprep.subr.mxu0 0.0
  %1111 = vmatpush2.xpose.msra.mxu0 0.0
  %1112 = vmatprep.subr.mxu0 0.0
  %1113 = vmatpush2.xpose.msra.mxu0 0.0
  %1114 = vmatprep.subr.mxu0 0.0
  %1115 = vmatpush2.xpose.msra.mxu0 0.0
  %1116 = vmatprep.mubr.f32.mxu0 0.0
  %1117 = vmatmul.mubr.f32.gmra.mxu0 %v195
  %v1118 = vpop.f32.mrf.mxu0
  %v1119 = vadd.f32 0.0, %v1118
  %v1120 = vpop.f32.mrf.mxu0
  %1121 = vdwg.mxu0
  %v1122 = vmul.f32 %v1119, 0.088388346
  %vm1123 = vcmask 64512
  %v1124 = vsel %vm1123, %v1122, -inf
  %1125 = vmax.xlane.f32.xlu0 %v1124
  %v1126 = vpop.xlane.xlu0 %1125
  %v1127 = vsub.f32 %v1122, %v1126
  %v1128 = vmul.f32 %v1127, 1.442695
  %v1129 = vpow.pop %v1128
  %v1130 = vsel %vm1123, %v1129, 0.0
  %1131 = vadd.xlane.f32.xlu0 %v1130
  %v1132 = vpop.xlane.xlu0 %1131
  %v1133 = vrcp.pop %v1132
  %v1134 = vmul.f32 %v1129, %v1133
  %v1136 = vsel %vm1123, %v1134, 0
  %1138 = vmatprep.subr.mxu0 0.0
  %1139 = vmatpush1.msra.mxu0 0.0
  %1140 = vmatprep.subr.mxu0 0.0
  %1141 = vmatpush1.msra.mxu0 0.0
  %1142 = vmatprep.subr.mxu0 0.0
  %1143 = vmatpush1.msra.mxu0 0.0
  %1144 = vmatprep.subr.mxu0 0.0
  %1145 = vmatpush1.msra.mxu0 0.0
  %1146 = vmatprep.subr.mxu0 0.0
  %1147 = vmatpush1.msra.mxu0 0.0
  %1148 = vmatprep.subr.mxu0 0.0
  %1149 = vmatpush1.msra.mxu0 0.0
  %1150 = vmatprep.subr.mxu0 0.0
  %1151 = vmatpush1.msra.mxu0 0.0
  %1152 = vmatprep.subr.mxu0 0.0
  %1153 = vmatpush1.msra.mxu0 0.0
  %1154 = vmatprep.subr.mxu0 0.0
  %1155 = vmatpush1.msra.mxu0 0.0
  %1156 = vmatprep.subr.mxu0 0.0
  %1157 = vmatpush1.msra.mxu0 0.0
  %1158 = vmatprep.subr.mxu0 0.0
  %1159 = vmatpush1.msra.mxu0 0.0
  %1160 = vmatprep.subr.mxu0 0.0
  %1161 = vmatpush1.msra.mxu0 0.0
  %1162 = vmatprep.subr.mxu0 0.0
  %1163 = vmatpush1.msra.mxu0 0.0
  %1164 = vmatprep.subr.mxu0 0.0
  %1165 = vmatpush1.msra.mxu0 0.0
  %1166 = vmatprep.subr.mxu0 0.0
  %1167 = vmatpush1.msra.mxu0 0.0
  %1168 = vmatprep.subr.mxu0 0.0
  %1169 = vmatpush1.msra.mxu0 %v811
  %1170 = vmatprep.subr.mxu0 0.0
  %1171 = vmatpush2.msra.mxu0 0.0
  %1172 = vmatprep.subr.mxu0 0.0
  %1173 = vmatpush2.msra.mxu0 0.0
  %1174 = vmatprep.subr.mxu0 0.0
  %1175 = vmatpush2.msra.mxu0 0.0
  %1176 = vmatprep.subr.mxu0 0.0
  %1177 = vmatpush2.msra.mxu0 0.0
  %1178 = vmatprep.subr.mxu0 0.0
  %1179 = vmatpush2.msra.mxu0 0.0
  %1180 = vmatprep.subr.mxu0 0.0
  %1181 = vmatpush2.msra.mxu0 0.0
  %1182 = vmatprep.subr.mxu0 0.0
  %1183 = vmatpush2.msra.mxu0 0.0
  %1184 = vmatprep.subr.mxu0 0.0
  %1185 = vmatpush2.msra.mxu0 0.0
  %1186 = vmatprep.subr.mxu0 0.0
  %1187 = vmatpush2.msra.mxu0 0.0
  %1188 = vmatprep.subr.mxu0 0.0
  %1189 = vmatpush2.msra.mxu0 0.0
  %1190 = vmatprep.subr.mxu0 0.0
  %1191 = vmatpush2.msra.mxu0 0.0
  %1192 = vmatprep.subr.mxu0 0.0
  %1193 = vmatpush2.msra.mxu0 0.0
  %1194 = vmatprep.subr.mxu0 0.0
  %1195 = vmatpush2.msra.mxu0 0.0
  %1196 = vmatprep.subr.mxu0 0.0
  %1197 = vmatpush2.msra.mxu0 0.0
  %1198 = vmatprep.subr.mxu0 0.0
  %1199 = vmatpush2.msra.mxu0 0.0
  %1200 = vmatprep.subr.mxu0 0.0
  %1201 = vmatpush2.msra.mxu0 0.0
  %1202 = vmatprep.mubr.f32.mxu0 0.0
  %1203 = vmatmul.mubr.f32.gmra.mxu0 %v1136
  %v1204 = vpop.f32.mrf.mxu0
  %v1205 = vadd.f32 0.0, %v1204
  %v1206 = vpop.f32.mrf.mxu0
  %1207 = vdwg.mxu0
  %1208 = vmatprep.subr.mxu0 0.0
  %1209 = vmatpush1.xpose.msra.mxu0 0.0
  %1210 = vmatprep.subr.mxu0 0.0
  %1211 = vmatpush1.xpose.msra.mxu0 0.0
  %1212 = vmatprep.subr.mxu0 0.0
  %1213 = vmatpush1.xpose.msra.mxu0 0.0
  %1214 = vmatprep.subr.mxu0 0.0
  %1215 = vmatpush1.xpose.msra.mxu0 0.0
  %1216 = vmatprep.subr.mxu0 0.0
  %1217 = vmatpush1.xpose.msra.mxu0 0.0
  %1218 = vmatprep.subr.mxu0 0.0
  %1219 = vmatpush1.xpose.msra.mxu0 0.0
  %1220 = vmatprep.subr.mxu0 0.0
  %1221 = vmatpush1.xpose.msra.mxu0 0.0
  %1222 = vmatprep.subr.mxu0 0.0
  %1223 = vmatpush1.xpose.msra.mxu0 0.0
  %1224 = vmatprep.subr.mxu0 0.0
  %1225 = vmatpush1.xpose.msra.mxu0 0.0
  %1226 = vmatprep.subr.mxu0 0.0
  %1227 = vmatpush1.xpose.msra.mxu0 0.0
  %1228 = vmatprep.subr.mxu0 0.0
  %1229 = vmatpush1.xpose.msra.mxu0 0.0
  %1230 = vmatprep.subr.mxu0 0.0
  %1231 = vmatpush1.xpose.msra.mxu0 0.0
  %1232 = vmatprep.subr.mxu0 0.0
  %1233 = vmatpush1.xpose.msra.mxu0 0.0
  %1234 = vmatprep.subr.mxu0 0.0
  %1235 = vmatpush1.xpose.msra.mxu0 0.0
  %1236 = vmatprep.subr.mxu0 0.0
  %1237 = vmatpush1.xpose.msra.mxu0 0.0
  %1238 = vmatprep.subr.mxu0 0.0
  %1239 = vmatpush1.xpose.msra.mxu0 %v505
  %1240 = vmatprep.subr.mxu0 0.0
  %1241 = vmatpush2.xpose.msra.mxu0 0.0
  %1242 = vmatprep.subr.mxu0 0.0
  %1243 = vmatpush2.xpose.msra.mxu0 0.0
  %1244 = vmatprep.subr.mxu0 0.0
  %1245 = vmatpush2.xpose.msra.mxu0 0.0
  %1246 = vmatprep.subr.mxu0 0.0
  %1247 = vmatpush2.xpose.msra.mxu0 0.0
  %1248 = vmatprep.subr.mxu0 0.0
  %1249 = vmatpush2.xpose.msra.mxu0 0.0
  %1250 = vmatprep.subr.mxu0 0.0
  %1251 = vmatpush2.xpose.msra.mxu0 0.0
  %1252 = vmatprep.subr.mxu0 0.0
  %1253 = vmatpush2.xpose.msra.mxu0 0.0
  %1254 = vmatprep.subr.mxu0 0.0
  %1255 = vmatpush2.xpose.msra.mxu0 0.0
  %1256 = vmatprep.subr.mxu0 0.0
  %1257 = vmatpush2.xpose.msra.mxu0 0.0
  %1258 = vmatprep.subr.mxu0 0.0
  %1259 = vmatpush2.xpose.msra.mxu0 0.0
  %1260 = vmatprep.subr.mxu0 0.0
  %1261 = vmatpush2.xpose.msra.mxu0 0.0
  %1262 = vmatprep.subr.mxu0 0.0
  %1263 = vmatpush2.xpose.msra.mxu0 0.0
  %1264 = vmatprep.subr.mxu0 0.0
  %1265 = vmatpush2.xpose.msra.mxu0 0.0
  %1266 = vmatprep.subr.mxu0 0.0
  %1267 = vmatpush2.xpose.msra.mxu0 0.0
  %1268 = vmatprep.subr.mxu0 0.0
  %1269 = vmatpush2.xpose.msra.mxu0 0.0
  %1270 = vmatprep.subr.mxu0 0.0
  %1271 = vmatpush2.xpose.msra.mxu0 0.0
  %1272 = vmatprep.mubr.f32.mxu0 0.0
  %1273 = vmatmul.mubr.f32.gmra.mxu0 %v197
  %v1274 = vpop.f32.mrf.mxu0
  %v1275 = vadd.f32 0.0, %v1274
  %v1276 = vpop.f32.mrf.mxu0
  %1277 = vdwg.mxu0
  %v1278 = vmul.f32 %v1275, 0.088388346
  %v1279 = vsel %vm1123, %v1278, -inf
  %1280 = vmax.xlane.f32.xlu0 %v1279
  %v1281 = vpop.xlane.xlu0 %1280
  %v1282 = vsub.f32 %v1278, %v1281
  %v1283 = vmul.f32 %v1282, 1.442695
  %v1284 = vpow.pop %v1283
  %v1285 = vsel %vm1123, %v1284, 0.0
  %1286 = vadd.xlane.f32.xlu0 %v1285
  %v1287 = vpop.xlane.xlu0 %1286
  %v1288 = vrcp.pop %v1287
  %v1289 = vmul.f32 %v1284, %v1288
  %v1291 = vsel %vm1123, %v1289, 0
  %1293 = vmatprep.subr.mxu0 0.0
  %1294 = vmatpush1.msra.mxu0 0.0
  %1295 = vmatprep.subr.mxu0 0.0
  %1296 = vmatpush1.msra.mxu0 0.0
  %1297 = vmatprep.subr.mxu0 0.0
  %1298 = vmatpush1.msra.mxu0 0.0
  %1299 = vmatprep.subr.mxu0 0.0
  %1300 = vmatpush1.msra.mxu0 0.0
  %1301 = vmatprep.subr.mxu0 0.0
  %1302 = vmatpush1.msra.mxu0 0.0
  %1303 = vmatprep.subr.mxu0 0.0
  %1304 = vmatpush1.msra.mxu0 0.0
  %1305 = vmatprep.subr.mxu0 0.0
  %1306 = vmatpush1.msra.mxu0 0.0
  %1307 = vmatprep.subr.mxu0 0.0
  %1308 = vmatpush1.msra.mxu0 0.0
  %1309 = vmatprep.subr.mxu0 0.0
  %1310 = vmatpush1.msra.mxu0 0.0
  %1311 = vmatprep.subr.mxu0 0.0
  %1312 = vmatpush1.msra.mxu0 0.0
  %1313 = vmatprep.subr.mxu0 0.0
  %1314 = vmatpush1.msra.mxu0 0.0
  %1315 = vmatprep.subr.mxu0 0.0
  %1316 = vmatpush1.msra.mxu0 0.0
  %1317 = vmatprep.subr.mxu0 0.0
  %1318 = vmatpush1.msra.mxu0 0.0
  %1319 = vmatprep.subr.mxu0 0.0
  %1320 = vmatpush1.msra.mxu0 0.0
  %1321 = vmatprep.subr.mxu0 0.0
  %1322 = vmatpush1.msra.mxu0 0.0
  %1323 = vmatprep.subr.mxu0 0.0
  %1324 = vmatpush1.msra.mxu0 %v813
  %1325 = vmatprep.subr.mxu0 0.0
  %1326 = vmatpush2.msra.mxu0 0.0
  %1327 = vmatprep.subr.mxu0 0.0
  %1328 = vmatpush2.msra.mxu0 0.0
  %1329 = vmatprep.subr.mxu0 0.0
  %1330 = vmatpush2.msra.mxu0 0.0
  %1331 = vmatprep.subr.mxu0 0.0
  %1332 = vmatpush2.msra.mxu0 0.0
  %1333 = vmatprep.subr.mxu0 0.0
  %1334 = vmatpush2.msra.mxu0 0.0
  %1335 = vmatprep.subr.mxu0 0.0
  %1336 = vmatpush2.msra.mxu0 0.0
  %1337 = vmatprep.subr.mxu0 0.0
  %1338 = vmatpush2.msra.mxu0 0.0
  %1339 = vmatprep.subr.mxu0 0.0
  %1340 = vmatpush2.msra.mxu0 0.0
  %1341 = vmatprep.subr.mxu0 0.0
  %1342 = vmatpush2.msra.mxu0 0.0
  %1343 = vmatprep.subr.mxu0 0.0
  %1344 = vmatpush2.msra.mxu0 0.0
  %1345 = vmatprep.subr.mxu0 0.0
  %1346 = vmatpush2.msra.mxu0 0.0
  %1347 = vmatprep.subr.mxu0 0.0
  %1348 = vmatpush2.msra.mxu0 0.0
  %1349 = vmatprep.subr.mxu0 0.0
  %1350 = vmatpush2.msra.mxu0 0.0
  %1351 = vmatprep.subr.mxu0 0.0
  %1352 = vmatpush2.msra.mxu0 0.0
  %1353 = vmatprep.subr.mxu0 0.0
  %1354 = vmatpush2.msra.mxu0 0.0
  %1355 = vmatprep.subr.mxu0 0.0
  %1356 = vmatpush2.msra.mxu0 0.0
  %1357 = vmatprep.mubr.f32.mxu0 0.0
  %1358 = vmatmul.mubr.f32.gmra.mxu0 %v1291
  %v1359 = vpop.f32.mrf.mxu0
  %v1360 = vadd.f32 0.0, %v1359
  %v1361 = vpop.f32.mrf.mxu0
  %1362 = vdwg.mxu0
  %1363 = vmatprep.subr.mxu0 0.0
  %1364 = vmatpush1.xpose.msra.mxu0 0.0
  %1365 = vmatprep.subr.mxu0 0.0
  %1366 = vmatpush1.xpose.msra.mxu0 0.0
  %1367 = vmatprep.subr.mxu0 0.0
  %1368 = vmatpush1.xpose.msra.mxu0 0.0
  %1369 = vmatprep.subr.mxu0 0.0
  %1370 = vmatpush1.xpose.msra.mxu0 0.0
  %1371 = vmatprep.subr.mxu0 0.0
  %1372 = vmatpush1.xpose.msra.mxu0 0.0
  %1373 = vmatprep.subr.mxu0 0.0
  %1374 = vmatpush1.xpose.msra.mxu0 0.0
  %1375 = vmatprep.subr.mxu0 0.0
  %1376 = vmatpush1.xpose.msra.mxu0 0.0
  %1377 = vmatprep.subr.mxu0 0.0
  %1378 = vmatpush1.xpose.msra.mxu0 0.0
  %1379 = vmatprep.subr.mxu0 0.0
  %1380 = vmatpush1.xpose.msra.mxu0 0.0
  %1381 = vmatprep.subr.mxu0 0.0
  %1382 = vmatpush1.xpose.msra.mxu0 0.0
  %1383 = vmatprep.subr.mxu0 0.0
  %1384 = vmatpush1.xpose.msra.mxu0 0.0
  %1385 = vmatprep.subr.mxu0 0.0
  %1386 = vmatpush1.xpose.msra.mxu0 0.0
  %1387 = vmatprep.subr.mxu0 0.0
  %1388 = vmatpush1.xpose.msra.mxu0 0.0
  %1389 = vmatprep.subr.mxu0 0.0
  %1390 = vmatpush1.xpose.msra.mxu0 0.0
  %1391 = vmatprep.subr.mxu0 0.0
  %1392 = vmatpush1.xpose.msra.mxu0 0.0
  %1393 = vmatprep.subr.mxu0 0.0
  %1394 = vmatpush1.xpose.msra.mxu0 %v580
  %1395 = vmatprep.subr.mxu0 0.0
  %1396 = vmatpush2.xpose.msra.mxu0 0.0
  %1397 = vmatprep.subr.mxu0 0.0
  %1398 = vmatpush2.xpose.msra.mxu0 0.0
  %1399 = vmatprep.subr.mxu0 0.0
  %1400 = vmatpush2.xpose.msra.mxu0 0.0
  %1401 = vmatprep.subr.mxu0 0.0
  %1402 = vmatpush2.xpose.msra.mxu0 0.0
  %1403 = vmatprep.subr.mxu0 0.0
  %1404 = vmatpush2.xpose.msra.mxu0 0.0
  %1405 = vmatprep.subr.mxu0 0.0
  %1406 = vmatpush2.xpose.msra.mxu0 0.0
  %1407 = vmatprep.subr.mxu0 0.0
  %1408 = vmatpush2.xpose.msra.mxu0 0.0
  %1409 = vmatprep.subr.mxu0 0.0
  %1410 = vmatpush2.xpose.msra.mxu0 0.0
  %1411 = vmatprep.subr.mxu0 0.0
  %1412 = vmatpush2.xpose.msra.mxu0 0.0
  %1413 = vmatprep.subr.mxu0 0.0
  %1414 = vmatpush2.xpose.msra.mxu0 0.0
  %1415 = vmatprep.subr.mxu0 0.0
  %1416 = vmatpush2.xpose.msra.mxu0 0.0
  %1417 = vmatprep.subr.mxu0 0.0
  %1418 = vmatpush2.xpose.msra.mxu0 0.0
  %1419 = vmatprep.subr.mxu0 0.0
  %1420 = vmatpush2.xpose.msra.mxu0 0.0
  %1421 = vmatprep.subr.mxu0 0.0
  %1422 = vmatpush2.xpose.msra.mxu0 0.0
  %1423 = vmatprep.subr.mxu0 0.0
  %1424 = vmatpush2.xpose.msra.mxu0 0.0
  %1425 = vmatprep.subr.mxu0 0.0
  %1426 = vmatpush2.xpose.msra.mxu0 0.0
  %1427 = vmatprep.mubr.f32.mxu0 0.0
  %1428 = vmatmul.mubr.f32.gmra.mxu0 %v272
  %v1429 = vpop.f32.mrf.mxu0
  %v1430 = vadd.f32 0.0, %v1429
  %v1431 = vpop.f32.mrf.mxu0
  %1432 = vdwg.mxu0
  %v1433 = vmul.f32 %v1430, 0.088388346
  %v1434 = vsel %vm1123, %v1433, -inf
  %1435 = vmax.xlane.f32.xlu0 %v1434
  %v1436 = vpop.xlane.xlu0 %1435
  %v1437 = vsub.f32 %v1433, %v1436
  %v1438 = vmul.f32 %v1437, 1.442695
  %v1439 = vpow.pop %v1438
  %v1440 = vsel %vm1123, %v1439, 0.0
  %1441 = vadd.xlane.f32.xlu0 %v1440
  %v1442 = vpop.xlane.xlu0 %1441
  %v1443 = vrcp.pop %v1442
  %v1444 = vmul.f32 %v1439, %v1443
  %v1446 = vsel %vm1123, %v1444, 0
  %1448 = vmatprep.subr.mxu0 0.0
  %1449 = vmatpush1.msra.mxu0 0.0
  %1450 = vmatprep.subr.mxu0 0.0
  %1451 = vmatpush1.msra.mxu0 0.0
  %1452 = vmatprep.subr.mxu0 0.0
  %1453 = vmatpush1.msra.mxu0 0.0
  %1454 = vmatprep.subr.mxu0 0.0
  %1455 = vmatpush1.msra.mxu0 0.0
  %1456 = vmatprep.subr.mxu0 0.0
  %1457 = vmatpush1.msra.mxu0 0.0
  %1458 = vmatprep.subr.mxu0 0.0
  %1459 = vmatpush1.msra.mxu0 0.0
  %1460 = vmatprep.subr.mxu0 0.0
  %1461 = vmatpush1.msra.mxu0 0.0
  %1462 = vmatprep.subr.mxu0 0.0
  %1463 = vmatpush1.msra.mxu0 0.0
  %1464 = vmatprep.subr.mxu0 0.0
  %1465 = vmatpush1.msra.mxu0 0.0
  %1466 = vmatprep.subr.mxu0 0.0
  %1467 = vmatpush1.msra.mxu0 0.0
  %1468 = vmatprep.subr.mxu0 0.0
  %1469 = vmatpush1.msra.mxu0 0.0
  %1470 = vmatprep.subr.mxu0 0.0
  %1471 = vmatpush1.msra.mxu0 0.0
  %1472 = vmatprep.subr.mxu0 0.0
  %1473 = vmatpush1.msra.mxu0 0.0
  %1474 = vmatprep.subr.mxu0 0.0
  %1475 = vmatpush1.msra.mxu0 0.0
  %1476 = vmatprep.subr.mxu0 0.0
  %1477 = vmatpush1.msra.mxu0 0.0
  %1478 = vmatprep.subr.mxu0 0.0
  %1479 = vmatpush1.msra.mxu0 %v888
  %1480 = vmatprep.subr.mxu0 0.0
  %1481 = vmatpush2.msra.mxu0 0.0
  %1482 = vmatprep.subr.mxu0 0.0
  %1483 = vmatpush2.msra.mxu0 0.0
  %1484 = vmatprep.subr.mxu0 0.0
  %1485 = vmatpush2.msra.mxu0 0.0
  %1486 = vmatprep.subr.mxu0 0.0
  %1487 = vmatpush2.msra.mxu0 0.0
  %1488 = vmatprep.subr.mxu0 0.0
  %1489 = vmatpush2.msra.mxu0 0.0
  %1490 = vmatprep.subr.mxu0 0.0
  %1491 = vmatpush2.msra.mxu0 0.0
  %1492 = vmatprep.subr.mxu0 0.0
  %1493 = vmatpush2.msra.mxu0 0.0
  %1494 = vmatprep.subr.mxu0 0.0
  %1495 = vmatpush2.msra.mxu0 0.0
  %1496 = vmatprep.subr.mxu0 0.0
  %1497 = vmatpush2.msra.mxu0 0.0
  %1498 = vmatprep.subr.mxu0 0.0
  %1499 = vmatpush2.msra.mxu0 0.0
  %1500 = vmatprep.subr.mxu0 0.0
  %1501 = vmatpush2.msra.mxu0 0.0
  %1502 = vmatprep.subr.mxu0 0.0
  %1503 = vmatpush2.msra.mxu0 0.0
  %1504 = vmatprep.subr.mxu0 0.0
  %1505 = vmatpush2.msra.mxu0 0.0
  %1506 = vmatprep.subr.mxu0 0.0
  %1507 = vmatpush2.msra.mxu0 0.0
  %1508 = vmatprep.subr.mxu0 0.0
  %1509 = vmatpush2.msra.mxu0 0.0
  %1510 = vmatprep.subr.mxu0 0.0
  %1511 = vmatpush2.msra.mxu0 0.0
  %1512 = vmatprep.mubr.f32.mxu0 0.0
  %1513 = vmatmul.mubr.f32.gmra.mxu0 %v1446
  %v1514 = vpop.f32.mrf.mxu0
  %v1515 = vadd.f32 0.0, %v1514
  %v1516 = vpop.f32.mrf.mxu0
  %1517 = vdwg.mxu0
  %1518 = vmatprep.subr.mxu0 0.0
  %1519 = vmatpush1.xpose.msra.mxu0 0.0
  %1520 = vmatprep.subr.mxu0 0.0
  %1521 = vmatpush1.xpose.msra.mxu0 0.0
  %1522 = vmatprep.subr.mxu0 0.0
  %1523 = vmatpush1.xpose.msra.mxu0 0.0
  %1524 = vmatprep.subr.mxu0 0.0
  %1525 = vmatpush1.xpose.msra.mxu0 0.0
  %1526 = vmatprep.subr.mxu0 0.0
  %1527 = vmatpush1.xpose.msra.mxu0 0.0
  %1528 = vmatprep.subr.mxu0 0.0
  %1529 = vmatpush1.xpose.msra.mxu0 0.0
  %1530 = vmatprep.subr.mxu0 0.0
  %1531 = vmatpush1.xpose.msra.mxu0 0.0
  %1532 = vmatprep.subr.mxu0 0.0
  %1533 = vmatpush1.xpose.msra.mxu0 0.0
  %1534 = vmatprep.subr.mxu0 0.0
  %1535 = vmatpush1.xpose.msra.mxu0 0.0
  %1536 = vmatprep.subr.mxu0 0.0
  %1537 = vmatpush1.xpose.msra.mxu0 0.0
  %1538 = vmatprep.subr.mxu0 0.0
  %1539 = vmatpush1.xpose.msra.mxu0 0.0
  %1540 = vmatprep.subr.mxu0 0.0
  %1541 = vmatpush1.xpose.msra.mxu0 0.0
  %1542 = vmatprep.subr.mxu0 0.0
  %1543 = vmatpush1.xpose.msra.mxu0 0.0
  %1544 = vmatprep.subr.mxu0 0.0
  %1545 = vmatpush1.xpose.msra.mxu0 0.0
  %1546 = vmatprep.subr.mxu0 0.0
  %1547 = vmatpush1.xpose.msra.mxu0 0.0
  %1548 = vmatprep.subr.mxu0 0.0
  %1549 = vmatpush1.xpose.msra.mxu0 %v582
  %1550 = vmatprep.subr.mxu0 0.0
  %1551 = vmatpush2.xpose.msra.mxu0 0.0
  %1552 = vmatprep.subr.mxu0 0.0
  %1553 = vmatpush2.xpose.msra.mxu0 0.0
  %1554 = vmatprep.subr.mxu0 0.0
  %1555 = vmatpush2.xpose.msra.mxu0 0.0
  %1556 = vmatprep.subr.mxu0 0.0
  %1557 = vmatpush2.xpose.msra.mxu0 0.0
  %1558 = vmatprep.subr.mxu0 0.0
  %1559 = vmatpush2.xpose.msra.mxu0 0.0
  %1560 = vmatprep.subr.mxu0 0.0
  %1561 = vmatpush2.xpose.msra.mxu0 0.0
  %1562 = vmatprep.subr.mxu0 0.0
  %1563 = vmatpush2.xpose.msra.mxu0 0.0
  %1564 = vmatprep.subr.mxu0 0.0
  %1565 = vmatpush2.xpose.msra.mxu0 0.0
  %1566 = vmatprep.subr.mxu0 0.0
  %1567 = vmatpush2.xpose.msra.mxu0 0.0
  %1568 = vmatprep.subr.mxu0 0.0
  %1569 = vmatpush2.xpose.msra.mxu0 0.0
  %1570 = vmatprep.subr.mxu0 0.0
  %1571 = vmatpush2.xpose.msra.mxu0 0.0
  %1572 = vmatprep.subr.mxu0 0.0
  %1573 = vmatpush2.xpose.msra.mxu0 0.0
  %1574 = vmatprep.subr.mxu0 0.0
  %1575 = vmatpush2.xpose.msra.mxu0 0.0
  %1576 = vmatprep.subr.mxu0 0.0
  %1577 = vmatpush2.xpose.msra.mxu0 0.0
  %1578 = vmatprep.subr.mxu0 0.0
  %1579 = vmatpush2.xpose.msra.mxu0 0.0
  %1580 = vmatprep.subr.mxu0 0.0
  %1581 = vmatpush2.xpose.msra.mxu0 0.0
  %1582 = vmatprep.mubr.f32.mxu0 0.0
  %1583 = vmatmul.mubr.f32.gmra.mxu0 %v274
  %v1584 = vpop.f32.mrf.mxu0
  %v1585 = vadd.f32 0.0, %v1584
  %v1586 = vpop.f32.mrf.mxu0
  %1587 = vdwg.mxu0
  %v1588 = vmul.f32 %v1585, 0.088388346
  %v1589 = vsel %vm1123, %v1588, -inf
  %1590 = vmax.xlane.f32.xlu0 %v1589
  %v1591 = vpop.xlane.xlu0 %1590
  %v1592 = vsub.f32 %v1588, %v1591
  %v1593 = vmul.f32 %v1592, 1.442695
  %v1594 = vpow.pop %v1593
  %v1595 = vsel %vm1123, %v1594, 0.0
  %1596 = vadd.xlane.f32.xlu0 %v1595
  %v1597 = vpop.xlane.xlu0 %1596
  %v1598 = vrcp.pop %v1597
  %v1599 = vmul.f32 %v1594, %v1598
  %v1601 = vsel %vm1123, %v1599, 0
  %1603 = vmatprep.subr.mxu0 0.0
  %1604 = vmatpush1.msra.mxu0 0.0
  %1605 = vmatprep.subr.mxu0 0.0
  %1606 = vmatpush1.msra.mxu0 0.0
  %1607 = vmatprep.subr.mxu0 0.0
  %1608 = vmatpush1.msra.mxu0 0.0
  %1609 = vmatprep.subr.mxu0 0.0
  %1610 = vmatpush1.msra.mxu0 0.0
  %1611 = vmatprep.subr.mxu0 0.0
  %1612 = vmatpush1.msra.mxu0 0.0
  %1613 = vmatprep.subr.mxu0 0.0
  %1614 = vmatpush1.msra.mxu0 0.0
  %1615 = vmatprep.subr.mxu0 0.0
  %1616 = vmatpush1.msra.mxu0 0.0
  %1617 = vmatprep.subr.mxu0 0.0
  %1618 = vmatpush1.msra.mxu0 0.0
  %1619 = vmatprep.subr.mxu0 0.0
  %1620 = vmatpush1.msra.mxu0 0.0
  %1621 = vmatprep.subr.mxu0 0.0
  %1622 = vmatpush1.msra.mxu0 0.0
  %1623 = vmatprep.subr.mxu0 0.0
  %1624 = vmatpush1.msra.mxu0 0.0
  %1625 = vmatprep.subr.mxu0 0.0
  %1626 = vmatpush1.msra.mxu0 0.0
  %1627 = vmatprep.subr.mxu0 0.0
  %1628 = vmatpush1.msra.mxu0 0.0
  %1629 = vmatprep.subr.mxu0 0.0
  %1630 = vmatpush1.msra.mxu0 0.0
  %1631 = vmatprep.subr.mxu0 0.0
  %1632 = vmatpush1.msra.mxu0 0.0
  %1633 = vmatprep.subr.mxu0 0.0
  %1634 = vmatpush1.msra.mxu0 %v890
  %1635 = vmatprep.subr.mxu0 0.0
  %1636 = vmatpush2.msra.mxu0 0.0
  %1637 = vmatprep.subr.mxu0 0.0
  %1638 = vmatpush2.msra.mxu0 0.0
  %1639 = vmatprep.subr.mxu0 0.0
  %1640 = vmatpush2.msra.mxu0 0.0
  %1641 = vmatprep.subr.mxu0 0.0
  %1642 = vmatpush2.msra.mxu0 0.0
  %1643 = vmatprep.subr.mxu0 0.0
  %1644 = vmatpush2.msra.mxu0 0.0
  %1645 = vmatprep.subr.mxu0 0.0
  %1646 = vmatpush2.msra.mxu0 0.0
  %1647 = vmatprep.subr.mxu0 0.0
  %1648 = vmatpush2.msra.mxu0 0.0
  %1649 = vmatprep.subr.mxu0 0.0
  %1650 = vmatpush2.msra.mxu0 0.0
  %1651 = vmatprep.subr.mxu0 0.0
  %1652 = vmatpush2.msra.mxu0 0.0
  %1653 = vmatprep.subr.mxu0 0.0
  %1654 = vmatpush2.msra.mxu0 0.0
  %1655 = vmatprep.subr.mxu0 0.0
  %1656 = vmatpush2.msra.mxu0 0.0
  %1657 = vmatprep.subr.mxu0 0.0
  %1658 = vmatpush2.msra.mxu0 0.0
  %1659 = vmatprep.subr.mxu0 0.0
  %1660 = vmatpush2.msra.mxu0 0.0
  %1661 = vmatprep.subr.mxu0 0.0
  %1662 = vmatpush2.msra.mxu0 0.0
  %1663 = vmatprep.subr.mxu0 0.0
  %1664 = vmatpush2.msra.mxu0 0.0
  %1665 = vmatprep.subr.mxu0 0.0
  %1666 = vmatpush2.msra.mxu0 0.0
  %1667 = vmatprep.mubr.f32.mxu0 0.0
  %1668 = vmatmul.mubr.f32.gmra.mxu0 %v1601
  %v1669 = vpop.f32.mrf.mxu0
  %v1670 = vadd.f32 0.0, %v1669
  %v1671 = vpop.f32.mrf.mxu0
  %1672 = vdwg.mxu0
  %1673 = vmatprep.subr.mxu0 0.0
  %1674 = vmatpush1.xpose.msra.mxu0 0.0
  %1675 = vmatprep.subr.mxu0 0.0
  %1676 = vmatpush1.xpose.msra.mxu0 0.0
  %1677 = vmatprep.subr.mxu0 0.0
  %1678 = vmatpush1.xpose.msra.mxu0 0.0
  %1679 = vmatprep.subr.mxu0 0.0
  %1680 = vmatpush1.xpose.msra.mxu0 0.0
  %1681 = vmatprep.subr.mxu0 0.0
  %1682 = vmatpush1.xpose.msra.mxu0 0.0
  %1683 = vmatprep.subr.mxu0 0.0
  %1684 = vmatpush1.xpose.msra.mxu0 0.0
  %1685 = vmatprep.subr.mxu0 0.0
  %1686 = vmatpush1.xpose.msra.mxu0 0.0
  %1687 = vmatprep.subr.mxu0 0.0
  %1688 = vmatpush1.xpose.msra.mxu0 0.0
  %1689 = vmatprep.subr.mxu0 0.0
  %1690 = vmatpush1.xpose.msra.mxu0 0.0
  %1691 = vmatprep.subr.mxu0 0.0
  %1692 = vmatpush1.xpose.msra.mxu0 0.0
  %1693 = vmatprep.subr.mxu0 0.0
  %1694 = vmatpush1.xpose.msra.mxu0 0.0
  %1695 = vmatprep.subr.mxu0 0.0
  %1696 = vmatpush1.xpose.msra.mxu0 0.0
  %1697 = vmatprep.subr.mxu0 0.0
  %1698 = vmatpush1.xpose.msra.mxu0 0.0
  %1699 = vmatprep.subr.mxu0 0.0
  %1700 = vmatpush1.xpose.msra.mxu0 0.0
  %1701 = vmatprep.subr.mxu0 0.0
  %1702 = vmatpush1.xpose.msra.mxu0 0.0
  %1703 = vmatprep.subr.mxu0 0.0
  %1704 = vmatpush1.xpose.msra.mxu0 %v657
  %1705 = vmatprep.subr.mxu0 0.0
  %1706 = vmatpush2.xpose.msra.mxu0 0.0
  %1707 = vmatprep.subr.mxu0 0.0
  %1708 = vmatpush2.xpose.msra.mxu0 0.0
  %1709 = vmatprep.subr.mxu0 0.0
  %1710 = vmatpush2.xpose.msra.mxu0 0.0
  %1711 = vmatprep.subr.mxu0 0.0
  %1712 = vmatpush2.xpose.msra.mxu0 0.0
  %1713 = vmatprep.subr.mxu0 0.0
  %1714 = vmatpush2.xpose.msra.mxu0 0.0
  %1715 = vmatprep.subr.mxu0 0.0
  %1716 = vmatpush2.xpose.msra.mxu0 0.0
  %1717 = vmatprep.subr.mxu0 0.0
  %1718 = vmatpush2.xpose.msra.mxu0 0.0
  %1719 = vmatprep.subr.mxu0 0.0
  %1720 = vmatpush2.xpose.msra.mxu0 0.0
  %1721 = vmatprep.subr.mxu0 0.0
  %1722 = vmatpush2.xpose.msra.mxu0 0.0
  %1723 = vmatprep.subr.mxu0 0.0
  %1724 = vmatpush2.xpose.msra.mxu0 0.0
  %1725 = vmatprep.subr.mxu0 0.0
  %1726 = vmatpush2.xpose.msra.mxu0 0.0
  %1727 = vmatprep.subr.mxu0 0.0
  %1728 = vmatpush2.xpose.msra.mxu0 0.0
  %1729 = vmatprep.subr.mxu0 0.0
  %1730 = vmatpush2.xpose.msra.mxu0 0.0
  %1731 = vmatprep.subr.mxu0 0.0
  %1732 = vmatpush2.xpose.msra.mxu0 0.0
  %1733 = vmatprep.subr.mxu0 0.0
  %1734 = vmatpush2.xpose.msra.mxu0 0.0
  %1735 = vmatprep.subr.mxu0 0.0
  %1736 = vmatpush2.xpose.msra.mxu0 0.0
  %1737 = vmatprep.mubr.f32.mxu0 0.0
  %1738 = vmatmul.mubr.f32.gmra.mxu0 %v349
  %v1739 = vpop.f32.mrf.mxu0
  %v1740 = vadd.f32 0.0, %v1739
  %v1741 = vpop.f32.mrf.mxu0
  %1742 = vdwg.mxu0
  %v1743 = vmul.f32 %v1740, 0.088388346
  %v1744 = vsel %vm1123, %v1743, -inf
  %1745 = vmax.xlane.f32.xlu0 %v1744
  %v1746 = vpop.xlane.xlu0 %1745
  %v1747 = vsub.f32 %v1743, %v1746
  %v1748 = vmul.f32 %v1747, 1.442695
  %v1749 = vpow.pop %v1748
  %v1750 = vsel %vm1123, %v1749, 0.0
  %1751 = vadd.xlane.f32.xlu0 %v1750
  %v1752 = vpop.xlane.xlu0 %1751
  %v1753 = vrcp.pop %v1752
  %v1754 = vmul.f32 %v1749, %v1753
  %v1756 = vsel %vm1123, %v1754, 0
  %1758 = vmatprep.subr.mxu0 0.0
  %1759 = vmatpush1.msra.mxu0 0.0
  %1760 = vmatprep.subr.mxu0 0.0
  %1761 = vmatpush1.msra.mxu0 0.0
  %1762 = vmatprep.subr.mxu0 0.0
  %1763 = vmatpush1.msra.mxu0 0.0
  %1764 = vmatprep.subr.mxu0 0.0
  %1765 = vmatpush1.msra.mxu0 0.0
  %1766 = vmatprep.subr.mxu0 0.0
  %1767 = vmatpush1.msra.mxu0 0.0
  %1768 = vmatprep.subr.mxu0 0.0
  %1769 = vmatpush1.msra.mxu0 0.0
  %1770 = vmatprep.subr.mxu0 0.0
  %1771 = vmatpush1.msra.mxu0 0.0
  %1772 = vmatprep.subr.mxu0 0.0
  %1773 = vmatpush1.msra.mxu0 0.0
  %1774 = vmatprep.subr.mxu0 0.0
  %1775 = vmatpush1.msra.mxu0 0.0
  %1776 = vmatprep.subr.mxu0 0.0
  %1777 = vmatpush1.msra.mxu0 0.0
  %1778 = vmatprep.subr.mxu0 0.0
  %1779 = vmatpush1.msra.mxu0 0.0
  %1780 = vmatprep.subr.mxu0 0.0
  %1781 = vmatpush1.msra.mxu0 0.0
  %1782 = vmatprep.subr.mxu0 0.0
  %1783 = vmatpush1.msra.mxu0 0.0
  %1784 = vmatprep.subr.mxu0 0.0
  %1785 = vmatpush1.msra.mxu0 0.0
  %1786 = vmatprep.subr.mxu0 0.0
  %1787 = vmatpush1.msra.mxu0 0.0
  %1788 = vmatprep.subr.mxu0 0.0
  %1789 = vmatpush1.msra.mxu0 %v965
  %1790 = vmatprep.subr.mxu0 0.0
  %1791 = vmatpush2.msra.mxu0 0.0
  %1792 = vmatprep.subr.mxu0 0.0
  %1793 = vmatpush2.msra.mxu0 0.0
  %1794 = vmatprep.subr.mxu0 0.0
  %1795 = vmatpush2.msra.mxu0 0.0
  %1796 = vmatprep.subr.mxu0 0.0
  %1797 = vmatpush2.msra.mxu0 0.0
  %1798 = vmatprep.subr.mxu0 0.0
  %1799 = vmatpush2.msra.mxu0 0.0
  %1800 = vmatprep.subr.mxu0 0.0
  %1801 = vmatpush2.msra.mxu0 0.0
  %1802 = vmatprep.subr.mxu0 0.0
  %1803 = vmatpush2.msra.mxu0 0.0
  %1804 = vmatprep.subr.mxu0 0.0
  %1805 = vmatpush2.msra.mxu0 0.0
  %1806 = vmatprep.subr.mxu0 0.0
  %1807 = vmatpush2.msra.mxu0 0.0
  %1808 = vmatprep.subr.mxu0 0.0
  %1809 = vmatpush2.msra.mxu0 0.0
  %1810 = vmatprep.subr.mxu0 0.0
  %1811 = vmatpush2.msra.mxu0 0.0
  %1812 = vmatprep.subr.mxu0 0.0
  %1813 = vmatpush2.msra.mxu0 0.0
  %1814 = vmatprep.subr.mxu0 0.0
  %1815 = vmatpush2.msra.mxu0 0.0
  %1816 = vmatprep.subr.mxu0 0.0
  %1817 = vmatpush2.msra.mxu0 0.0
  %1818 = vmatprep.subr.mxu0 0.0
  %1819 = vmatpush2.msra.mxu0 0.0
  %1820 = vmatprep.subr.mxu0 0.0
  %1821 = vmatpush2.msra.mxu0 0.0
  %1822 = vmatprep.mubr.f32.mxu0 0.0
  %1823 = vmatmul.mubr.f32.gmra.mxu0 %v1756
  %v1824 = vpop.f32.mrf.mxu0
  %v1825 = vadd.f32 0.0, %v1824
  %v1826 = vpop.f32.mrf.mxu0
  %1827 = vdwg.mxu0
  %1828 = vmatprep.subr.mxu0 0.0
  %1829 = vmatpush1.xpose.msra.mxu0 0.0
  %1830 = vmatprep.subr.mxu0 0.0
  %1831 = vmatpush1.xpose.msra.mxu0 0.0
  %1832 = vmatprep.subr.mxu0 0.0
  %1833 = vmatpush1.xpose.msra.mxu0 0.0
  %1834 = vmatprep.subr.mxu0 0.0
  %1835 = vmatpush1.xpose.msra.mxu0 0.0
  %1836 = vmatprep.subr.mxu0 0.0
  %1837 = vmatpush1.xpose.msra.mxu0 0.0
  %1838 = vmatprep.subr.mxu0 0.0
  %1839 = vmatpush1.xpose.msra.mxu0 0.0
  %1840 = vmatprep.subr.mxu0 0.0
  %1841 = vmatpush1.xpose.msra.mxu0 0.0
  %1842 = vmatprep.subr.mxu0 0.0
  %1843 = vmatpush1.xpose.msra.mxu0 0.0
  %1844 = vmatprep.subr.mxu0 0.0
  %1845 = vmatpush1.xpose.msra.mxu0 0.0
  %1846 = vmatprep.subr.mxu0 0.0
  %1847 = vmatpush1.xpose.msra.mxu0 0.0
  %1848 = vmatprep.subr.mxu0 0.0
  %1849 = vmatpush1.xpose.msra.mxu0 0.0
  %1850 = vmatprep.subr.mxu0 0.0
  %1851 = vmatpush1.xpose.msra.mxu0 0.0
  %1852 = vmatprep.subr.mxu0 0.0
  %1853 = vmatpush1.xpose.msra.mxu0 0.0
  %1854 = vmatprep.subr.mxu0 0.0
  %1855 = vmatpush1.xpose.msra.mxu0 0.0
  %1856 = vmatprep.subr.mxu0 0.0
  %1857 = vmatpush1.xpose.msra.mxu0 0.0
  %1858 = vmatprep.subr.mxu0 0.0
  %1859 = vmatpush1.xpose.msra.mxu0 %v659
  %1860 = vmatprep.subr.mxu0 0.0
  %1861 = vmatpush2.xpose.msra.mxu0 0.0
  %1862 = vmatprep.subr.mxu0 0.0
  %1863 = vmatpush2.xpose.msra.mxu0 0.0
  %1864 = vmatprep.subr.mxu0 0.0
  %1865 = vmatpush2.xpose.msra.mxu0 0.0
  %1866 = vmatprep.subr.mxu0 0.0
  %1867 = vmatpush2.xpose.msra.mxu0 0.0
  %1868 = vmatprep.subr.mxu0 0.0
  %1869 = vmatpush2.xpose.msra.mxu0 0.0
  %1870 = vmatprep.subr.mxu0 0.0
  %1871 = vmatpush2.xpose.msra.mxu0 0.0
  %1872 = vmatprep.subr.mxu0 0.0
  %1873 = vmatpush2.xpose.msra.mxu0 0.0
  %1874 = vmatprep.subr.mxu0 0.0
  %1875 = vmatpush2.xpose.msra.mxu0 0.0
  %1876 = vmatprep.subr.mxu0 0.0
  %1877 = vmatpush2.xpose.msra.mxu0 0.0
  %1878 = vmatprep.subr.mxu0 0.0
  %1879 = vmatpush2.xpose.msra.mxu0 0.0
  %1880 = vmatprep.subr.mxu0 0.0
  %1881 = vmatpush2.xpose.msra.mxu0 0.0
  %1882 = vmatprep.subr.mxu0 0.0
  %1883 = vmatpush2.xpose.msra.mxu0 0.0
  %1884 = vmatprep.subr.mxu0 0.0
  %1885 = vmatpush2.xpose.msra.mxu0 0.0
  %1886 = vmatprep.subr.mxu0 0.0
  %1887 = vmatpush2.xpose.msra.mxu0 0.0
  %1888 = vmatprep.subr.mxu0 0.0
  %1889 = vmatpush2.xpose.msra.mxu0 0.0
  %1890 = vmatprep.subr.mxu0 0.0
  %1891 = vmatpush2.xpose.msra.mxu0 0.0
  %1892 = vmatprep.mubr.f32.mxu0 0.0
  %1893 = vmatmul.mubr.f32.gmra.mxu0 %v351
  %v1894 = vpop.f32.mrf.mxu0
  %v1895 = vadd.f32 0.0, %v1894
  %v1896 = vpop.f32.mrf.mxu0
  %1897 = vdwg.mxu0
  %v1898 = vmul.f32 %v1895, 0.088388346
  %v1899 = vsel %vm1123, %v1898, -inf
  %1900 = vmax.xlane.f32.xlu0 %v1899
  %v1901 = vpop.xlane.xlu0 %1900
  %v1902 = vsub.f32 %v1898, %v1901
  %v1903 = vmul.f32 %v1902, 1.442695
  %v1904 = vpow.pop %v1903
  %v1905 = vsel %vm1123, %v1904, 0.0
  %1906 = vadd.xlane.f32.xlu0 %v1905
  %v1907 = vpop.xlane.xlu0 %1906
  %v1908 = vrcp.pop %v1907
  %v1909 = vmul.f32 %v1904, %v1908
  %v1911 = vsel %vm1123, %v1909, 0
  %1913 = vmatprep.subr.mxu0 0.0
  %1914 = vmatpush1.msra.mxu0 0.0
  %1915 = vmatprep.subr.mxu0 0.0
  %1916 = vmatpush1.msra.mxu0 0.0
  %1917 = vmatprep.subr.mxu0 0.0
  %1918 = vmatpush1.msra.mxu0 0.0
  %1919 = vmatprep.subr.mxu0 0.0
  %1920 = vmatpush1.msra.mxu0 0.0
  %1921 = vmatprep.subr.mxu0 0.0
  %1922 = vmatpush1.msra.mxu0 0.0
  %1923 = vmatprep.subr.mxu0 0.0
  %1924 = vmatpush1.msra.mxu0 0.0
  %1925 = vmatprep.subr.mxu0 0.0
  %1926 = vmatpush1.msra.mxu0 0.0
  %1927 = vmatprep.subr.mxu0 0.0
  %1928 = vmatpush1.msra.mxu0 0.0
  %1929 = vmatprep.subr.mxu0 0.0
  %1930 = vmatpush1.msra.mxu0 0.0
  %1931 = vmatprep.subr.mxu0 0.0
  %1932 = vmatpush1.msra.mxu0 0.0
  %1933 = vmatprep.subr.mxu0 0.0
  %1934 = vmatpush1.msra.mxu0 0.0
  %1935 = vmatprep.subr.mxu0 0.0
  %1936 = vmatpush1.msra.mxu0 0.0
  %1937 = vmatprep.subr.mxu0 0.0
  %1938 = vmatpush1.msra.mxu0 0.0
  %1939 = vmatprep.subr.mxu0 0.0
  %1940 = vmatpush1.msra.mxu0 0.0
  %1941 = vmatprep.subr.mxu0 0.0
  %1942 = vmatpush1.msra.mxu0 0.0
  %1943 = vmatprep.subr.mxu0 0.0
  %1944 = vmatpush1.msra.mxu0 %v967
  %1945 = vmatprep.subr.mxu0 0.0
  %1946 = vmatpush2.msra.mxu0 0.0
  %1947 = vmatprep.subr.mxu0 0.0
  %1948 = vmatpush2.msra.mxu0 0.0
  %1949 = vmatprep.subr.mxu0 0.0
  %1950 = vmatpush2.msra.mxu0 0.0
  %1951 = vmatprep.subr.mxu0 0.0
  %1952 = vmatpush2.msra.mxu0 0.0
  %1953 = vmatprep.subr.mxu0 0.0
  %1954 = vmatpush2.msra.mxu0 0.0
  %1955 = vmatprep.subr.mxu0 0.0
  %1956 = vmatpush2.msra.mxu0 0.0
  %1957 = vmatprep.subr.mxu0 0.0
  %1958 = vmatpush2.msra.mxu0 0.0
  %1959 = vmatprep.subr.mxu0 0.0
  %1960 = vmatpush2.msra.mxu0 0.0
  %1961 = vmatprep.subr.mxu0 0.0
  %1962 = vmatpush2.msra.mxu0 0.0
  %1963 = vmatprep.subr.mxu0 0.0
  %1964 = vmatpush2.msra.mxu0 0.0
  %1965 = vmatprep.subr.mxu0 0.0
  %1966 = vmatpush2.msra.mxu0 0.0
  %1967 = vmatprep.subr.mxu0 0.0
  %1968 = vmatpush2.msra.mxu0 0.0
  %1969 = vmatprep.subr.mxu0 0.0
  %1970 = vmatpush2.msra.mxu0 0.0
  %1971 = vmatprep.subr.mxu0 0.0
  %1972 = vmatpush2.msra.mxu0 0.0
  %1973 = vmatprep.subr.mxu0 0.0
  %1974 = vmatpush2.msra.mxu0 0.0
  %1975 = vmatprep.subr.mxu0 0.0
  %1976 = vmatpush2.msra.mxu0 0.0
  %1977 = vmatprep.mubr.f32.mxu0 0.0
  %1978 = vmatmul.mubr.f32.gmra.mxu0 %v1911
  %v1979 = vpop.f32.mrf.mxu0
  %v1980 = vadd.f32 0.0, %v1979
  %v1981 = vpop.f32.mrf.mxu0
  %1982 = vdwg.mxu0
  %1983 = vmatprep.subr.mxu0 0.0
  %1984 = vmatpush1.xpose.msra.mxu0 0.0
  %1985 = vmatprep.subr.mxu0 0.0
  %1986 = vmatpush1.xpose.msra.mxu0 0.0
  %1987 = vmatprep.subr.mxu0 0.0
  %1988 = vmatpush1.xpose.msra.mxu0 0.0
  %1989 = vmatprep.subr.mxu0 0.0
  %1990 = vmatpush1.xpose.msra.mxu0 0.0
  %1991 = vmatprep.subr.mxu0 0.0
  %1992 = vmatpush1.xpose.msra.mxu0 0.0
  %1993 = vmatprep.subr.mxu0 0.0
  %1994 = vmatpush1.xpose.msra.mxu0 0.0
  %1995 = vmatprep.subr.mxu0 0.0
  %1996 = vmatpush1.xpose.msra.mxu0 0.0
  %1997 = vmatprep.subr.mxu0 0.0
  %1998 = vmatpush1.xpose.msra.mxu0 0.0
  %1999 = vmatprep.subr.mxu0 0.0
  %2000 = vmatpush1.xpose.msra.mxu0 0.0
  %2001 = vmatprep.subr.mxu0 0.0
  %2002 = vmatpush1.xpose.msra.mxu0 0.0
  %2003 = vmatprep.subr.mxu0 0.0
  %2004 = vmatpush1.xpose.msra.mxu0 0.0
  %2005 = vmatprep.subr.mxu0 0.0
  %2006 = vmatpush1.xpose.msra.mxu0 0.0
  %2007 = vmatprep.subr.mxu0 0.0
  %2008 = vmatpush1.xpose.msra.mxu0 0.0
  %2009 = vmatprep.subr.mxu0 0.0
  %2010 = vmatpush1.xpose.msra.mxu0 0.0
  %2011 = vmatprep.subr.mxu0 0.0
  %2012 = vmatpush1.xpose.msra.mxu0 0.0
  %2013 = vmatprep.subr.mxu0 0.0
  %2014 = vmatpush1.xpose.msra.mxu0 %v734
  %2015 = vmatprep.subr.mxu0 0.0
  %2016 = vmatpush2.xpose.msra.mxu0 0.0
  %2017 = vmatprep.subr.mxu0 0.0
  %2018 = vmatpush2.xpose.msra.mxu0 0.0
  %2019 = vmatprep.subr.mxu0 0.0
  %2020 = vmatpush2.xpose.msra.mxu0 0.0
  %2021 = vmatprep.subr.mxu0 0.0
  %2022 = vmatpush2.xpose.msra.mxu0 0.0
  %2023 = vmatprep.subr.mxu0 0.0
  %2024 = vmatpush2.xpose.msra.mxu0 0.0
  %2025 = vmatprep.subr.mxu0 0.0
  %2026 = vmatpush2.xpose.msra.mxu0 0.0
  %2027 = vmatprep.subr.mxu0 0.0
  %2028 = vmatpush2.xpose.msra.mxu0 0.0
  %2029 = vmatprep.subr.mxu0 0.0
  %2030 = vmatpush2.xpose.msra.mxu0 0.0
  %2031 = vmatprep.subr.mxu0 0.0
  %2032 = vmatpush2.xpose.msra.mxu0 0.0
  %2033 = vmatprep.subr.mxu0 0.0
  %2034 = vmatpush2.xpose.msra.mxu0 0.0
  %2035 = vmatprep.subr.mxu0 0.0
  %2036 = vmatpush2.xpose.msra.mxu0 0.0
  %2037 = vmatprep.subr.mxu0 0.0
  %2038 = vmatpush2.xpose.msra.mxu0 0.0
  %2039 = vmatprep.subr.mxu0 0.0
  %2040 = vmatpush2.xpose.msra.mxu0 0.0
  %2041 = vmatprep.subr.mxu0 0.0
  %2042 = vmatpush2.xpose.msra.mxu0 0.0
  %2043 = vmatprep.subr.mxu0 0.0
  %2044 = vmatpush2.xpose.msra.mxu0 0.0
  %2045 = vmatprep.subr.mxu0 0.0
  %2046 = vmatpush2.xpose.msra.mxu0 0.0
  %2047 = vmatprep.mubr.f32.mxu0 0.0
  %2048 = vmatmul.mubr.f32.gmra.mxu0 %v426
  %v2049 = vpop.f32.mrf.mxu0
  %v2050 = vadd.f32 0.0, %v2049
  %v2051 = vpop.f32.mrf.mxu0
  %2052 = vdwg.mxu0
  %v2053 = vmul.f32 %v2050, 0.088388346
  %v2054 = vsel %vm1123, %v2053, -inf
  %2055 = vmax.xlane.f32.xlu0 %v2054
  %v2056 = vpop.xlane.xlu0 %2055
  %v2057 = vsub.f32 %v2053, %v2056
  %v2058 = vmul.f32 %v2057, 1.442695
  %v2059 = vpow.pop %v2058
  %v2060 = vsel %vm1123, %v2059, 0.0
  %2061 = vadd.xlane.f32.xlu0 %v2060
  %v2062 = vpop.xlane.xlu0 %2061
  %v2063 = vrcp.pop %v2062
  %v2064 = vmul.f32 %v2059, %v2063
  %v2066 = vsel %vm1123, %v2064, 0
  %2068 = vmatprep.subr.mxu0 0.0
  %2069 = vmatpush1.msra.mxu0 0.0
  %2070 = vmatprep.subr.mxu0 0.0
  %2071 = vmatpush1.msra.mxu0 0.0
  %2072 = vmatprep.subr.mxu0 0.0
  %2073 = vmatpush1.msra.mxu0 0.0
  %2074 = vmatprep.subr.mxu0 0.0
  %2075 = vmatpush1.msra.mxu0 0.0
  %2076 = vmatprep.subr.mxu0 0.0
  %2077 = vmatpush1.msra.mxu0 0.0
  %2078 = vmatprep.subr.mxu0 0.0
  %2079 = vmatpush1.msra.mxu0 0.0
  %2080 = vmatprep.subr.mxu0 0.0
  %2081 = vmatpush1.msra.mxu0 0.0
  %2082 = vmatprep.subr.mxu0 0.0
  %2083 = vmatpush1.msra.mxu0 0.0
  %2084 = vmatprep.subr.mxu0 0.0
  %2085 = vmatpush1.msra.mxu0 0.0
  %2086 = vmatprep.subr.mxu0 0.0
  %2087 = vmatpush1.msra.mxu0 0.0
  %2088 = vmatprep.subr.mxu0 0.0
  %2089 = vmatpush1.msra.mxu0 0.0
  %2090 = vmatprep.subr.mxu0 0.0
  %2091 = vmatpush1.msra.mxu0 0.0
  %2092 = vmatprep.subr.mxu0 0.0
  %2093 = vmatpush1.msra.mxu0 0.0
  %2094 = vmatprep.subr.mxu0 0.0
  %2095 = vmatpush1.msra.mxu0 0.0
  %2096 = vmatprep.subr.mxu0 0.0
  %2097 = vmatpush1.msra.mxu0 0.0
  %2098 = vmatprep.subr.mxu0 0.0
  %2099 = vmatpush1.msra.mxu0 %v1042
  %2100 = vmatprep.subr.mxu0 0.0
  %2101 = vmatpush2.msra.mxu0 0.0
  %2102 = vmatprep.subr.mxu0 0.0
  %2103 = vmatpush2.msra.mxu0 0.0
  %2104 = vmatprep.subr.mxu0 0.0
  %2105 = vmatpush2.msra.mxu0 0.0
  %2106 = vmatprep.subr.mxu0 0.0
  %2107 = vmatpush2.msra.mxu0 0.0
  %2108 = vmatprep.subr.mxu0 0.0
  %2109 = vmatpush2.msra.mxu0 0.0
  %2110 = vmatprep.subr.mxu0 0.0
  %2111 = vmatpush2.msra.mxu0 0.0
  %2112 = vmatprep.subr.mxu0 0.0
  %2113 = vmatpush2.msra.mxu0 0.0
  %2114 = vmatprep.subr.mxu0 0.0
  %2115 = vmatpush2.msra.mxu0 0.0
  %2116 = vmatprep.subr.mxu0 0.0
  %2117 = vmatpush2.msra.mxu0 0.0
  %2118 = vmatprep.subr.mxu0 0.0
  %2119 = vmatpush2.msra.mxu0 0.0
  %2120 = vmatprep.subr.mxu0 0.0
  %2121 = vmatpush2.msra.mxu0 0.0
  %2122 = vmatprep.subr.mxu0 0.0
  %2123 = vmatpush2.msra.mxu0 0.0
  %2124 = vmatprep.subr.mxu0 0.0
  %2125 = vmatpush2.msra.mxu0 0.0
  %2126 = vmatprep.subr.mxu0 0.0
  %2127 = vmatpush2.msra.mxu0 0.0
  %2128 = vmatprep.subr.mxu0 0.0
  %2129 = vmatpush2.msra.mxu0 0.0
  %2130 = vmatprep.subr.mxu0 0.0
  %2131 = vmatpush2.msra.mxu0 0.0
  %2132 = vmatprep.mubr.f32.mxu0 0.0
  %2133 = vmatmul.mubr.f32.gmra.mxu0 %v2066
  %v2134 = vpop.f32.mrf.mxu0
  %v2135 = vadd.f32 0.0, %v2134
  %v2136 = vpop.f32.mrf.mxu0
  %2137 = vdwg.mxu0
  %2138 = vmatprep.subr.mxu0 0.0
  %2139 = vmatpush1.xpose.msra.mxu0 0.0
  %2140 = vmatprep.subr.mxu0 0.0
  %2141 = vmatpush1.xpose.msra.mxu0 0.0
  %2142 = vmatprep.subr.mxu0 0.0
  %2143 = vmatpush1.xpose.msra.mxu0 0.0
  %2144 = vmatprep.subr.mxu0 0.0
  %2145 = vmatpush1.xpose.msra.mxu0 0.0
  %2146 = vmatprep.subr.mxu0 0.0
  %2147 = vmatpush1.xpose.msra.mxu0 0.0
  %2148 = vmatprep.subr.mxu0 0.0
  %2149 = vmatpush1.xpose.msra.mxu0 0.0
  %2150 = vmatprep.subr.mxu0 0.0
  %2151 = vmatpush1.xpose.msra.mxu0 0.0
  %2152 = vmatprep.subr.mxu0 0.0
  %2153 = vmatpush1.xpose.msra.mxu0 0.0
  %2154 = vmatprep.subr.mxu0 0.0
  %2155 = vmatpush1.xpose.msra.mxu0 0.0
  %2156 = vmatprep.subr.mxu0 0.0
  %2157 = vmatpush1.xpose.msra.mxu0 0.0
  %2158 = vmatprep.subr.mxu0 0.0
  %2159 = vmatpush1.xpose.msra.mxu0 0.0
  %2160 = vmatprep.subr.mxu0 0.0
  %2161 = vmatpush1.xpose.msra.mxu0 0.0
  %2162 = vmatprep.subr.mxu0 0.0
  %2163 = vmatpush1.xpose.msra.mxu0 0.0
  %2164 = vmatprep.subr.mxu0 0.0
  %2165 = vmatpush1.xpose.msra.mxu0 0.0
  %2166 = vmatprep.subr.mxu0 0.0
  %2167 = vmatpush1.xpose.msra.mxu0 0.0
  %2168 = vmatprep.subr.mxu0 0.0
  %2169 = vmatpush1.xpose.msra.mxu0 %v736
  %2170 = vmatprep.subr.mxu0 0.0
  %2171 = vmatpush2.xpose.msra.mxu0 0.0
  %2172 = vmatprep.subr.mxu0 0.0
  %2173 = vmatpush2.xpose.msra.mxu0 0.0
  %2174 = vmatprep.subr.mxu0 0.0
  %2175 = vmatpush2.xpose.msra.mxu0 0.0
  %2176 = vmatprep.subr.mxu0 0.0
  %2177 = vmatpush2.xpose.msra.mxu0 0.0
  %2178 = vmatprep.subr.mxu0 0.0
  %2179 = vmatpush2.xpose.msra.mxu0 0.0
  %2180 = vmatprep.subr.mxu0 0.0
  %2181 = vmatpush2.xpose.msra.mxu0 0.0
  %2182 = vmatprep.subr.mxu0 0.0
  %2183 = vmatpush2.xpose.msra.mxu0 0.0
  %2184 = vmatprep.subr.mxu0 0.0
  %2185 = vmatpush2.xpose.msra.mxu0 0.0
  %2186 = vmatprep.subr.mxu0 0.0
  %2187 = vmatpush2.xpose.msra.mxu0 0.0
  %2188 = vmatprep.subr.mxu0 0.0
  %2189 = vmatpush2.xpose.msra.mxu0 0.0
  %2190 = vmatprep.subr.mxu0 0.0
  %2191 = vmatpush2.xpose.msra.mxu0 0.0
  %2192 = vmatprep.subr.mxu0 0.0
  %2193 = vmatpush2.xpose.msra.mxu0 0.0
  %2194 = vmatprep.subr.mxu0 0.0
  %2195 = vmatpush2.xpose.msra.mxu0 0.0
  %2196 = vmatprep.subr.mxu0 0.0
  %2197 = vmatpush2.xpose.msra.mxu0 0.0
  %2198 = vmatprep.subr.mxu0 0.0
  %2199 = vmatpush2.xpose.msra.mxu0 0.0
  %2200 = vmatprep.subr.mxu0 0.0
  %2201 = vmatpush2.xpose.msra.mxu0 0.0
  %2202 = vmatprep.mubr.f32.mxu0 0.0
  %2203 = vmatmul.mubr.f32.gmra.mxu0 %v428
  %v2204 = vpop.f32.mrf.mxu0
  %v2205 = vadd.f32 0.0, %v2204
  %v2206 = vpop.f32.mrf.mxu0
  %2207 = vdwg.mxu0
  %v2208 = vmul.f32 %v2205, 0.088388346
  %v2209 = vsel %vm1123, %v2208, -inf
  %2210 = vmax.xlane.f32.xlu0 %v2209
  %v2211 = vpop.xlane.xlu0 %2210
  %v2212 = vsub.f32 %v2208, %v2211
  %v2213 = vmul.f32 %v2212, 1.442695
  %v2214 = vpow.pop %v2213
  %v2215 = vsel %vm1123, %v2214, 0.0
  %2216 = vadd.xlane.f32.xlu0 %v2215
  %v2217 = vpop.xlane.xlu0 %2216
  %v2218 = vrcp.pop %v2217
  %v2219 = vmul.f32 %v2214, %v2218
  %v2221 = vsel %vm1123, %v2219, 0
  %2223 = vmatprep.subr.mxu0 0.0
  %2224 = vmatpush1.msra.mxu0 0.0
  %2225 = vmatprep.subr.mxu0 0.0
  %2226 = vmatpush1.msra.mxu0 0.0
  %2227 = vmatprep.subr.mxu0 0.0
  %2228 = vmatpush1.msra.mxu0 0.0
  %2229 = vmatprep.subr.mxu0 0.0
  %2230 = vmatpush1.msra.mxu0 0.0
  %2231 = vmatprep.subr.mxu0 0.0
  %2232 = vmatpush1.msra.mxu0 0.0
  %2233 = vmatprep.subr.mxu0 0.0
  %2234 = vmatpush1.msra.mxu0 0.0
  %2235 = vmatprep.subr.mxu0 0.0
  %2236 = vmatpush1.msra.mxu0 0.0
  %2237 = vmatprep.subr.mxu0 0.0
  %2238 = vmatpush1.msra.mxu0 0.0
  %2239 = vmatprep.subr.mxu0 0.0
  %2240 = vmatpush1.msra.mxu0 0.0
  %2241 = vmatprep.subr.mxu0 0.0
  %2242 = vmatpush1.msra.mxu0 0.0
  %2243 = vmatprep.subr.mxu0 0.0
  %2244 = vmatpush1.msra.mxu0 0.0
  %2245 = vmatprep.subr.mxu0 0.0
  %2246 = vmatpush1.msra.mxu0 0.0
  %2247 = vmatprep.subr.mxu0 0.0
  %2248 = vmatpush1.msra.mxu0 0.0
  %2249 = vmatprep.subr.mxu0 0.0
  %2250 = vmatpush1.msra.mxu0 0.0
  %2251 = vmatprep.subr.mxu0 0.0
  %2252 = vmatpush1.msra.mxu0 0.0
  %2253 = vmatprep.subr.mxu0 0.0
  %2254 = vmatpush1.msra.mxu0 %v1044
  %2255 = vmatprep.subr.mxu0 0.0
  %2256 = vmatpush2.msra.mxu0 0.0
  %2257 = vmatprep.subr.mxu0 0.0
  %2258 = vmatpush2.msra.mxu0 0.0
  %2259 = vmatprep.subr.mxu0 0.0
  %2260 = vmatpush2.msra.mxu0 0.0
  %2261 = vmatprep.subr.mxu0 0.0
  %2262 = vmatpush2.msra.mxu0 0.0
  %2263 = vmatprep.subr.mxu0 0.0
  %2264 = vmatpush2.msra.mxu0 0.0
  %2265 = vmatprep.subr.mxu0 0.0
  %2266 = vmatpush2.msra.mxu0 0.0
  %2267 = vmatprep.subr.mxu0 0.0
  %2268 = vmatpush2.msra.mxu0 0.0
  %2269 = vmatprep.subr.mxu0 0.0
  %2270 = vmatpush2.msra.mxu0 0.0
  %2271 = vmatprep.subr.mxu0 0.0
  %2272 = vmatpush2.msra.mxu0 0.0
  %2273 = vmatprep.subr.mxu0 0.0
  %2274 = vmatpush2.msra.mxu0 0.0
  %2275 = vmatprep.subr.mxu0 0.0
  %2276 = vmatpush2.msra.mxu0 0.0
  %2277 = vmatprep.subr.mxu0 0.0
  %2278 = vmatpush2.msra.mxu0 0.0
  %2279 = vmatprep.subr.mxu0 0.0
  %2280 = vmatpush2.msra.mxu0 0.0
  %2281 = vmatprep.subr.mxu0 0.0
  %2282 = vmatpush2.msra.mxu0 0.0
  %2283 = vmatprep.subr.mxu0 0.0
  %2284 = vmatpush2.msra.mxu0 0.0
  %2285 = vmatprep.subr.mxu0 0.0
  %2286 = vmatpush2.msra.mxu0 0.0
  %2287 = vmatprep.mubr.f32.mxu0 0.0
  %2288 = vmatmul.mubr.f32.gmra.mxu0 %v2221
  %v2289 = vpop.f32.mrf.mxu0
  %v2290 = vadd.f32 0.0, %v2289
  %v2291 = vpop.f32.mrf.mxu0
  %2292 = vdwg.mxu0
  %2293 = vmatprep.subr.mxu0 0.0
  %2294 = vmatpush1.xpose.msra.mxu0 0.0
  %2295 = vmatprep.subr.mxu0 0.0
  %2296 = vmatpush1.xpose.msra.mxu0 0.0
  %2297 = vmatprep.subr.mxu0 0.0
  %2298 = vmatpush1.xpose.msra.mxu0 0.0
  %2299 = vmatprep.subr.mxu0 0.0
  %2300 = vmatpush1.xpose.msra.mxu0 0.0
  %2301 = vmatprep.subr.mxu0 0.0
  %2302 = vmatpush1.xpose.msra.mxu0 0.0
  %2303 = vmatprep.subr.mxu0 0.0
  %2304 = vmatpush1.xpose.msra.mxu0 0.0
  %2305 = vmatprep.subr.mxu0 0.0
  %2306 = vmatpush1.xpose.msra.mxu0 0.0
  %2307 = vmatprep.subr.mxu0 0.0
  %2308 = vmatpush1.xpose.msra.mxu0 0.0
  %2309 = vmatprep.subr.mxu0 0.0
  %2310 = vmatpush1.xpose.msra.mxu0 0.0
  %2311 = vmatprep.subr.mxu0 0.0
  %2312 = vmatpush1.xpose.msra.mxu0 0.0
  %2313 = vmatprep.subr.mxu0 0.0
  %2314 = vmatpush1.xpose.msra.mxu0 0.0
  %2315 = vmatprep.subr.mxu0 0.0
  %2316 = vmatpush1.xpose.msra.mxu0 0.0
  %2317 = vmatprep.subr.mxu0 0.0
  %2318 = vmatpush1.xpose.msra.mxu0 0.0
  %2319 = vmatprep.subr.mxu0 0.0
  %2320 = vmatpush1.xpose.msra.mxu0 0.0
  %2321 = vmatprep.subr.mxu0 0.0
  %2322 = vmatpush1.xpose.msra.mxu0 0.0
  %2323 = vmatprep.subr.mxu0 0.0
  %2324 = vmatpush1.xpose.msra.mxu0 %v509
  %2325 = vmatprep.subr.mxu0 0.0
  %2326 = vmatpush2.xpose.msra.mxu0 0.0
  %2327 = vmatprep.subr.mxu0 0.0
  %2328 = vmatpush2.xpose.msra.mxu0 0.0
  %2329 = vmatprep.subr.mxu0 0.0
  %2330 = vmatpush2.xpose.msra.mxu0 0.0
  %2331 = vmatprep.subr.mxu0 0.0
  %2332 = vmatpush2.xpose.msra.mxu0 0.0
  %2333 = vmatprep.subr.mxu0 0.0
  %2334 = vmatpush2.xpose.msra.mxu0 0.0
  %2335 = vmatprep.subr.mxu0 0.0
  %2336 = vmatpush2.xpose.msra.mxu0 0.0
  %2337 = vmatprep.subr.mxu0 0.0
  %2338 = vmatpush2.xpose.msra.mxu0 0.0
  %2339 = vmatprep.subr.mxu0 0.0
  %2340 = vmatpush2.xpose.msra.mxu0 0.0
  %2341 = vmatprep.subr.mxu0 0.0
  %2342 = vmatpush2.xpose.msra.mxu0 0.0
  %2343 = vmatprep.subr.mxu0 0.0
  %2344 = vmatpush2.xpose.msra.mxu0 0.0
  %2345 = vmatprep.subr.mxu0 0.0
  %2346 = vmatpush2.xpose.msra.mxu0 0.0
  %2347 = vmatprep.subr.mxu0 0.0
  %2348 = vmatpush2.xpose.msra.mxu0 0.0
  %2349 = vmatprep.subr.mxu0 0.0
  %2350 = vmatpush2.xpose.msra.mxu0 0.0
  %2351 = vmatprep.subr.mxu0 0.0
  %2352 = vmatpush2.xpose.msra.mxu0 0.0
  %2353 = vmatprep.subr.mxu0 0.0
  %2354 = vmatpush2.xpose.msra.mxu0 0.0
  %2355 = vmatprep.subr.mxu0 0.0
  %2356 = vmatpush2.xpose.msra.mxu0 0.0
  %2357 = vmatprep.mubr.f32.mxu0 0.0
  %2358 = vmatmul.mubr.f32.gmra.mxu0 %v201
  %v2359 = vpop.f32.mrf.mxu0
  %v2360 = vadd.f32 0.0, %v2359
  %v2361 = vpop.f32.mrf.mxu0
  %2362 = vdwg.mxu0
  %v2363 = vmul.f32 %v2360, 0.088388346
  %v2364 = vsel %vm1123, %v2363, -inf
  %2365 = vmax.xlane.f32.xlu0 %v2364
  %v2366 = vpop.xlane.xlu0 %2365
  %v2367 = vsub.f32 %v2363, %v2366
  %v2368 = vmul.f32 %v2367, 1.442695
  %v2369 = vpow.pop %v2368
  %v2370 = vsel %vm1123, %v2369, 0.0
  %2371 = vadd.xlane.f32.xlu0 %v2370
  %v2372 = vpop.xlane.xlu0 %2371
  %v2373 = vrcp.pop %v2372
  %v2374 = vmul.f32 %v2369, %v2373
  %v2376 = vsel %vm1123, %v2374, 0
  %2378 = vmatprep.subr.mxu0 0.0
  %2379 = vmatpush1.msra.mxu0 0.0
  %2380 = vmatprep.subr.mxu0 0.0
  %2381 = vmatpush1.msra.mxu0 0.0
  %2382 = vmatprep.subr.mxu0 0.0
  %2383 = vmatpush1.msra.mxu0 0.0
  %2384 = vmatprep.subr.mxu0 0.0
  %2385 = vmatpush1.msra.mxu0 0.0
  %2386 = vmatprep.subr.mxu0 0.0
  %2387 = vmatpush1.msra.mxu0 0.0
  %2388 = vmatprep.subr.mxu0 0.0
  %2389 = vmatpush1.msra.mxu0 0.0
  %2390 = vmatprep.subr.mxu0 0.0
  %2391 = vmatpush1.msra.mxu0 0.0
  %2392 = vmatprep.subr.mxu0 0.0
  %2393 = vmatpush1.msra.mxu0 0.0
  %2394 = vmatprep.subr.mxu0 0.0
  %2395 = vmatpush1.msra.mxu0 0.0
  %2396 = vmatprep.subr.mxu0 0.0
  %2397 = vmatpush1.msra.mxu0 0.0
  %2398 = vmatprep.subr.mxu0 0.0
  %2399 = vmatpush1.msra.mxu0 0.0
  %2400 = vmatprep.subr.mxu0 0.0
  %2401 = vmatpush1.msra.mxu0 0.0
  %2402 = vmatprep.subr.mxu0 0.0
  %2403 = vmatpush1.msra.mxu0 0.0
  %2404 = vmatprep.subr.mxu0 0.0
  %2405 = vmatpush1.msra.mxu0 0.0
  %2406 = vmatprep.subr.mxu0 0.0
  %2407 = vmatpush1.msra.mxu0 0.0
  %2408 = vmatprep.subr.mxu0 0.0
  %2409 = vmatpush1.msra.mxu0 %v817
  %2410 = vmatprep.subr.mxu0 0.0
  %2411 = vmatpush2.msra.mxu0 0.0
  %2412 = vmatprep.subr.mxu0 0.0
  %2413 = vmatpush2.msra.mxu0 0.0
  %2414 = vmatprep.subr.mxu0 0.0
  %2415 = vmatpush2.msra.mxu0 0.0
  %2416 = vmatprep.subr.mxu0 0.0
  %2417 = vmatpush2.msra.mxu0 0.0
  %2418 = vmatprep.subr.mxu0 0.0
  %2419 = vmatpush2.msra.mxu0 0.0
  %2420 = vmatprep.subr.mxu0 0.0
  %2421 = vmatpush2.msra.mxu0 0.0
  %2422 = vmatprep.subr.mxu0 0.0
  %2423 = vmatpush2.msra.mxu0 0.0
  %2424 = vmatprep.subr.mxu0 0.0
  %2425 = vmatpush2.msra.mxu0 0.0
  %2426 = vmatprep.subr.mxu0 0.0
  %2427 = vmatpush2.msra.mxu0 0.0
  %2428 = vmatprep.subr.mxu0 0.0
  %2429 = vmatpush2.msra.mxu0 0.0
  %2430 = vmatprep.subr.mxu0 0.0
  %2431 = vmatpush2.msra.mxu0 0.0
  %2432 = vmatprep.subr.mxu0 0.0
  %2433 = vmatpush2.msra.mxu0 0.0
  %2434 = vmatprep.subr.mxu0 0.0
  %2435 = vmatpush2.msra.mxu0 0.0
  %2436 = vmatprep.subr.mxu0 0.0
  %2437 = vmatpush2.msra.mxu0 0.0
  %2438 = vmatprep.subr.mxu0 0.0
  %2439 = vmatpush2.msra.mxu0 0.0
  %2440 = vmatprep.subr.mxu0 0.0
  %2441 = vmatpush2.msra.mxu0 0.0
  %2442 = vmatprep.mubr.f32.mxu0 0.0
  %2443 = vmatmul.mubr.f32.gmra.mxu0 %v2376
  %v2444 = vpop.f32.mrf.mxu0
  %v2445 = vadd.f32 0.0, %v2444
  %v2446 = vpop.f32.mrf.mxu0
  %2447 = vdwg.mxu0
  %2448 = vmatprep.subr.mxu0 0.0
  %2449 = vmatpush1.xpose.msra.mxu0 0.0
  %2450 = vmatprep.subr.mxu0 0.0
  %2451 = vmatpush1.xpose.msra.mxu0 0.0
  %2452 = vmatprep.subr.mxu0 0.0
  %2453 = vmatpush1.xpose.msra.mxu0 0.0
  %2454 = vmatprep.subr.mxu0 0.0
  %2455 = vmatpush1.xpose.msra.mxu0 0.0
  %2456 = vmatprep.subr.mxu0 0.0
  %2457 = vmatpush1.xpose.msra.mxu0 0.0
  %2458 = vmatprep.subr.mxu0 0.0
  %2459 = vmatpush1.xpose.msra.mxu0 0.0
  %2460 = vmatprep.subr.mxu0 0.0
  %2461 = vmatpush1.xpose.msra.mxu0 0.0
  %2462 = vmatprep.subr.mxu0 0.0
  %2463 = vmatpush1.xpose.msra.mxu0 0.0
  %2464 = vmatprep.subr.mxu0 0.0
  %2465 = vmatpush1.xpose.msra.mxu0 0.0
  %2466 = vmatprep.subr.mxu0 0.0
  %2467 = vmatpush1.xpose.msra.mxu0 0.0
  %2468 = vmatprep.subr.mxu0 0.0
  %2469 = vmatpush1.xpose.msra.mxu0 0.0
  %2470 = vmatprep.subr.mxu0 0.0
  %2471 = vmatpush1.xpose.msra.mxu0 0.0
  %2472 = vmatprep.subr.mxu0 0.0
  %2473 = vmatpush1.xpose.msra.mxu0 0.0
  %2474 = vmatprep.subr.mxu0 0.0
  %2475 = vmatpush1.xpose.msra.mxu0 0.0
  %2476 = vmatprep.subr.mxu0 0.0
  %2477 = vmatpush1.xpose.msra.mxu0 0.0
  %2478 = vmatprep.subr.mxu0 0.0
  %2479 = vmatpush1.xpose.msra.mxu0 %v511
  %2480 = vmatprep.subr.mxu0 0.0
  %2481 = vmatpush2.xpose.msra.mxu0 0.0
  %2482 = vmatprep.subr.mxu0 0.0
  %2483 = vmatpush2.xpose.msra.mxu0 0.0
  %2484 = vmatprep.subr.mxu0 0.0
  %2485 = vmatpush2.xpose.msra.mxu0 0.0
  %2486 = vmatprep.subr.mxu0 0.0
  %2487 = vmatpush2.xpose.msra.mxu0 0.0
  %2488 = vmatprep.subr.mxu0 0.0
  %2489 = vmatpush2.xpose.msra.mxu0 0.0
  %2490 = vmatprep.subr.mxu0 0.0
  %2491 = vmatpush2.xpose.msra.mxu0 0.0
  %2492 = vmatprep.subr.mxu0 0.0
  %2493 = vmatpush2.xpose.msra.mxu0 0.0
  %2494 = vmatprep.subr.mxu0 0.0
  %2495 = vmatpush2.xpose.msra.mxu0 0.0
  %2496 = vmatprep.subr.mxu0 0.0
  %2497 = vmatpush2.xpose.msra.mxu0 0.0
  %2498 = vmatprep.subr.mxu0 0.0
  %2499 = vmatpush2.xpose.msra.mxu0 0.0
  %2500 = vmatprep.subr.mxu0 0.0
  %2501 = vmatpush2.xpose.msra.mxu0 0.0
  %2502 = vmatprep.subr.mxu0 0.0
  %2503 = vmatpush2.xpose.msra.mxu0 0.0
  %2504 = vmatprep.subr.mxu0 0.0
  %2505 = vmatpush2.xpose.msra.mxu0 0.0
  %2506 = vmatprep.subr.mxu0 0.0
  %2507 = vmatpush2.xpose.msra.mxu0 0.0
  %2508 = vmatprep.subr.mxu0 0.0
  %2509 = vmatpush2.xpose.msra.mxu0 0.0
  %2510 = vmatprep.subr.mxu0 0.0
  %2511 = vmatpush2.xpose.msra.mxu0 0.0
  %2512 = vmatprep.mubr.f32.mxu0 0.0
  %2513 = vmatmul.mubr.f32.gmra.mxu0 %v203
  %v2514 = vpop.f32.mrf.mxu0
  %v2515 = vadd.f32 0.0, %v2514
  %v2516 = vpop.f32.mrf.mxu0
  %2517 = vdwg.mxu0
  %v2518 = vmul.f32 %v2515, 0.088388346
  %v2519 = vsel %vm1123, %v2518, -inf
  %2520 = vmax.xlane.f32.xlu0 %v2519
  %v2521 = vpop.xlane.xlu0 %2520
  %v2522 = vsub.f32 %v2518, %v2521
  %v2523 = vmul.f32 %v2522, 1.442695
  %v2524 = vpow.pop %v2523
  %v2525 = vsel %vm1123, %v2524, 0.0
  %2526 = vadd.xlane.f32.xlu0 %v2525
  %v2527 = vpop.xlane.xlu0 %2526
  %v2528 = vrcp.pop %v2527
  %v2529 = vmul.f32 %v2524, %v2528
  %v2531 = vsel %vm1123, %v2529, 0
  %2533 = vmatprep.subr.mxu0 0.0
  %2534 = vmatpush1.msra.mxu0 0.0
  %2535 = vmatprep.subr.mxu0 0.0
  %2536 = vmatpush1.msra.mxu0 0.0
  %2537 = vmatprep.subr.mxu0 0.0
  %2538 = vmatpush1.msra.mxu0 0.0
  %2539 = vmatprep.subr.mxu0 0.0
  %2540 = vmatpush1.msra.mxu0 0.0
  %2541 = vmatprep.subr.mxu0 0.0
  %2542 = vmatpush1.msra.mxu0 0.0
  %2543 = vmatprep.subr.mxu0 0.0
  %2544 = vmatpush1.msra.mxu0 0.0
  %2545 = vmatprep.subr.mxu0 0.0
  %2546 = vmatpush1.msra.mxu0 0.0
  %2547 = vmatprep.subr.mxu0 0.0
  %2548 = vmatpush1.msra.mxu0 0.0
  %2549 = vmatprep.subr.mxu0 0.0
  %2550 = vmatpush1.msra.mxu0 0.0
  %2551 = vmatprep.subr.mxu0 0.0
  %2552 = vmatpush1.msra.mxu0 0.0
  %2553 = vmatprep.subr.mxu0 0.0
  %2554 = vmatpush1.msra.mxu0 0.0
  %2555 = vmatprep.subr.mxu0 0.0
  %2556 = vmatpush1.msra.mxu0 0.0
  %2557 = vmatprep.subr.mxu0 0.0
  %2558 = vmatpush1.msra.mxu0 0.0
  %2559 = vmatprep.subr.mxu0 0.0
  %2560 = vmatpush1.msra.mxu0 0.0
  %2561 = vmatprep.subr.mxu0 0.0
  %2562 = vmatpush1.msra.mxu0 0.0
  %2563 = vmatprep.subr.mxu0 0.0
  %2564 = vmatpush1.msra.mxu0 %v819
  %2565 = vmatprep.subr.mxu0 0.0
  %2566 = vmatpush2.msra.mxu0 0.0
  %2567 = vmatprep.subr.mxu0 0.0
  %2568 = vmatpush2.msra.mxu0 0.0
  %2569 = vmatprep.subr.mxu0 0.0
  %2570 = vmatpush2.msra.mxu0 0.0
  %2571 = vmatprep.subr.mxu0 0.0
  %2572 = vmatpush2.msra.mxu0 0.0
  %2573 = vmatprep.subr.mxu0 0.0
  %2574 = vmatpush2.msra.mxu0 0.0
  %2575 = vmatprep.subr.mxu0 0.0
  %2576 = vmatpush2.msra.mxu0 0.0
  %2577 = vmatprep.subr.mxu0 0.0
  %2578 = vmatpush2.msra.mxu0 0.0
  %2579 = vmatprep.subr.mxu0 0.0
  %2580 = vmatpush2.msra.mxu0 0.0
  %2581 = vmatprep.subr.mxu0 0.0
  %2582 = vmatpush2.msra.mxu0 0.0
  %2583 = vmatprep.subr.mxu0 0.0
  %2584 = vmatpush2.msra.mxu0 0.0
  %2585 = vmatprep.subr.mxu0 0.0
  %2586 = vmatpush2.msra.mxu0 0.0
  %2587 = vmatprep.subr.mxu0 0.0
  %2588 = vmatpush2.msra.mxu0 0.0
  %2589 = vmatprep.subr.mxu0 0.0
  %2590 = vmatpush2.msra.mxu0 0.0
  %2591 = vmatprep.subr.mxu0 0.0
  %2592 = vmatpush2.msra.mxu0 0.0
  %2593 = vmatprep.subr.mxu0 0.0
  %2594 = vmatpush2.msra.mxu0 0.0
  %2595 = vmatprep.subr.mxu0 0.0
  %2596 = vmatpush2.msra.mxu0 0.0
  %2597 = vmatprep.mubr.f32.mxu0 0.0
  %2598 = vmatmul.mubr.f32.gmra.mxu0 %v2531
  %v2599 = vpop.f32.mrf.mxu0
  %v2600 = vadd.f32 0.0, %v2599
  %v2601 = vpop.f32.mrf.mxu0
  %2602 = vdwg.mxu0
  %2603 = vmatprep.subr.mxu0 0.0
  %2604 = vmatpush1.xpose.msra.mxu0 0.0
  %2605 = vmatprep.subr.mxu0 0.0
  %2606 = vmatpush1.xpose.msra.mxu0 0.0
  %2607 = vmatprep.subr.mxu0 0.0
  %2608 = vmatpush1.xpose.msra.mxu0 0.0
  %2609 = vmatprep.subr.mxu0 0.0
  %2610 = vmatpush1.xpose.msra.mxu0 0.0
  %2611 = vmatprep.subr.mxu0 0.0
  %2612 = vmatpush1.xpose.msra.mxu0 0.0
  %2613 = vmatprep.subr.mxu0 0.0
  %2614 = vmatpush1.xpose.msra.mxu0 0.0
  %2615 = vmatprep.subr.mxu0 0.0
  %2616 = vmatpush1.xpose.msra.mxu0 0.0
  %2617 = vmatprep.subr.mxu0 0.0
  %2618 = vmatpush1.xpose.msra.mxu0 0.0
  %2619 = vmatprep.subr.mxu0 0.0
  %2620 = vmatpush1.xpose.msra.mxu0 0.0
  %2621 = vmatprep.subr.mxu0 0.0
  %2622 = vmatpush1.xpose.msra.mxu0 0.0
  %2623 = vmatprep.subr.mxu0 0.0
  %2624 = vmatpush1.xpose.msra.mxu0 0.0
  %2625 = vmatprep.subr.mxu0 0.0
  %2626 = vmatpush1.xpose.msra.mxu0 0.0
  %2627 = vmatprep.subr.mxu0 0.0
  %2628 = vmatpush1.xpose.msra.mxu0 0.0
  %2629 = vmatprep.subr.mxu0 0.0
  %2630 = vmatpush1.xpose.msra.mxu0 0.0
  %2631 = vmatprep.subr.mxu0 0.0
  %2632 = vmatpush1.xpose.msra.mxu0 0.0
  %2633 = vmatprep.subr.mxu0 0.0
  %2634 = vmatpush1.xpose.msra.mxu0 %v586
  %2635 = vmatprep.subr.mxu0 0.0
  %2636 = vmatpush2.xpose.msra.mxu0 0.0
  %2637 = vmatprep.subr.mxu0 0.0
  %2638 = vmatpush2.xpose.msra.mxu0 0.0
  %2639 = vmatprep.subr.mxu0 0.0
  %2640 = vmatpush2.xpose.msra.mxu0 0.0
  %2641 = vmatprep.subr.mxu0 0.0
  %2642 = vmatpush2.xpose.msra.mxu0 0.0
  %2643 = vmatprep.subr.mxu0 0.0
  %2644 = vmatpush2.xpose.msra.mxu0 0.0
  %2645 = vmatprep.subr.mxu0 0.0
  %2646 = vmatpush2.xpose.msra.mxu0 0.0
  %2647 = vmatprep.subr.mxu0 0.0
  %2648 = vmatpush2.xpose.msra.mxu0 0.0
  %2649 = vmatprep.subr.mxu0 0.0
  %2650 = vmatpush2.xpose.msra.mxu0 0.0
  %2651 = vmatprep.subr.mxu0 0.0
  %2652 = vmatpush2.xpose.msra.mxu0 0.0
  %2653 = vmatprep.subr.mxu0 0.0
  %2654 = vmatpush2.xpose.msra.mxu0 0.0
  %2655 = vmatprep.subr.mxu0 0.0
  %2656 = vmatpush2.xpose.msra.mxu0 0.0
  %2657 = vmatprep.subr.mxu0 0.0
  %2658 = vmatpush2.xpose.msra.mxu0 0.0
  %2659 = vmatprep.subr.mxu0 0.0
  %2660 = vmatpush2.xpose.msra.mxu0 0.0
  %2661 = vmatprep.subr.mxu0 0.0
  %2662 = vmatpush2.xpose.msra.mxu0 0.0
  %2663 = vmatprep.subr.mxu0 0.0
  %2664 = vmatpush2.xpose.msra.mxu0 0.0
  %2665 = vmatprep.subr.mxu0 0.0
  %2666 = vmatpush2.xpose.msra.mxu0 0.0
  %2667 = vmatprep.mubr.f32.mxu0 0.0
  %2668 = vmatmul.mubr.f32.gmra.mxu0 %v278
  %v2669 = vpop.f32.mrf.mxu0
  %v2670 = vadd.f32 0.0, %v2669
  %v2671 = vpop.f32.mrf.mxu0
  %2672 = vdwg.mxu0
  %v2673 = vmul.f32 %v2670, 0.088388346
  %v2674 = vsel %vm1123, %v2673, -inf
  %2675 = vmax.xlane.f32.xlu0 %v2674
  %v2676 = vpop.xlane.xlu0 %2675
  %v2677 = vsub.f32 %v2673, %v2676
  %v2678 = vmul.f32 %v2677, 1.442695
  %v2679 = vpow.pop %v2678
  %v2680 = vsel %vm1123, %v2679, 0.0
  %2681 = vadd.xlane.f32.xlu0 %v2680
  %v2682 = vpop.xlane.xlu0 %2681
  %v2683 = vrcp.pop %v2682
  %v2684 = vmul.f32 %v2679, %v2683
  %v2686 = vsel %vm1123, %v2684, 0
  %2688 = vmatprep.subr.mxu0 0.0
  %2689 = vmatpush1.msra.mxu0 0.0
  %2690 = vmatprep.subr.mxu0 0.0
  %2691 = vmatpush1.msra.mxu0 0.0
  %2692 = vmatprep.subr.mxu0 0.0
  %2693 = vmatpush1.msra.mxu0 0.0
  %2694 = vmatprep.subr.mxu0 0.0
  %2695 = vmatpush1.msra.mxu0 0.0
  %2696 = vmatprep.subr.mxu0 0.0
  %2697 = vmatpush1.msra.mxu0 0.0
  %2698 = vmatprep.subr.mxu0 0.0
  %2699 = vmatpush1.msra.mxu0 0.0
  %2700 = vmatprep.subr.mxu0 0.0
  %2701 = vmatpush1.msra.mxu0 0.0
  %2702 = vmatprep.subr.mxu0 0.0
  %2703 = vmatpush1.msra.mxu0 0.0
  %2704 = vmatprep.subr.mxu0 0.0
  %2705 = vmatpush1.msra.mxu0 0.0
  %2706 = vmatprep.subr.mxu0 0.0
  %2707 = vmatpush1.msra.mxu0 0.0
  %2708 = vmatprep.subr.mxu0 0.0
  %2709 = vmatpush1.msra.mxu0 0.0
  %2710 = vmatprep.subr.mxu0 0.0
  %2711 = vmatpush1.msra.mxu0 0.0
  %2712 = vmatprep.subr.mxu0 0.0
  %2713 = vmatpush1.msra.mxu0 0.0
  %2714 = vmatprep.subr.mxu0 0.0
  %2715 = vmatpush1.msra.mxu0 0.0
  %2716 = vmatprep.subr.mxu0 0.0
  %2717 = vmatpush1.msra.mxu0 0.0
  %2718 = vmatprep.subr.mxu0 0.0
  %2719 = vmatpush1.msra.mxu0 %v894
  %2720 = vmatprep.subr.mxu0 0.0
  %2721 = vmatpush2.msra.mxu0 0.0
  %2722 = vmatprep.subr.mxu0 0.0
  %2723 = vmatpush2.msra.mxu0 0.0
  %2724 = vmatprep.subr.mxu0 0.0
  %2725 = vmatpush2.msra.mxu0 0.0
  %2726 = vmatprep.subr.mxu0 0.0
  %2727 = vmatpush2.msra.mxu0 0.0
  %2728 = vmatprep.subr.mxu0 0.0
  %2729 = vmatpush2.msra.mxu0 0.0
  %2730 = vmatprep.subr.mxu0 0.0
  %2731 = vmatpush2.msra.mxu0 0.0
  %2732 = vmatprep.subr.mxu0 0.0
  %2733 = vmatpush2.msra.mxu0 0.0
  %2734 = vmatprep.subr.mxu0 0.0
  %2735 = vmatpush2.msra.mxu0 0.0
  %2736 = vmatprep.subr.mxu0 0.0
  %2737 = vmatpush2.msra.mxu0 0.0
  %2738 = vmatprep.subr.mxu0 0.0
  %2739 = vmatpush2.msra.mxu0 0.0
  %2740 = vmatprep.subr.mxu0 0.0
  %2741 = vmatpush2.msra.mxu0 0.0
  %2742 = vmatprep.subr.mxu0 0.0
  %2743 = vmatpush2.msra.mxu0 0.0
  %2744 = vmatprep.subr.mxu0 0.0
  %2745 = vmatpush2.msra.mxu0 0.0
  %2746 = vmatprep.subr.mxu0 0.0
  %2747 = vmatpush2.msra.mxu0 0.0
  %2748 = vmatprep.subr.mxu0 0.0
  %2749 = vmatpush2.msra.mxu0 0.0
  %2750 = vmatprep.subr.mxu0 0.0
  %2751 = vmatpush2.msra.mxu0 0.0
  %2752 = vmatprep.mubr.f32.mxu0 0.0
  %2753 = vmatmul.mubr.f32.gmra.mxu0 %v2686
  %v2754 = vpop.f32.mrf.mxu0
  %v2755 = vadd.f32 0.0, %v2754
  %v2756 = vpop.f32.mrf.mxu0
  %2757 = vdwg.mxu0
  %2758 = vmatprep.subr.mxu0 0.0
  %2759 = vmatpush1.xpose.msra.mxu0 0.0
  %2760 = vmatprep.subr.mxu0 0.0
  %2761 = vmatpush1.xpose.msra.mxu0 0.0
  %2762 = vmatprep.subr.mxu0 0.0
  %2763 = vmatpush1.xpose.msra.mxu0 0.0
  %2764 = vmatprep.subr.mxu0 0.0
  %2765 = vmatpush1.xpose.msra.mxu0 0.0
  %2766 = vmatprep.subr.mxu0 0.0
  %2767 = vmatpush1.xpose.msra.mxu0 0.0
  %2768 = vmatprep.subr.mxu0 0.0
  %2769 = vmatpush1.xpose.msra.mxu0 0.0
  %2770 = vmatprep.subr.mxu0 0.0
  %2771 = vmatpush1.xpose.msra.mxu0 0.0
  %2772 = vmatprep.subr.mxu0 0.0
  %2773 = vmatpush1.xpose.msra.mxu0 0.0
  %2774 = vmatprep.subr.mxu0 0.0
  %2775 = vmatpush1.xpose.msra.mxu0 0.0
  %2776 = vmatprep.subr.mxu0 0.0
  %2777 = vmatpush1.xpose.msra.mxu0 0.0
  %2778 = vmatprep.subr.mxu0 0.0
  %2779 = vmatpush1.xpose.msra.mxu0 0.0
  %2780 = vmatprep.subr.mxu0 0.0
  %2781 = vmatpush1.xpose.msra.mxu0 0.0
  %2782 = vmatprep.subr.mxu0 0.0
  %2783 = vmatpush1.xpose.msra.mxu0 0.0
  %2784 = vmatprep.subr.mxu0 0.0
  %2785 = vmatpush1.xpose.msra.mxu0 0.0
  %2786 = vmatprep.subr.mxu0 0.0
  %2787 = vmatpush1.xpose.msra.mxu0 0.0
  %2788 = vmatprep.subr.mxu0 0.0
  %2789 = vmatpush1.xpose.msra.mxu0 %v588
  %2790 = vmatprep.subr.mxu0 0.0
  %2791 = vmatpush2.xpose.msra.mxu0 0.0
  %2792 = vmatprep.subr.mxu0 0.0
  %2793 = vmatpush2.xpose.msra.mxu0 0.0
  %2794 = vmatprep.subr.mxu0 0.0
  %2795 = vmatpush2.xpose.msra.mxu0 0.0
  %2796 = vmatprep.subr.mxu0 0.0
  %2797 = vmatpush2.xpose.msra.mxu0 0.0
  %2798 = vmatprep.subr.mxu0 0.0
  %2799 = vmatpush2.xpose.msra.mxu0 0.0
  %2800 = vmatprep.subr.mxu0 0.0
  %2801 = vmatpush2.xpose.msra.mxu0 0.0
  %2802 = vmatprep.subr.mxu0 0.0
  %2803 = vmatpush2.xpose.msra.mxu0 0.0
  %2804 = vmatprep.subr.mxu0 0.0
  %2805 = vmatpush2.xpose.msra.mxu0 0.0
  %2806 = vmatprep.subr.mxu0 0.0
  %2807 = vmatpush2.xpose.msra.mxu0 0.0
  %2808 = vmatprep.subr.mxu0 0.0
  %2809 = vmatpush2.xpose.msra.mxu0 0.0
  %2810 = vmatprep.subr.mxu0 0.0
  %2811 = vmatpush2.xpose.msra.mxu0 0.0
  %2812 = vmatprep.subr.mxu0 0.0
  %2813 = vmatpush2.xpose.msra.mxu0 0.0
  %2814 = vmatprep.subr.mxu0 0.0
  %2815 = vmatpush2.xpose.msra.mxu0 0.0
  %2816 = vmatprep.subr.mxu0 0.0
  %2817 = vmatpush2.xpose.msra.mxu0 0.0
  %2818 = vmatprep.subr.mxu0 0.0
  %2819 = vmatpush2.xpose.msra.mxu0 0.0
  %2820 = vmatprep.subr.mxu0 0.0
  %2821 = vmatpush2.xpose.msra.mxu0 0.0
  %2822 = vmatprep.mubr.f32.mxu0 0.0
  %2823 = vmatmul.mubr.f32.gmra.mxu0 %v280
  %v2824 = vpop.f32.mrf.mxu0
  %v2825 = vadd.f32 0.0, %v2824
  %v2826 = vpop.f32.mrf.mxu0
  %2827 = vdwg.mxu0
  %v2828 = vmul.f32 %v2825, 0.088388346
  %v2829 = vsel %vm1123, %v2828, -inf
  %2830 = vmax.xlane.f32.xlu0 %v2829
  %v2831 = vpop.xlane.xlu0 %2830
  %v2832 = vsub.f32 %v2828, %v2831
  %v2833 = vmul.f32 %v2832, 1.442695
  %v2834 = vpow.pop %v2833
  %v2835 = vsel %vm1123, %v2834, 0.0
  %2836 = vadd.xlane.f32.xlu0 %v2835
  %v2837 = vpop.xlane.xlu0 %2836
  %v2838 = vrcp.pop %v2837
  %v2839 = vmul.f32 %v2834, %v2838
  %v2841 = vsel %vm1123, %v2839, 0
  %2843 = vmatprep.subr.mxu0 0.0
  %2844 = vmatpush1.msra.mxu0 0.0
  %2845 = vmatprep.subr.mxu0 0.0
  %2846 = vmatpush1.msra.mxu0 0.0
  %2847 = vmatprep.subr.mxu0 0.0
  %2848 = vmatpush1.msra.mxu0 0.0
  %2849 = vmatprep.subr.mxu0 0.0
  %2850 = vmatpush1.msra.mxu0 0.0
  %2851 = vmatprep.subr.mxu0 0.0
  %2852 = vmatpush1.msra.mxu0 0.0
  %2853 = vmatprep.subr.mxu0 0.0
  %2854 = vmatpush1.msra.mxu0 0.0
  %2855 = vmatprep.subr.mxu0 0.0
  %2856 = vmatpush1.msra.mxu0 0.0
  %2857 = vmatprep.subr.mxu0 0.0
  %2858 = vmatpush1.msra.mxu0 0.0
  %2859 = vmatprep.subr.mxu0 0.0
  %2860 = vmatpush1.msra.mxu0 0.0
  %2861 = vmatprep.subr.mxu0 0.0
  %2862 = vmatpush1.msra.mxu0 0.0
  %2863 = vmatprep.subr.mxu0 0.0
  %2864 = vmatpush1.msra.mxu0 0.0
  %2865 = vmatprep.subr.mxu0 0.0
  %2866 = vmatpush1.msra.mxu0 0.0
  %2867 = vmatprep.subr.mxu0 0.0
  %2868 = vmatpush1.msra.mxu0 0.0
  %2869 = vmatprep.subr.mxu0 0.0
  %2870 = vmatpush1.msra.mxu0 0.0
  %2871 = vmatprep.subr.mxu0 0.0
  %2872 = vmatpush1.msra.mxu0 0.0
  %2873 = vmatprep.subr.mxu0 0.0
  %2874 = vmatpush1.msra.mxu0 %v896
  %2875 = vmatprep.subr.mxu0 0.0
  %2876 = vmatpush2.msra.mxu0 0.0
  %2877 = vmatprep.subr.mxu0 0.0
  %2878 = vmatpush2.msra.mxu0 0.0
  %2879 = vmatprep.subr.mxu0 0.0
  %2880 = vmatpush2.msra.mxu0 0.0
  %2881 = vmatprep.subr.mxu0 0.0
  %2882 = vmatpush2.msra.mxu0 0.0
  %2883 = vmatprep.subr.mxu0 0.0
  %2884 = vmatpush2.msra.mxu0 0.0
  %2885 = vmatprep.subr.mxu0 0.0
  %2886 = vmatpush2.msra.mxu0 0.0
  %2887 = vmatprep.subr.mxu0 0.0
  %2888 = vmatpush2.msra.mxu0 0.0
  %2889 = vmatprep.subr.mxu0 0.0
  %2890 = vmatpush2.msra.mxu0 0.0
  %2891 = vmatprep.subr.mxu0 0.0
  %2892 = vmatpush2.msra.mxu0 0.0
  %2893 = vmatprep.subr.mxu0 0.0
  %2894 = vmatpush2.msra.mxu0 0.0
  %2895 = vmatprep.subr.mxu0 0.0
  %2896 = vmatpush2.msra.mxu0 0.0
  %2897 = vmatprep.subr.mxu0 0.0
  %2898 = vmatpush2.msra.mxu0 0.0
  %2899 = vmatprep.subr.mxu0 0.0
  %2900 = vmatpush2.msra.mxu0 0.0
  %2901 = vmatprep.subr.mxu0 0.0
  %2902 = vmatpush2.msra.mxu0 0.0
  %2903 = vmatprep.subr.mxu0 0.0
  %2904 = vmatpush2.msra.mxu0 0.0
  %2905 = vmatprep.subr.mxu0 0.0
  %2906 = vmatpush2.msra.mxu0 0.0
  %2907 = vmatprep.mubr.f32.mxu0 0.0
  %2908 = vmatmul.mubr.f32.gmra.mxu0 %v2841
  %v2909 = vpop.f32.mrf.mxu0
  %v2910 = vadd.f32 0.0, %v2909
  %v2911 = vpop.f32.mrf.mxu0
  %2912 = vdwg.mxu0
  %2913 = vmatprep.subr.mxu0 0.0
  %2914 = vmatpush1.xpose.msra.mxu0 0.0
  %2915 = vmatprep.subr.mxu0 0.0
  %2916 = vmatpush1.xpose.msra.mxu0 0.0
  %2917 = vmatprep.subr.mxu0 0.0
  %2918 = vmatpush1.xpose.msra.mxu0 0.0
  %2919 = vmatprep.subr.mxu0 0.0
  %2920 = vmatpush1.xpose.msra.mxu0 0.0
  %2921 = vmatprep.subr.mxu0 0.0
  %2922 = vmatpush1.xpose.msra.mxu0 0.0
  %2923 = vmatprep.subr.mxu0 0.0
  %2924 = vmatpush1.xpose.msra.mxu0 0.0
  %2925 = vmatprep.subr.mxu0 0.0
  %2926 = vmatpush1.xpose.msra.mxu0 0.0
  %2927 = vmatprep.subr.mxu0 0.0
  %2928 = vmatpush1.xpose.msra.mxu0 0.0
  %2929 = vmatprep.subr.mxu0 0.0
  %2930 = vmatpush1.xpose.msra.mxu0 0.0
  %2931 = vmatprep.subr.mxu0 0.0
  %2932 = vmatpush1.xpose.msra.mxu0 0.0
  %2933 = vmatprep.subr.mxu0 0.0
  %2934 = vmatpush1.xpose.msra.mxu0 0.0
  %2935 = vmatprep.subr.mxu0 0.0
  %2936 = vmatpush1.xpose.msra.mxu0 0.0
  %2937 = vmatprep.subr.mxu0 0.0
  %2938 = vmatpush1.xpose.msra.mxu0 0.0
  %2939 = vmatprep.subr.mxu0 0.0
  %2940 = vmatpush1.xpose.msra.mxu0 0.0
  %2941 = vmatprep.subr.mxu0 0.0
  %2942 = vmatpush1.xpose.msra.mxu0 0.0
  %2943 = vmatprep.subr.mxu0 0.0
  %2944 = vmatpush1.xpose.msra.mxu0 %v663
  %2945 = vmatprep.subr.mxu0 0.0
  %2946 = vmatpush2.xpose.msra.mxu0 0.0
  %2947 = vmatprep.subr.mxu0 0.0
  %2948 = vmatpush2.xpose.msra.mxu0 0.0
  %2949 = vmatprep.subr.mxu0 0.0
  %2950 = vmatpush2.xpose.msra.mxu0 0.0
  %2951 = vmatprep.subr.mxu0 0.0
  %2952 = vmatpush2.xpose.msra.mxu0 0.0
  %2953 = vmatprep.subr.mxu0 0.0
  %2954 = vmatpush2.xpose.msra.mxu0 0.0
  %2955 = vmatprep.subr.mxu0 0.0
  %2956 = vmatpush2.xpose.msra.mxu0 0.0
  %2957 = vmatprep.subr.mxu0 0.0
  %2958 = vmatpush2.xpose.msra.mxu0 0.0
  %2959 = vmatprep.subr.mxu0 0.0
  %2960 = vmatpush2.xpose.msra.mxu0 0.0
  %2961 = vmatprep.subr.mxu0 0.0
  %2962 = vmatpush2.xpose.msra.mxu0 0.0
  %2963 = vmatprep.subr.mxu0 0.0
  %2964 = vmatpush2.xpose.msra.mxu0 0.0
  %2965 = vmatprep.subr.mxu0 0.0
  %2966 = vmatpush2.xpose.msra.mxu0 0.0
  %2967 = vmatprep.subr.mxu0 0.0
  %2968 = vmatpush2.xpose.msra.mxu0 0.0
  %2969 = vmatprep.subr.mxu0 0.0
  %2970 = vmatpush2.xpose.msra.mxu0 0.0
  %2971 = vmatprep.subr.mxu0 0.0
  %2972 = vmatpush2.xpose.msra.mxu0 0.0
  %2973 = vmatprep.subr.mxu0 0.0
  %2974 = vmatpush2.xpose.msra.mxu0 0.0
  %2975 = vmatprep.subr.mxu0 0.0
  %2976 = vmatpush2.xpose.msra.mxu0 0.0
  %2977 = vmatprep.mubr.f32.mxu0 0.0
  %2978 = vmatmul.mubr.f32.gmra.mxu0 %v355
  %v2979 = vpop.f32.mrf.mxu0
  %v2980 = vadd.f32 0.0, %v2979
  %v2981 = vpop.f32.mrf.mxu0
  %2982 = vdwg.mxu0
  %v2983 = vmul.f32 %v2980, 0.088388346
  %v2984 = vsel %vm1123, %v2983, -inf
  %2985 = vmax.xlane.f32.xlu0 %v2984
  %v2986 = vpop.xlane.xlu0 %2985
  %v2987 = vsub.f32 %v2983, %v2986
  %v2988 = vmul.f32 %v2987, 1.442695
  %v2989 = vpow.pop %v2988
  %v2990 = vsel %vm1123, %v2989, 0.0
  %2991 = vadd.xlane.f32.xlu0 %v2990
  %v2992 = vpop.xlane.xlu0 %2991
  %v2993 = vrcp.pop %v2992
  %v2994 = vmul.f32 %v2989, %v2993
  %v2996 = vsel %vm1123, %v2994, 0
  %2998 = vmatprep.subr.mxu0 0.0
  %2999 = vmatpush1.msra.mxu0 0.0
  %3000 = vmatprep.subr.mxu0 0.0
  %3001 = vmatpush1.msra.mxu0 0.0
  %3002 = vmatprep.subr.mxu0 0.0
  %3003 = vmatpush1.msra.mxu0 0.0
  %3004 = vmatprep.subr.mxu0 0.0
  %3005 = vmatpush1.msra.mxu0 0.0
  %3006 = vmatprep.subr.mxu0 0.0
  %3007 = vmatpush1.msra.mxu0 0.0
  %3008 = vmatprep.subr.mxu0 0.0
  %3009 = vmatpush1.msra.mxu0 0.0
  %3010 = vmatprep.subr.mxu0 0.0
  %3011 = vmatpush1.msra.mxu0 0.0
  %3012 = vmatprep.subr.mxu0 0.0
  %3013 = vmatpush1.msra.mxu0 0.0
  %3014 = vmatprep.subr.mxu0 0.0
  %3015 = vmatpush1.msra.mxu0 0.0
  %3016 = vmatprep.subr.mxu0 0.0
  %3017 = vmatpush1.msra.mxu0 0.0
  %3018 = vmatprep.subr.mxu0 0.0
  %3019 = vmatpush1.msra.mxu0 0.0
  %3020 = vmatprep.subr.mxu0 0.0
  %3021 = vmatpush1.msra.mxu0 0.0
  %3022 = vmatprep.subr.mxu0 0.0
  %3023 = vmatpush1.msra.mxu0 0.0
  %3024 = vmatprep.subr.mxu0 0.0
  %3025 = vmatpush1.msra.mxu0 0.0
  %3026 = vmatprep.subr.mxu0 0.0
  %3027 = vmatpush1.msra.mxu0 0.0
  %3028 = vmatprep.subr.mxu0 0.0
  %3029 = vmatpush1.msra.mxu0 %v971
  %3030 = vmatprep.subr.mxu0 0.0
  %3031 = vmatpush2.msra.mxu0 0.0
  %3032 = vmatprep.subr.mxu0 0.0
  %3033 = vmatpush2.msra.mxu0 0.0
  %3034 = vmatprep.subr.mxu0 0.0
  %3035 = vmatpush2.msra.mxu0 0.0
  %3036 = vmatprep.subr.mxu0 0.0
  %3037 = vmatpush2.msra.mxu0 0.0
  %3038 = vmatprep.subr.mxu0 0.0
  %3039 = vmatpush2.msra.mxu0 0.0
  %3040 = vmatprep.subr.mxu0 0.0
  %3041 = vmatpush2.msra.mxu0 0.0
  %3042 = vmatprep.subr.mxu0 0.0
  %3043 = vmatpush2.msra.mxu0 0.0
  %3044 = vmatprep.subr.mxu0 0.0
  %3045 = vmatpush2.msra.mxu0 0.0
  %3046 = vmatprep.subr.mxu0 0.0
  %3047 = vmatpush2.msra.mxu0 0.0
  %3048 = vmatprep.subr.mxu0 0.0
  %3049 = vmatpush2.msra.mxu0 0.0
  %3050 = vmatprep.subr.mxu0 0.0
  %3051 = vmatpush2.msra.mxu0 0.0
  %3052 = vmatprep.subr.mxu0 0.0
  %3053 = vmatpush2.msra.mxu0 0.0
  %3054 = vmatprep.subr.mxu0 0.0
  %3055 = vmatpush2.msra.mxu0 0.0
  %3056 = vmatprep.subr.mxu0 0.0
  %3057 = vmatpush2.msra.mxu0 0.0
  %3058 = vmatprep.subr.mxu0 0.0
  %3059 = vmatpush2.msra.mxu0 0.0
  %3060 = vmatprep.subr.mxu0 0.0
  %3061 = vmatpush2.msra.mxu0 0.0
  %3062 = vmatprep.mubr.f32.mxu0 0.0
  %3063 = vmatmul.mubr.f32.gmra.mxu0 %v2996
  %v3064 = vpop.f32.mrf.mxu0
  %v3065 = vadd.f32 0.0, %v3064
  %v3066 = vpop.f32.mrf.mxu0
  %3067 = vdwg.mxu0
  %3068 = vmatprep.subr.mxu0 0.0
  %3069 = vmatpush1.xpose.msra.mxu0 0.0
  %3070 = vmatprep.subr.mxu0 0.0
  %3071 = vmatpush1.xpose.msra.mxu0 0.0
  %3072 = vmatprep.subr.mxu0 0.0
  %3073 = vmatpush1.xpose.msra.mxu0 0.0
  %3074 = vmatprep.subr.mxu0 0.0
  %3075 = vmatpush1.xpose.msra.mxu0 0.0
  %3076 = vmatprep.subr.mxu0 0.0
  %3077 = vmatpush1.xpose.msra.mxu0 0.0
  %3078 = vmatprep.subr.mxu0 0.0
  %3079 = vmatpush1.xpose.msra.mxu0 0.0
  %3080 = vmatprep.subr.mxu0 0.0
  %3081 = vmatpush1.xpose.msra.mxu0 0.0
  %3082 = vmatprep.subr.mxu0 0.0
  %3083 = vmatpush1.xpose.msra.mxu0 0.0
  %3084 = vmatprep.subr.mxu0 0.0
  %3085 = vmatpush1.xpose.msra.mxu0 0.0
  %3086 = vmatprep.subr.mxu0 0.0
  %3087 = vmatpush1.xpose.msra.mxu0 0.0
  %3088 = vmatprep.subr.mxu0 0.0
  %3089 = vmatpush1.xpose.msra.mxu0 0.0
  %3090 = vmatprep.subr.mxu0 0.0
  %3091 = vmatpush1.xpose.msra.mxu0 0.0
  %3092 = vmatprep.subr.mxu0 0.0
  %3093 = vmatpush1.xpose.msra.mxu0 0.0
  %3094 = vmatprep.subr.mxu0 0.0
  %3095 = vmatpush1.xpose.msra.mxu0 0.0
  %3096 = vmatprep.subr.mxu0 0.0
  %3097 = vmatpush1.xpose.msra.mxu0 0.0
  %3098 = vmatprep.subr.mxu0 0.0
  %3099 = vmatpush1.xpose.msra.mxu0 %v665
  %3100 = vmatprep.subr.mxu0 0.0
  %3101 = vmatpush2.xpose.msra.mxu0 0.0
  %3102 = vmatprep.subr.mxu0 0.0
  %3103 = vmatpush2.xpose.msra.mxu0 0.0
  %3104 = vmatprep.subr.mxu0 0.0
  %3105 = vmatpush2.xpose.msra.mxu0 0.0
  %3106 = vmatprep.subr.mxu0 0.0
  %3107 = vmatpush2.xpose.msra.mxu0 0.0
  %3108 = vmatprep.subr.mxu0 0.0
  %3109 = vmatpush2.xpose.msra.mxu0 0.0
  %3110 = vmatprep.subr.mxu0 0.0
  %3111 = vmatpush2.xpose.msra.mxu0 0.0
  %3112 = vmatprep.subr.mxu0 0.0
  %3113 = vmatpush2.xpose.msra.mxu0 0.0
  %3114 = vmatprep.subr.mxu0 0.0
  %3115 = vmatpush2.xpose.msra.mxu0 0.0
  %3116 = vmatprep.subr.mxu0 0.0
  %3117 = vmatpush2.xpose.msra.mxu0 0.0
  %3118 = vmatprep.subr.mxu0 0.0
  %3119 = vmatpush2.xpose.msra.mxu0 0.0
  %3120 = vmatprep.subr.mxu0 0.0
  %3121 = vmatpush2.xpose.msra.mxu0 0.0
  %3122 = vmatprep.subr.mxu0 0.0
  %3123 = vmatpush2.xpose.msra.mxu0 0.0
  %3124 = vmatprep.subr.mxu0 0.0
  %3125 = vmatpush2.xpose.msra.mxu0 0.0
  %3126 = vmatprep.subr.mxu0 0.0
  %3127 = vmatpush2.xpose.msra.mxu0 0.0
  %3128 = vmatprep.subr.mxu0 0.0
  %3129 = vmatpush2.xpose.msra.mxu0 0.0
  %3130 = vmatprep.subr.mxu0 0.0
  %3131 = vmatpush2.xpose.msra.mxu0 0.0
  %3132 = vmatprep.mubr.f32.mxu0 0.0
  %3133 = vmatmul.mubr.f32.gmra.mxu0 %v357
  %v3134 = vpop.f32.mrf.mxu0
  %v3135 = vadd.f32 0.0, %v3134
  %v3136 = vpop.f32.mrf.mxu0
  %3137 = vdwg.mxu0
  %v3138 = vmul.f32 %v3135, 0.088388346
  %v3139 = vsel %vm1123, %v3138, -inf
  %3140 = vmax.xlane.f32.xlu0 %v3139
  %v3141 = vpop.xlane.xlu0 %3140
  %v3142 = vsub.f32 %v3138, %v3141
  %v3143 = vmul.f32 %v3142, 1.442695
  %v3144 = vpow.pop %v3143
  %v3145 = vsel %vm1123, %v3144, 0.0
  %3146 = vadd.xlane.f32.xlu0 %v3145
  %v3147 = vpop.xlane.xlu0 %3146
  %v3148 = vrcp.pop %v3147
  %v3149 = vmul.f32 %v3144, %v3148
  %v3151 = vsel %vm1123, %v3149, 0
  %3153 = vmatprep.subr.mxu0 0.0
  %3154 = vmatpush1.msra.mxu0 0.0
  %3155 = vmatprep.subr.mxu0 0.0
  %3156 = vmatpush1.msra.mxu0 0.0
  %3157 = vmatprep.subr.mxu0 0.0
  %3158 = vmatpush1.msra.mxu0 0.0
  %3159 = vmatprep.subr.mxu0 0.0
  %3160 = vmatpush1.msra.mxu0 0.0
  %3161 = vmatprep.subr.mxu0 0.0
  %3162 = vmatpush1.msra.mxu0 0.0
  %3163 = vmatprep.subr.mxu0 0.0
  %3164 = vmatpush1.msra.mxu0 0.0
  %3165 = vmatprep.subr.mxu0 0.0
  %3166 = vmatpush1.msra.mxu0 0.0
  %3167 = vmatprep.subr.mxu0 0.0
  %3168 = vmatpush1.msra.mxu0 0.0
  %3169 = vmatprep.subr.mxu0 0.0
  %3170 = vmatpush1.msra.mxu0 0.0
  %3171 = vmatprep.subr.mxu0 0.0
  %3172 = vmatpush1.msra.mxu0 0.0
  %3173 = vmatprep.subr.mxu0 0.0
  %3174 = vmatpush1.msra.mxu0 0.0
  %3175 = vmatprep.subr.mxu0 0.0
  %3176 = vmatpush1.msra.mxu0 0.0
  %3177 = vmatprep.subr.mxu0 0.0
  %3178 = vmatpush1.msra.mxu0 0.0
  %3179 = vmatprep.subr.mxu0 0.0
  %3180 = vmatpush1.msra.mxu0 0.0
  %3181 = vmatprep.subr.mxu0 0.0
  %3182 = vmatpush1.msra.mxu0 0.0
  %3183 = vmatprep.subr.mxu0 0.0
  %3184 = vmatpush1.msra.mxu0 %v973
  %3185 = vmatprep.subr.mxu0 0.0
  %3186 = vmatpush2.msra.mxu0 0.0
  %3187 = vmatprep.subr.mxu0 0.0
  %3188 = vmatpush2.msra.mxu0 0.0
  %3189 = vmatprep.subr.mxu0 0.0
  %3190 = vmatpush2.msra.mxu0 0.0
  %3191 = vmatprep.subr.mxu0 0.0
  %3192 = vmatpush2.msra.mxu0 0.0
  %3193 = vmatprep.subr.mxu0 0.0
  %3194 = vmatpush2.msra.mxu0 0.0
  %3195 = vmatprep.subr.mxu0 0.0
  %3196 = vmatpush2.msra.mxu0 0.0
  %3197 = vmatprep.subr.mxu0 0.0
  %3198 = vmatpush2.msra.mxu0 0.0
  %3199 = vmatprep.subr.mxu0 0.0
  %3200 = vmatpush2.msra.mxu0 0.0
  %3201 = vmatprep.subr.mxu0 0.0
  %3202 = vmatpush2.msra.mxu0 0.0
  %3203 = vmatprep.subr.mxu0 0.0
  %3204 = vmatpush2.msra.mxu0 0.0
  %3205 = vmatprep.subr.mxu0 0.0
  %3206 = vmatpush2.msra.mxu0 0.0
  %3207 = vmatprep.subr.mxu0 0.0
  %3208 = vmatpush2.msra.mxu0 0.0
  %3209 = vmatprep.subr.mxu0 0.0
  %3210 = vmatpush2.msra.mxu0 0.0
  %3211 = vmatprep.subr.mxu0 0.0
  %3212 = vmatpush2.msra.mxu0 0.0
  %3213 = vmatprep.subr.mxu0 0.0
  %3214 = vmatpush2.msra.mxu0 0.0
  %3215 = vmatprep.subr.mxu0 0.0
  %3216 = vmatpush2.msra.mxu0 0.0
  %3217 = vmatprep.mubr.f32.mxu0 0.0
  %3218 = vmatmul.mubr.f32.gmra.mxu0 %v3151
  %v3219 = vpop.f32.mrf.mxu0
  %v3220 = vadd.f32 0.0, %v3219
  %v3221 = vpop.f32.mrf.mxu0
  %3222 = vdwg.mxu0
  %3223 = vmatprep.subr.mxu0 0.0
  %3224 = vmatpush1.xpose.msra.mxu0 0.0
  %3225 = vmatprep.subr.mxu0 0.0
  %3226 = vmatpush1.xpose.msra.mxu0 0.0
  %3227 = vmatprep.subr.mxu0 0.0
  %3228 = vmatpush1.xpose.msra.mxu0 0.0
  %3229 = vmatprep.subr.mxu0 0.0
  %3230 = vmatpush1.xpose.msra.mxu0 0.0
  %3231 = vmatprep.subr.mxu0 0.0
  %3232 = vmatpush1.xpose.msra.mxu0 0.0
  %3233 = vmatprep.subr.mxu0 0.0
  %3234 = vmatpush1.xpose.msra.mxu0 0.0
  %3235 = vmatprep.subr.mxu0 0.0
  %3236 = vmatpush1.xpose.msra.mxu0 0.0
  %3237 = vmatprep.subr.mxu0 0.0
  %3238 = vmatpush1.xpose.msra.mxu0 0.0
  %3239 = vmatprep.subr.mxu0 0.0
  %3240 = vmatpush1.xpose.msra.mxu0 0.0
  %3241 = vmatprep.subr.mxu0 0.0
  %3242 = vmatpush1.xpose.msra.mxu0 0.0
  %3243 = vmatprep.subr.mxu0 0.0
  %3244 = vmatpush1.xpose.msra.mxu0 0.0
  %3245 = vmatprep.subr.mxu0 0.0
  %3246 = vmatpush1.xpose.msra.mxu0 0.0
  %3247 = vmatprep.subr.mxu0 0.0
  %3248 = vmatpush1.xpose.msra.mxu0 0.0
  %3249 = vmatprep.subr.mxu0 0.0
  %3250 = vmatpush1.xpose.msra.mxu0 0.0
  %3251 = vmatprep.subr.mxu0 0.0
  %3252 = vmatpush1.xpose.msra.mxu0 0.0
  %3253 = vmatprep.subr.mxu0 0.0
  %3254 = vmatpush1.xpose.msra.mxu0 %v740
  %3255 = vmatprep.subr.mxu0 0.0
  %3256 = vmatpush2.xpose.msra.mxu0 0.0
  %3257 = vmatprep.subr.mxu0 0.0
  %3258 = vmatpush2.xpose.msra.mxu0 0.0
  %3259 = vmatprep.subr.mxu0 0.0
  %3260 = vmatpush2.xpose.msra.mxu0 0.0
  %3261 = vmatprep.subr.mxu0 0.0
  %3262 = vmatpush2.xpose.msra.mxu0 0.0
  %3263 = vmatprep.subr.mxu0 0.0
  %3264 = vmatpush2.xpose.msra.mxu0 0.0
  %3265 = vmatprep.subr.mxu0 0.0
  %3266 = vmatpush2.xpose.msra.mxu0 0.0
  %3267 = vmatprep.subr.mxu0 0.0
  %3268 = vmatpush2.xpose.msra.mxu0 0.0
  %3269 = vmatprep.subr.mxu0 0.0
  %3270 = vmatpush2.xpose.msra.mxu0 0.0
  %3271 = vmatprep.subr.mxu0 0.0
  %3272 = vmatpush2.xpose.msra.mxu0 0.0
  %3273 = vmatprep.subr.mxu0 0.0
  %3274 = vmatpush2.xpose.msra.mxu0 0.0
  %3275 = vmatprep.subr.mxu0 0.0
  %3276 = vmatpush2.xpose.msra.mxu0 0.0
  %3277 = vmatprep.subr.mxu0 0.0
  %3278 = vmatpush2.xpose.msra.mxu0 0.0
  %3279 = vmatprep.subr.mxu0 0.0
  %3280 = vmatpush2.xpose.msra.mxu0 0.0
  %3281 = vmatprep.subr.mxu0 0.0
  %3282 = vmatpush2.xpose.msra.mxu0 0.0
  %3283 = vmatprep.subr.mxu0 0.0
  %3284 = vmatpush2.xpose.msra.mxu0 0.0
  %3285 = vmatprep.subr.mxu0 0.0
  %3286 = vmatpush2.xpose.msra.mxu0 0.0
  %3287 = vmatprep.mubr.f32.mxu0 0.0
  %3288 = vmatmul.mubr.f32.gmra.mxu0 %v432
  %v3289 = vpop.f32.mrf.mxu0
  %v3290 = vadd.f32 0.0, %v3289
  %v3291 = vpop.f32.mrf.mxu0
  %3292 = vdwg.mxu0
  %v3293 = vmul.f32 %v3290, 0.088388346
  %v3294 = vsel %vm1123, %v3293, -inf
  %3295 = vmax.xlane.f32.xlu0 %v3294
  %v3296 = vpop.xlane.xlu0 %3295
  %v3297 = vsub.f32 %v3293, %v3296
  %v3298 = vmul.f32 %v3297, 1.442695
  %v3299 = vpow.pop %v3298
  %v3300 = vsel %vm1123, %v3299, 0.0
  %3301 = vadd.xlane.f32.xlu0 %v3300
  %v3302 = vpop.xlane.xlu0 %3301
  %v3303 = vrcp.pop %v3302
  %v3304 = vmul.f32 %v3299, %v3303
  %v3306 = vsel %vm1123, %v3304, 0
  %3308 = vmatprep.subr.mxu0 0.0
  %3309 = vmatpush1.msra.mxu0 0.0
  %3310 = vmatprep.subr.mxu0 0.0
  %3311 = vmatpush1.msra.mxu0 0.0
  %3312 = vmatprep.subr.mxu0 0.0
  %3313 = vmatpush1.msra.mxu0 0.0
  %3314 = vmatprep.subr.mxu0 0.0
  %3315 = vmatpush1.msra.mxu0 0.0
  %3316 = vmatprep.subr.mxu0 0.0
  %3317 = vmatpush1.msra.mxu0 0.0
  %3318 = vmatprep.subr.mxu0 0.0
  %3319 = vmatpush1.msra.mxu0 0.0
  %3320 = vmatprep.subr.mxu0 0.0
  %3321 = vmatpush1.msra.mxu0 0.0
  %3322 = vmatprep.subr.mxu0 0.0
  %3323 = vmatpush1.msra.mxu0 0.0
  %3324 = vmatprep.subr.mxu0 0.0
  %3325 = vmatpush1.msra.mxu0 0.0
  %3326 = vmatprep.subr.mxu0 0.0
  %3327 = vmatpush1.msra.mxu0 0.0
  %3328 = vmatprep.subr.mxu0 0.0
  %3329 = vmatpush1.msra.mxu0 0.0
  %3330 = vmatprep.subr.mxu0 0.0
  %3331 = vmatpush1.msra.mxu0 0.0
  %3332 = vmatprep.subr.mxu0 0.0
  %3333 = vmatpush1.msra.mxu0 0.0
  %3334 = vmatprep.subr.mxu0 0.0
  %3335 = vmatpush1.msra.mxu0 0.0
  %3336 = vmatprep.subr.mxu0 0.0
  %3337 = vmatpush1.msra.mxu0 0.0
  %3338 = vmatprep.subr.mxu0 0.0
  %3339 = vmatpush1.msra.mxu0 %v1048
  %3340 = vmatprep.subr.mxu0 0.0
  %3341 = vmatpush2.msra.mxu0 0.0
  %3342 = vmatprep.subr.mxu0 0.0
  %3343 = vmatpush2.msra.mxu0 0.0
  %3344 = vmatprep.subr.mxu0 0.0
  %3345 = vmatpush2.msra.mxu0 0.0
  %3346 = vmatprep.subr.mxu0 0.0
  %3347 = vmatpush2.msra.mxu0 0.0
  %3348 = vmatprep.subr.mxu0 0.0
  %3349 = vmatpush2.msra.mxu0 0.0
  %3350 = vmatprep.subr.mxu0 0.0
  %3351 = vmatpush2.msra.mxu0 0.0
  %3352 = vmatprep.subr.mxu0 0.0
  %3353 = vmatpush2.msra.mxu0 0.0
  %3354 = vmatprep.subr.mxu0 0.0
  %3355 = vmatpush2.msra.mxu0 0.0
  %3356 = vmatprep.subr.mxu0 0.0
  %3357 = vmatpush2.msra.mxu0 0.0
  %3358 = vmatprep.subr.mxu0 0.0
  %3359 = vmatpush2.msra.mxu0 0.0
  %3360 = vmatprep.subr.mxu0 0.0
  %3361 = vmatpush2.msra.mxu0 0.0
  %3362 = vmatprep.subr.mxu0 0.0
  %3363 = vmatpush2.msra.mxu0 0.0
  %3364 = vmatprep.subr.mxu0 0.0
  %3365 = vmatpush2.msra.mxu0 0.0
  %3366 = vmatprep.subr.mxu0 0.0
  %3367 = vmatpush2.msra.mxu0 0.0
  %3368 = vmatprep.subr.mxu0 0.0
  %3369 = vmatpush2.msra.mxu0 0.0
  %3370 = vmatprep.subr.mxu0 0.0
  %3371 = vmatpush2.msra.mxu0 0.0
  %3372 = vmatprep.mubr.f32.mxu0 0.0
  %3373 = vmatmul.mubr.f32.gmra.mxu0 %v3306
  %v3374 = vpop.f32.mrf.mxu0
  %v3375 = vadd.f32 0.0, %v3374
  %v3376 = vpop.f32.mrf.mxu0
  %3377 = vdwg.mxu0
  %3378 = vmatprep.subr.mxu0 0.0
  %3379 = vmatpush1.xpose.msra.mxu0 0.0
  %3380 = vmatprep.subr.mxu0 0.0
  %3381 = vmatpush1.xpose.msra.mxu0 0.0
  %3382 = vmatprep.subr.mxu0 0.0
  %3383 = vmatpush1.xpose.msra.mxu0 0.0
  %3384 = vmatprep.subr.mxu0 0.0
  %3385 = vmatpush1.xpose.msra.mxu0 0.0
  %3386 = vmatprep.subr.mxu0 0.0
  %3387 = vmatpush1.xpose.msra.mxu0 0.0
  %3388 = vmatprep.subr.mxu0 0.0
  %3389 = vmatpush1.xpose.msra.mxu0 0.0
  %3390 = vmatprep.subr.mxu0 0.0
  %3391 = vmatpush1.xpose.msra.mxu0 0.0
  %3392 = vmatprep.subr.mxu0 0.0
  %3393 = vmatpush1.xpose.msra.mxu0 0.0
  %3394 = vmatprep.subr.mxu0 0.0
  %3395 = vmatpush1.xpose.msra.mxu0 0.0
  %3396 = vmatprep.subr.mxu0 0.0
  %3397 = vmatpush1.xpose.msra.mxu0 0.0
  %3398 = vmatprep.subr.mxu0 0.0
  %3399 = vmatpush1.xpose.msra.mxu0 0.0
  %3400 = vmatprep.subr.mxu0 0.0
  %3401 = vmatpush1.xpose.msra.mxu0 0.0
  %3402 = vmatprep.subr.mxu0 0.0
  %3403 = vmatpush1.xpose.msra.mxu0 0.0
  %3404 = vmatprep.subr.mxu0 0.0
  %3405 = vmatpush1.xpose.msra.mxu0 0.0
  %3406 = vmatprep.subr.mxu0 0.0
  %3407 = vmatpush1.xpose.msra.mxu0 0.0
  %3408 = vmatprep.subr.mxu0 0.0
  %3409 = vmatpush1.xpose.msra.mxu0 %v742
  %3410 = vmatprep.subr.mxu0 0.0
  %3411 = vmatpush2.xpose.msra.mxu0 0.0
  %3412 = vmatprep.subr.mxu0 0.0
  %3413 = vmatpush2.xpose.msra.mxu0 0.0
  %3414 = vmatprep.subr.mxu0 0.0
  %3415 = vmatpush2.xpose.msra.mxu0 0.0
  %3416 = vmatprep.subr.mxu0 0.0
  %3417 = vmatpush2.xpose.msra.mxu0 0.0
  %3418 = vmatprep.subr.mxu0 0.0
  %3419 = vmatpush2.xpose.msra.mxu0 0.0
  %3420 = vmatprep.subr.mxu0 0.0
  %3421 = vmatpush2.xpose.msra.mxu0 0.0
  %3422 = vmatprep.subr.mxu0 0.0
  %3423 = vmatpush2.xpose.msra.mxu0 0.0
  %3424 = vmatprep.subr.mxu0 0.0
  %3425 = vmatpush2.xpose.msra.mxu0 0.0
  %3426 = vmatprep.subr.mxu0 0.0
  %3427 = vmatpush2.xpose.msra.mxu0 0.0
  %3428 = vmatprep.subr.mxu0 0.0
  %3429 = vmatpush2.xpose.msra.mxu0 0.0
  %3430 = vmatprep.subr.mxu0 0.0
  %3431 = vmatpush2.xpose.msra.mxu0 0.0
  %3432 = vmatprep.subr.mxu0 0.0
  %3433 = vmatpush2.xpose.msra.mxu0 0.0
  %3434 = vmatprep.subr.mxu0 0.0
  %3435 = vmatpush2.xpose.msra.mxu0 0.0
  %3436 = vmatprep.subr.mxu0 0.0
  %3437 = vmatpush2.xpose.msra.mxu0 0.0
  %3438 = vmatprep.subr.mxu0 0.0
  %3439 = vmatpush2.xpose.msra.mxu0 0.0
  %3440 = vmatprep.subr.mxu0 0.0
  %3441 = vmatpush2.xpose.msra.mxu0 0.0
  %3442 = vmatprep.mubr.f32.mxu0 0.0
  %3443 = vmatmul.mubr.f32.gmra.mxu0 %v434
  %v3444 = vpop.f32.mrf.mxu0
  %v3445 = vadd.f32 0.0, %v3444
  %v3446 = vpop.f32.mrf.mxu0
  %3447 = vdwg.mxu0
  %v3448 = vmul.f32 %v3445, 0.088388346
  %v3449 = vsel %vm1123, %v3448, -inf
  %3450 = vmax.xlane.f32.xlu0 %v3449
  %v3451 = vpop.xlane.xlu0 %3450
  %v3452 = vsub.f32 %v3448, %v3451
  %v3453 = vmul.f32 %v3452, 1.442695
  %v3454 = vpow.pop %v3453
  %v3455 = vsel %vm1123, %v3454, 0.0
  %3456 = vadd.xlane.f32.xlu0 %v3455
  %v3457 = vpop.xlane.xlu0 %3456
  %v3458 = vrcp.pop %v3457
  %v3459 = vmul.f32 %v3454, %v3458
  %v3461 = vsel %vm1123, %v3459, 0
  %3463 = vmatprep.subr.mxu0 0.0
  %3464 = vmatpush1.msra.mxu0 0.0
  %3465 = vmatprep.subr.mxu0 0.0
  %3466 = vmatpush1.msra.mxu0 0.0
  %3467 = vmatprep.subr.mxu0 0.0
  %3468 = vmatpush1.msra.mxu0 0.0
  %3469 = vmatprep.subr.mxu0 0.0
  %3470 = vmatpush1.msra.mxu0 0.0
  %3471 = vmatprep.subr.mxu0 0.0
  %3472 = vmatpush1.msra.mxu0 0.0
  %3473 = vmatprep.subr.mxu0 0.0
  %3474 = vmatpush1.msra.mxu0 0.0
  %3475 = vmatprep.subr.mxu0 0.0
  %3476 = vmatpush1.msra.mxu0 0.0
  %3477 = vmatprep.subr.mxu0 0.0
  %3478 = vmatpush1.msra.mxu0 0.0
  %3479 = vmatprep.subr.mxu0 0.0
  %3480 = vmatpush1.msra.mxu0 0.0
  %3481 = vmatprep.subr.mxu0 0.0
  %3482 = vmatpush1.msra.mxu0 0.0
  %3483 = vmatprep.subr.mxu0 0.0
  %3484 = vmatpush1.msra.mxu0 0.0
  %3485 = vmatprep.subr.mxu0 0.0
  %3486 = vmatpush1.msra.mxu0 0.0
  %3487 = vmatprep.subr.mxu0 0.0
  %3488 = vmatpush1.msra.mxu0 0.0
  %3489 = vmatprep.subr.mxu0 0.0
  %3490 = vmatpush1.msra.mxu0 0.0
  %3491 = vmatprep.subr.mxu0 0.0
  %3492 = vmatpush1.msra.mxu0 0.0
  %3493 = vmatprep.subr.mxu0 0.0
  %3494 = vmatpush1.msra.mxu0 %v1050
  %3495 = vmatprep.subr.mxu0 0.0
  %3496 = vmatpush2.msra.mxu0 0.0
  %3497 = vmatprep.subr.mxu0 0.0
  %3498 = vmatpush2.msra.mxu0 0.0
  %3499 = vmatprep.subr.mxu0 0.0
  %3500 = vmatpush2.msra.mxu0 0.0
  %3501 = vmatprep.subr.mxu0 0.0
  %3502 = vmatpush2.msra.mxu0 0.0
  %3503 = vmatprep.subr.mxu0 0.0
  %3504 = vmatpush2.msra.mxu0 0.0
  %3505 = vmatprep.subr.mxu0 0.0
  %3506 = vmatpush2.msra.mxu0 0.0
  %3507 = vmatprep.subr.mxu0 0.0
  %3508 = vmatpush2.msra.mxu0 0.0
  %3509 = vmatprep.subr.mxu0 0.0
  %3510 = vmatpush2.msra.mxu0 0.0
  %3511 = vmatprep.subr.mxu0 0.0
  %3512 = vmatpush2.msra.mxu0 0.0
  %3513 = vmatprep.subr.mxu0 0.0
  %3514 = vmatpush2.msra.mxu0 0.0
  %3515 = vmatprep.subr.mxu0 0.0
  %3516 = vmatpush2.msra.mxu0 0.0
  %3517 = vmatprep.subr.mxu0 0.0
  %3518 = vmatpush2.msra.mxu0 0.0
  %3519 = vmatprep.subr.mxu0 0.0
  %3520 = vmatpush2.msra.mxu0 0.0
  %3521 = vmatprep.subr.mxu0 0.0
  %3522 = vmatpush2.msra.mxu0 0.0
  %3523 = vmatprep.subr.mxu0 0.0
  %3524 = vmatpush2.msra.mxu0 0.0
  %3525 = vmatprep.subr.mxu0 0.0
  %3526 = vmatpush2.msra.mxu0 0.0
  %3527 = vmatprep.mubr.f32.mxu0 0.0
  %3528 = vmatmul.mubr.f32.gmra.mxu0 %v3461
  %v3529 = vpop.f32.mrf.mxu0
  %v3530 = vadd.f32 0.0, %v3529
  %v3531 = vpop.f32.mrf.mxu0
  %3532 = vdwg.mxu0
  %3533 = vrot.lane.b32.xlu0 %v1289, 8
  %v3534 = vpop.permute.xlu0 %3533
  %3536 = vrot.lane.b32.xlu0 %v1444, 16
  %v3537 = vpop.permute.xlu0 %3536
  %3539 = vrot.lane.b32.xlu0 %v1599, 24
  %v3540 = vpop.permute.xlu0 %3539
  %3542 = vrot.lane.b32.xlu0 %v1754, 32
  %v3543 = vpop.permute.xlu0 %3542
  %3545 = vrot.lane.b32.xlu0 %v1909, 40
  %v3546 = vpop.permute.xlu0 %3545
  %3548 = vrot.lane.b32.xlu0 %v2064, 48
  %v3549 = vpop.permute.xlu0 %3548
  %3551 = vrot.lane.b32.xlu0 %v2219, 56
  %v3552 = vpop.permute.xlu0 %3551
  %3554 = vrot.lane.b32.xlu0 %v2374, 64
  %v3555 = vpop.permute.xlu0 %3554
  %3557 = vrot.lane.b32.xlu0 %v2529, 72
  %v3558 = vpop.permute.xlu0 %3557
  %3560 = vrot.lane.b32.xlu0 %v2684, 80
  %v3561 = vpop.permute.xlu0 %3560
  %3563 = vrot.lane.b32.xlu0 %v2839, 88
  %v3564 = vpop.permute.xlu0 %3563
  %3566 = vrot.lane.b32.xlu0 %v2994, 96
  %v3567 = vpop.permute.xlu0 %3566
  %3569 = vrot.lane.b32.xlu0 %v3149, 104
  %v3570 = vpop.permute.xlu0 %3569
  %3572 = vrot.lane.b32.xlu0 %v3304, 112
  %v3573 = vpop.permute.xlu0 %3572
  %3575 = vrot.lane.b32.xlu0 %v3459, 120
  %v3576 = vpop.permute.xlu0 %3575
  %v3578 = vsel %vm1123, %v1134, %v3534
  %vm3579 = vcmask 130048
  %v3580 = vsel %vm3579, %v3578, %v3537
  %vm3581 = vcmask 195584
  %v3582 = vsel %vm3581, %v3580, %v3540
  %vm3583 = vcmask 261120
  %v3584 = vsel %vm3583, %v3582, %v3543
  %vm3585 = vcmask 326656
  %v3586 = vsel %vm3585, %v3584, %v3546
  %vm3587 = vcmask 392192
  %v3588 = vsel %vm3587, %v3586, %v3549
  %vm3589 = vcmask 457728
  %v3590 = vsel %vm3589, %v3588, %v3552
  %vm3591 = vcmask 523264
  %v3592 = vsel %vm3591, %v3590, %v3555
  %vm3593 = vcmask 588800
  %v3594 = vsel %vm3593, %v3592, %v3558
  %vm3595 = vcmask 654336
  %v3596 = vsel %vm3595, %v3594, %v3561
  %vm3597 = vcmask 719872
  %v3598 = vsel %vm3597, %v3596, %v3564
  %vm3599 = vcmask 785408
  %v3600 = vsel %vm3599, %v3598, %v3567
  %vm3601 = vcmask 850944
  %v3602 = vsel %vm3601, %v3600, %v3570
  %vm3603 = vcmask 916480
  %v3604 = vsel %vm3603, %v3602, %v3573
  %vm3605 = vcmask 982016
  %v3606 = vsel %vm3605, %v3604, %v3576
  %3607 = vst [vmem:[%s6] sm:$0xff] %v3606
  %v3608 = vld [vmem:[%s2] sm:$0x7f]
  %v3609 = vld [vmem:[%s2 + $0x8] sm:$0x7f]
  %v3610 = vld [vmem:[%s2 + $0x10] sm:$0x7f]
  %v3611 = vld [vmem:[%s2 + $0x18] sm:$0x7f]
  %v3612 = vld [vmem:[%s2 + $0x20] sm:$0x7f]
  %v3613 = vld [vmem:[%s2 + $0x28] sm:$0x7f]
  %v3614 = vld [vmem:[%s2 + $0x30] sm:$0x7f]
  %v3615 = vld [vmem:[%s2 + $0x38] sm:$0x7f]
  %3616 = vmatprep.subr.mxu0 0.0
  %3617 = vmatpush1.xpose.msra.mxu0 0.0
  %3618 = vmatprep.subr.mxu0 0.0
  %3619 = vmatpush1.xpose.msra.mxu0 0.0
  %3620 = vmatprep.subr.mxu0 0.0
  %3621 = vmatpush1.xpose.msra.mxu0 0.0
  %3622 = vmatprep.subr.mxu0 0.0
  %3623 = vmatpush1.xpose.msra.mxu0 0.0
  %3624 = vmatprep.subr.mxu0 0.0
  %3625 = vmatpush1.xpose.msra.mxu0 0.0
  %3626 = vmatprep.subr.mxu0 0.0
  %3627 = vmatpush1.xpose.msra.mxu0 0.0
  %3628 = vmatprep.subr.mxu0 0.0
  %3629 = vmatpush1.xpose.msra.mxu0 0.0
  %3630 = vmatprep.subr.mxu0 0.0
  %3631 = vmatpush1.xpose.msra.mxu0 0.0
  %3632 = vmatprep.subr.mxu0 0.0
  %3633 = vmatpush1.xpose.msra.mxu0 0.0
  %3634 = vmatprep.subr.mxu0 0.0
  %3635 = vmatpush1.xpose.msra.mxu0 0.0
  %3636 = vmatprep.subr.mxu0 0.0
  %3637 = vmatpush1.xpose.msra.mxu0 0.0
  %3638 = vmatprep.subr.mxu0 0.0
  %3639 = vmatpush1.xpose.msra.mxu0 0.0
  %3640 = vmatprep.subr.mxu0 0.0
  %3641 = vmatpush1.xpose.msra.mxu0 0.0
  %3642 = vmatprep.subr.mxu0 0.0
  %3643 = vmatpush1.xpose.msra.mxu0 0.0
  %3644 = vmatprep.subr.mxu0 0.0
  %3645 = vmatpush1.xpose.msra.mxu0 0.0
  %3646 = vmatprep.subr.mxu0 %v3609
  %3647 = vmatpush1.xpose.msra.mxu0 %v3608
  %3648 = vmatprep.subr.mxu0 0.0
  %3649 = vmatpush2.xpose.msra.mxu0 0.0
  %3650 = vmatprep.subr.mxu0 0.0
  %3651 = vmatpush2.xpose.msra.mxu0 0.0
  %3652 = vmatprep.subr.mxu0 0.0
  %3653 = vmatpush2.xpose.msra.mxu0 0.0
  %3654 = vmatprep.subr.mxu0 0.0
  %3655 = vmatpush2.xpose.msra.mxu0 0.0
  %3656 = vmatprep.subr.mxu0 0.0
  %3657 = vmatpush2.xpose.msra.mxu0 0.0
  %3658 = vmatprep.subr.mxu0 0.0
  %3659 = vmatpush2.xpose.msra.mxu0 0.0
  %3660 = vmatprep.subr.mxu0 0.0
  %3661 = vmatpush2.xpose.msra.mxu0 0.0
  %3662 = vmatprep.subr.mxu0 0.0
  %3663 = vmatpush2.xpose.msra.mxu0 0.0
  %3664 = vmatprep.subr.mxu0 0.0
  %3665 = vmatpush2.xpose.msra.mxu0 0.0
  %3666 = vmatprep.subr.mxu0 0.0
  %3667 = vmatpush2.xpose.msra.mxu0 0.0
  %3668 = vmatprep.subr.mxu0 0.0
  %3669 = vmatpush2.xpose.msra.mxu0 0.0
  %3670 = vmatprep.subr.mxu0 0.0
  %3671 = vmatpush2.xpose.msra.mxu0 0.0
  %3672 = vmatprep.subr.mxu0 0.0
  %3673 = vmatpush2.xpose.msra.mxu0 0.0
  %3674 = vmatprep.subr.mxu0 0.0
  %3675 = vmatpush2.xpose.msra.mxu0 0.0
  %3676 = vmatprep.subr.mxu0 0.0
  %3677 = vmatpush2.xpose.msra.mxu0 0.0
  %3678 = vmatprep.subr.mxu0 0.0
  %3679 = vmatpush2.xpose.msra.mxu0 0.0
  %3680 = vmatprep.mubr.f32.mxu0 %v1360
  %3681 = vmatmul.mubr.f32.gmra.mxu0 %v1205
  %v3682 = vpop.f32.mrf.mxu0
  %v3683 = vadd.f32 %v22, %v3682
  %v3684 = vpop.f32.mrf.mxu0
  %3685 = vmatprep.mubr.f32.mxu0 %v2600
  %3686 = vmatmul.mubr.f32.gmra.mxu0 %v2445
  %v3687 = vpop.f32.mrf.mxu0
  %v3688 = vadd.f32 %v23, %v3687
  %v3689 = vpop.f32.mrf.mxu0
  %3690 = vdwg.mxu0
  %3691 = vmatprep.subr.mxu0 0.0
  %3692 = vmatpush1.xpose.msra.mxu0 0.0
  %3693 = vmatprep.subr.mxu0 0.0
  %3694 = vmatpush1.xpose.msra.mxu0 0.0
  %3695 = vmatprep.subr.mxu0 0.0
  %3696 = vmatpush1.xpose.msra.mxu0 0.0
  %3697 = vmatprep.subr.mxu0 0.0
  %3698 = vmatpush1.xpose.msra.mxu0 0.0
  %3699 = vmatprep.subr.mxu0 0.0
  %3700 = vmatpush1.xpose.msra.mxu0 0.0
  %3701 = vmatprep.subr.mxu0 0.0
  %3702 = vmatpush1.xpose.msra.mxu0 0.0
  %3703 = vmatprep.subr.mxu0 0.0
  %3704 = vmatpush1.xpose.msra.mxu0 0.0
  %3705 = vmatprep.subr.mxu0 0.0
  %3706 = vmatpush1.xpose.msra.mxu0 0.0
  %3707 = vmatprep.subr.mxu0 0.0
  %3708 = vmatpush1.xpose.msra.mxu0 0.0
  %3709 = vmatprep.subr.mxu0 0.0
  %3710 = vmatpush1.xpose.msra.mxu0 0.0
  %3711 = vmatprep.subr.mxu0 0.0
  %3712 = vmatpush1.xpose.msra.mxu0 0.0
  %3713 = vmatprep.subr.mxu0 0.0
  %3714 = vmatpush1.xpose.msra.mxu0 0.0
  %3715 = vmatprep.subr.mxu0 0.0
  %3716 = vmatpush1.xpose.msra.mxu0 0.0
  %3717 = vmatprep.subr.mxu0 0.0
  %3718 = vmatpush1.xpose.msra.mxu0 0.0
  %3719 = vmatprep.subr.mxu0 0.0
  %3720 = vmatpush1.xpose.msra.mxu0 0.0
  %3721 = vmatprep.subr.mxu0 %v3611
  %3722 = vmatpush1.xpose.msra.mxu0 %v3610
  %3723 = vmatprep.subr.mxu0 0.0
  %3724 = vmatpush2.xpose.msra.mxu0 0.0
  %3725 = vmatprep.subr.mxu0 0.0
  %3726 = vmatpush2.xpose.msra.mxu0 0.0
  %3727 = vmatprep.subr.mxu0 0.0
  %3728 = vmatpush2.xpose.msra.mxu0 0.0
  %3729 = vmatprep.subr.mxu0 0.0
  %3730 = vmatpush2.xpose.msra.mxu0 0.0
  %3731 = vmatprep.subr.mxu0 0.0
  %3732 = vmatpush2.xpose.msra.mxu0 0.0
  %3733 = vmatprep.subr.mxu0 0.0
  %3734 = vmatpush2.xpose.msra.mxu0 0.0
  %3735 = vmatprep.subr.mxu0 0.0
  %3736 = vmatpush2.xpose.msra.mxu0 0.0
  %3737 = vmatprep.subr.mxu0 0.0
  %3738 = vmatpush2.xpose.msra.mxu0 0.0
  %3739 = vmatprep.subr.mxu0 0.0
  %3740 = vmatpush2.xpose.msra.mxu0 0.0
  %3741 = vmatprep.subr.mxu0 0.0
  %3742 = vmatpush2.xpose.msra.mxu0 0.0
  %3743 = vmatprep.subr.mxu0 0.0
  %3744 = vmatpush2.xpose.msra.mxu0 0.0
  %3745 = vmatprep.subr.mxu0 0.0
  %3746 = vmatpush2.xpose.msra.mxu0 0.0
  %3747 = vmatprep.subr.mxu0 0.0
  %3748 = vmatpush2.xpose.msra.mxu0 0.0
  %3749 = vmatprep.subr.mxu0 0.0
  %3750 = vmatpush2.xpose.msra.mxu0 0.0
  %3751 = vmatprep.subr.mxu0 0.0
  %3752 = vmatpush2.xpose.msra.mxu0 0.0
  %3753 = vmatprep.subr.mxu0 0.0
  %3754 = vmatpush2.xpose.msra.mxu0 0.0
  %3755 = vmatprep.mubr.f32.mxu0 %v1670
  %3756 = vmatmul.mubr.f32.gmra.mxu0 %v1515
  %v3757 = vpop.f32.mrf.mxu0
  %v3758 = vadd.f32 %v3683, %v3757
  %v3759 = vpop.f32.mrf.mxu0
  %3760 = vmatprep.mubr.f32.mxu0 %v2910
  %3761 = vmatmul.mubr.f32.gmra.mxu0 %v2755
  %v3762 = vpop.f32.mrf.mxu0
  %v3763 = vadd.f32 %v3688, %v3762
  %v3764 = vpop.f32.mrf.mxu0
  %3765 = vdwg.mxu0
  %3766 = vmatprep.subr.mxu0 0.0
  %3767 = vmatpush1.xpose.msra.mxu0 0.0
  %3768 = vmatprep.subr.mxu0 0.0
  %3769 = vmatpush1.xpose.msra.mxu0 0.0
  %3770 = vmatprep.subr.mxu0 0.0
  %3771 = vmatpush1.xpose.msra.mxu0 0.0
  %3772 = vmatprep.subr.mxu0 0.0
  %3773 = vmatpush1.xpose.msra.mxu0 0.0
  %3774 = vmatprep.subr.mxu0 0.0
  %3775 = vmatpush1.xpose.msra.mxu0 0.0
  %3776 = vmatprep.subr.mxu0 0.0
  %3777 = vmatpush1.xpose.msra.mxu0 0.0
  %3778 = vmatprep.subr.mxu0 0.0
  %3779 = vmatpush1.xpose.msra.mxu0 0.0
  %3780 = vmatprep.subr.mxu0 0.0
  %3781 = vmatpush1.xpose.msra.mxu0 0.0
  %3782 = vmatprep.subr.mxu0 0.0
  %3783 = vmatpush1.xpose.msra.mxu0 0.0
  %3784 = vmatprep.subr.mxu0 0.0
  %3785 = vmatpush1.xpose.msra.mxu0 0.0
  %3786 = vmatprep.subr.mxu0 0.0
  %3787 = vmatpush1.xpose.msra.mxu0 0.0
  %3788 = vmatprep.subr.mxu0 0.0
  %3789 = vmatpush1.xpose.msra.mxu0 0.0
  %3790 = vmatprep.subr.mxu0 0.0
  %3791 = vmatpush1.xpose.msra.mxu0 0.0
  %3792 = vmatprep.subr.mxu0 0.0
  %3793 = vmatpush1.xpose.msra.mxu0 0.0
  %3794 = vmatprep.subr.mxu0 0.0
  %3795 = vmatpush1.xpose.msra.mxu0 0.0
  %3796 = vmatprep.subr.mxu0 %v3613
  %3797 = vmatpush1.xpose.msra.mxu0 %v3612
  %3798 = vmatprep.subr.mxu0 0.0
  %3799 = vmatpush2.xpose.msra.mxu0 0.0
  %3800 = vmatprep.subr.mxu0 0.0
  %3801 = vmatpush2.xpose.msra.mxu0 0.0
  %3802 = vmatprep.subr.mxu0 0.0
  %3803 = vmatpush2.xpose.msra.mxu0 0.0
  %3804 = vmatprep.subr.mxu0 0.0
  %3805 = vmatpush2.xpose.msra.mxu0 0.0
  %3806 = vmatprep.subr.mxu0 0.0
  %3807 = vmatpush2.xpose.msra.mxu0 0.0
  %3808 = vmatprep.subr.mxu0 0.0
  %3809 = vmatpush2.xpose.msra.mxu0 0.0
  %3810 = vmatprep.subr.mxu0 0.0
  %3811 = vmatpush2.xpose.msra.mxu0 0.0
  %3812 = vmatprep.subr.mxu0 0.0
  %3813 = vmatpush2.xpose.msra.mxu0 0.0
  %3814 = vmatprep.subr.mxu0 0.0
  %3815 = vmatpush2.xpose.msra.mxu0 0.0
  %3816 = vmatprep.subr.mxu0 0.0
  %3817 = vmatpush2.xpose.msra.mxu0 0.0
  %3818 = vmatprep.subr.mxu0 0.0
  %3819 = vmatpush2.xpose.msra.mxu0 0.0
  %3820 = vmatprep.subr.mxu0 0.0
  %3821 = vmatpush2.xpose.msra.mxu0 0.0
  %3822 = vmatprep.subr.mxu0 0.0
  %3823 = vmatpush2.xpose.msra.mxu0 0.0
  %3824 = vmatprep.subr.mxu0 0.0
  %3825 = vmatpush2.xpose.msra.mxu0 0.0
  %3826 = vmatprep.subr.mxu0 0.0
  %3827 = vmatpush2.xpose.msra.mxu0 0.0
  %3828 = vmatprep.subr.mxu0 0.0
  %3829 = vmatpush2.xpose.msra.mxu0 0.0
  %3830 = vmatprep.mubr.f32.mxu0 %v1980
  %3831 = vmatmul.mubr.f32.gmra.mxu0 %v1825
  %v3832 = vpop.f32.mrf.mxu0
  %v3833 = vadd.f32 %v3758, %v3832
  %v3834 = vpop.f32.mrf.mxu0
  %3835 = vmatprep.mubr.f32.mxu0 %v3220
  %3836 = vmatmul.mubr.f32.gmra.mxu0 %v3065
  %v3837 = vpop.f32.mrf.mxu0
  %v3838 = vadd.f32 %v3763, %v3837
  %v3839 = vpop.f32.mrf.mxu0
  %3840 = vdwg.mxu0
  %3841 = vmatprep.subr.mxu0 0.0
  %3842 = vmatpush1.xpose.msra.mxu0 0.0
  %3843 = vmatprep.subr.mxu0 0.0
  %3844 = vmatpush1.xpose.msra.mxu0 0.0
  %3845 = vmatprep.subr.mxu0 0.0
  %3846 = vmatpush1.xpose.msra.mxu0 0.0
  %3847 = vmatprep.subr.mxu0 0.0
  %3848 = vmatpush1.xpose.msra.mxu0 0.0
  %3849 = vmatprep.subr.mxu0 0.0
  %3850 = vmatpush1.xpose.msra.mxu0 0.0
  %3851 = vmatprep.subr.mxu0 0.0
  %3852 = vmatpush1.xpose.msra.mxu0 0.0
  %3853 = vmatprep.subr.mxu0 0.0
  %3854 = vmatpush1.xpose.msra.mxu0 0.0
  %3855 = vmatprep.subr.mxu0 0.0
  %3856 = vmatpush1.xpose.msra.mxu0 0.0
  %3857 = vmatprep.subr.mxu0 0.0
  %3858 = vmatpush1.xpose.msra.mxu0 0.0
  %3859 = vmatprep.subr.mxu0 0.0
  %3860 = vmatpush1.xpose.msra.mxu0 0.0
  %3861 = vmatprep.subr.mxu0 0.0
  %3862 = vmatpush1.xpose.msra.mxu0 0.0
  %3863 = vmatprep.subr.mxu0 0.0
  %3864 = vmatpush1.xpose.msra.mxu0 0.0
  %3865 = vmatprep.subr.mxu0 0.0
  %3866 = vmatpush1.xpose.msra.mxu0 0.0
  %3867 = vmatprep.subr.mxu0 0.0
  %3868 = vmatpush1.xpose.msra.mxu0 0.0
  %3869 = vmatprep.subr.mxu0 0.0
  %3870 = vmatpush1.xpose.msra.mxu0 0.0
  %3871 = vmatprep.subr.mxu0 %v3615
  %3872 = vmatpush1.xpose.msra.mxu0 %v3614
  %3873 = vmatprep.subr.mxu0 0.0
  %3874 = vmatpush2.xpose.msra.mxu0 0.0
  %3875 = vmatprep.subr.mxu0 0.0
  %3876 = vmatpush2.xpose.msra.mxu0 0.0
  %3877 = vmatprep.subr.mxu0 0.0
  %3878 = vmatpush2.xpose.msra.mxu0 0.0
  %3879 = vmatprep.subr.mxu0 0.0
  %3880 = vmatpush2.xpose.msra.mxu0 0.0
  %3881 = vmatprep.subr.mxu0 0.0
  %3882 = vmatpush2.xpose.msra.mxu0 0.0
  %3883 = vmatprep.subr.mxu0 0.0
  %3884 = vmatpush2.xpose.msra.mxu0 0.0
  %3885 = vmatprep.subr.mxu0 0.0
  %3886 = vmatpush2.xpose.msra.mxu0 0.0
  %3887 = vmatprep.subr.mxu0 0.0
  %3888 = vmatpush2.xpose.msra.mxu0 0.0
  %3889 = vmatprep.subr.mxu0 0.0
  %3890 = vmatpush2.xpose.msra.mxu0 0.0
  %3891 = vmatprep.subr.mxu0 0.0
  %3892 = vmatpush2.xpose.msra.mxu0 0.0
  %3893 = vmatprep.subr.mxu0 0.0
  %3894 = vmatpush2.xpose.msra.mxu0 0.0
  %3895 = vmatprep.subr.mxu0 0.0
  %3896 = vmatpush2.xpose.msra.mxu0 0.0
  %3897 = vmatprep.subr.mxu0 0.0
  %3898 = vmatpush2.xpose.msra.mxu0 0.0
  %3899 = vmatprep.subr.mxu0 0.0
  %3900 = vmatpush2.xpose.msra.mxu0 0.0
  %3901 = vmatprep.subr.mxu0 0.0
  %3902 = vmatpush2.xpose.msra.mxu0 0.0
  %3903 = vmatprep.subr.mxu0 0.0
  %3904 = vmatpush2.xpose.msra.mxu0 0.0
  %3905 = vmatprep.mubr.f32.mxu0 %v2290
  %3906 = vmatmul.mubr.f32.gmra.mxu0 %v2135
  %v3907 = vpop.f32.mrf.mxu0
  %v3908 = vadd.f32 %v3833, %v3907
  %v3909 = vpop.f32.mrf.mxu0
  %3910 = vmatprep.mubr.f32.mxu0 %v3530
  %3911 = vmatmul.mubr.f32.gmra.mxu0 %v3375
  %v3912 = vpop.f32.mrf.mxu0
  %v3913 = vadd.f32 %v3838, %v3912
  %v3914 = vpop.f32.mrf.mxu0
  %3915 = vdwg.mxu0
  %v3916 = vsel %vm48, %v3908, 0.0
  %3917 = vadd.xlane.f32.xlu0 %v3916
  %v3918 = vpop.xlane.xlu0 %3917
  %v3919 = vsel %vm48, %v3913, 0.0
  %3920 = vadd.xlane.f32.xlu0 %v3919
  %v3921 = vpop.xlane.xlu0 %3920
  %v3922 = vrcp.pop 7.0
  %v3923 = vmul.f32 %v3918, %v3922
  %v3924 = vmul.f32 %v3921, %v3922
  %v3925 = vsub.f32 %v3908, %v3923
  %v3926 = vsub.f32 %v3913, %v3924
  %v3927 = vmul.f32 %v3925, %v3925
  %v3928 = vmul.f32 %v3926, %v3926
  %v3929 = vsel %vm48, %v3927, 0.0
  %3930 = vadd.xlane.f32.xlu0 %v3929
  %v3931 = vpop.xlane.xlu0 %3930
  %v3932 = vsel %vm48, %v3928, 0.0
  %3933 = vadd.xlane.f32.xlu0 %v3932
  %v3934 = vpop.xlane.xlu0 %3933
  %v3935 = vmul.f32 %v3931, %v3922
  %v3936 = vmul.f32 %v3934, %v3922
  %v3937 = vadd.f32 %v3935, 1e-05
  %v3938 = vadd.f32 %v3936, 1e-05
  %v3939 = vrsqrt.pop %v3937
  %v3940 = vrsqrt.pop %v3938
  %v3941 = vmul.f32 %v3925, %v3939
  %v3942 = vmul.f32 %v3926, %v3940
  %v3943 = vld [vmem:[%s3] sm:$0x7f]
  %v3944 = vld [vmem:[%s3 + $0x8] sm:$0x7f]
  %v3945 = vld [vmem:[%s3 + $0x10] sm:$0x7f]
  %v3946 = vld [vmem:[%s3 + $0x18] sm:$0x7f]
  %v3947 = vld [vmem:[%s3 + $0x20] sm:$0x7f]
  %v3948 = vld [vmem:[%s3 + $0x28] sm:$0x7f]
  %v3949 = vld [vmem:[%s3 + $0x30] sm:$0x7f]
  %v3950 = vld [vmem:[%s3 + $0x38] sm:$0x7f]
  %v3951 = vld [vmem:[%s3 + $0x40] sm:$0x7f]
  %v3952 = vld [vmem:[%s3 + $0x48] sm:$0x7f]
  %v3953 = vld [vmem:[%s3 + $0x50] sm:$0x7f]
  %v3954 = vld [vmem:[%s3 + $0x58] sm:$0x7f]
  %v3955 = vld [vmem:[%s3 + $0x60] sm:$0x7f]
  %v3956 = vld [vmem:[%s3 + $0x68] sm:$0x7f]
  %v3957 = vld [vmem:[%s3 + $0x70] sm:$0x7f]
  %v3958 = vld [vmem:[%s3 + $0x78] sm:$0x7f]
  %v3960 = vsel %vm48, %v3941, 0
  %v3963 = vsel %vm48, %v3942, 0
  %v3966 = vsel %vm55, %v3943, 0
  %v3969 = vsel %vm55, %v3944, 0
  %v3972 = vsel %vm55, %v3945, 0
  %v3975 = vsel %vm55, %v3946, 0
  %v3978 = vsel %vm55, %v3947, 0
  %v3981 = vsel %vm55, %v3948, 0
  %v3984 = vsel %vm55, %v3949, 0
  %v3987 = vsel %vm55, %v3950, 0
  %v3990 = vsel %vm55, %v3951, 0
  %v3993 = vsel %vm55, %v3952, 0
  %v3996 = vsel %vm55, %v3953, 0
  %v3999 = vsel %vm55, %v3954, 0
  %v4002 = vsel %vm55, %v3955, 0
  %v4005 = vsel %vm55, %v3956, 0
  %v4008 = vsel %vm55, %v3957, 0
  %v4011 = vsel %vm55, %v3958, 0
  %4013 = vmatprep.subr.mxu0 0.0
  %4014 = vmatpush1.msra.mxu0 0.0
  %4015 = vmatprep.subr.mxu0 0.0
  %4016 = vmatpush1.msra.mxu0 0.0
  %4017 = vmatprep.subr.mxu0 0.0
  %4018 = vmatpush1.msra.mxu0 0.0
  %4019 = vmatprep.subr.mxu0 0.0
  %4020 = vmatpush1.msra.mxu0 0.0
  %4021 = vmatprep.subr.mxu0 0.0
  %4022 = vmatpush1.msra.mxu0 0.0
  %4023 = vmatprep.subr.mxu0 0.0
  %4024 = vmatpush1.msra.mxu0 0.0
  %4025 = vmatprep.subr.mxu0 0.0
  %4026 = vmatpush1.msra.mxu0 0.0
  %4027 = vmatprep.subr.mxu0 0.0
  %4028 = vmatpush1.msra.mxu0 0.0
  %4029 = vmatprep.subr.mxu0 0.0
  %4030 = vmatpush1.msra.mxu0 0.0
  %4031 = vmatprep.subr.mxu0 0.0
  %4032 = vmatpush1.msra.mxu0 0.0
  %4033 = vmatprep.subr.mxu0 0.0
  %4034 = vmatpush1.msra.mxu0 0.0
  %4035 = vmatprep.subr.mxu0 0.0
  %4036 = vmatpush1.msra.mxu0 0.0
  %4037 = vmatprep.subr.mxu0 0.0
  %4038 = vmatpush1.msra.mxu0 0.0
  %4039 = vmatprep.subr.mxu0 0.0
  %4040 = vmatpush1.msra.mxu0 0.0
  %4041 = vmatprep.subr.mxu0 0.0
  %4042 = vmatpush1.msra.mxu0 0.0
  %4043 = vmatprep.subr.mxu0 %v3969
  %4044 = vmatpush1.msra.mxu0 %v3966
  %4045 = vmatprep.subr.mxu0 0.0
  %4046 = vmatpush2.msra.mxu0 0.0
  %4047 = vmatprep.subr.mxu0 0.0
  %4048 = vmatpush2.msra.mxu0 0.0
  %4049 = vmatprep.subr.mxu0 0.0
  %4050 = vmatpush2.msra.mxu0 0.0
  %4051 = vmatprep.subr.mxu0 0.0
  %4052 = vmatpush2.msra.mxu0 0.0
  %4053 = vmatprep.subr.mxu0 0.0
  %4054 = vmatpush2.msra.mxu0 0.0
  %4055 = vmatprep.subr.mxu0 0.0
  %4056 = vmatpush2.msra.mxu0 0.0
  %4057 = vmatprep.subr.mxu0 0.0
  %4058 = vmatpush2.msra.mxu0 0.0
  %4059 = vmatprep.subr.mxu0 0.0
  %4060 = vmatpush2.msra.mxu0 0.0
  %4061 = vmatprep.subr.mxu0 0.0
  %4062 = vmatpush2.msra.mxu0 0.0
  %4063 = vmatprep.subr.mxu0 0.0
  %4064 = vmatpush2.msra.mxu0 0.0
  %4065 = vmatprep.subr.mxu0 0.0
  %4066 = vmatpush2.msra.mxu0 0.0
  %4067 = vmatprep.subr.mxu0 0.0
  %4068 = vmatpush2.msra.mxu0 0.0
  %4069 = vmatprep.subr.mxu0 0.0
  %4070 = vmatpush2.msra.mxu0 0.0
  %4071 = vmatprep.subr.mxu0 0.0
  %4072 = vmatpush2.msra.mxu0 0.0
  %4073 = vmatprep.subr.mxu0 0.0
  %4074 = vmatpush2.msra.mxu0 0.0
  %4075 = vmatprep.subr.mxu0 0.0
  %4076 = vmatpush2.msra.mxu0 0.0
  %4077 = vmatprep.mubr.f32.mxu0 0.0
  %4078 = vmatmul.mubr.f32.gmra.mxu0 %v3960
  %v4079 = vpop.f32.mrf.mxu0
  %v4080 = vadd.f32 0.0, %v4079
  %v4081 = vpop.f32.mrf.mxu0
  %v4082 = vadd.f32 0.0, %v4081
  %4083 = vmatprep.mubr.f32.mxu0 0.0
  %4084 = vmatmul.mubr.f32.gmra.mxu0 %v3963
  %v4085 = vpop.f32.mrf.mxu0
  %v4086 = vadd.f32 0.0, %v4085
  %v4087 = vpop.f32.mrf.mxu0
  %v4088 = vadd.f32 0.0, %v4087
  %4089 = vdwg.mxu0
  %4090 = vmatprep.subr.mxu0 0.0
  %4091 = vmatpush1.msra.mxu0 0.0
  %4092 = vmatprep.subr.mxu0 0.0
  %4093 = vmatpush1.msra.mxu0 0.0
  %4094 = vmatprep.subr.mxu0 0.0
  %4095 = vmatpush1.msra.mxu0 0.0
  %4096 = vmatprep.subr.mxu0 0.0
  %4097 = vmatpush1.msra.mxu0 0.0
  %4098 = vmatprep.subr.mxu0 0.0
  %4099 = vmatpush1.msra.mxu0 0.0
  %4100 = vmatprep.subr.mxu0 0.0
  %4101 = vmatpush1.msra.mxu0 0.0
  %4102 = vmatprep.subr.mxu0 0.0
  %4103 = vmatpush1.msra.mxu0 0.0
  %4104 = vmatprep.subr.mxu0 0.0
  %4105 = vmatpush1.msra.mxu0 0.0
  %4106 = vmatprep.subr.mxu0 0.0
  %4107 = vmatpush1.msra.mxu0 0.0
  %4108 = vmatprep.subr.mxu0 0.0
  %4109 = vmatpush1.msra.mxu0 0.0
  %4110 = vmatprep.subr.mxu0 0.0
  %4111 = vmatpush1.msra.mxu0 0.0
  %4112 = vmatprep.subr.mxu0 0.0
  %4113 = vmatpush1.msra.mxu0 0.0
  %4114 = vmatprep.subr.mxu0 0.0
  %4115 = vmatpush1.msra.mxu0 0.0
  %4116 = vmatprep.subr.mxu0 0.0
  %4117 = vmatpush1.msra.mxu0 0.0
  %4118 = vmatprep.subr.mxu0 0.0
  %4119 = vmatpush1.msra.mxu0 0.0
  %4120 = vmatprep.subr.mxu0 %v3975
  %4121 = vmatpush1.msra.mxu0 %v3972
  %4122 = vmatprep.subr.mxu0 0.0
  %4123 = vmatpush2.msra.mxu0 0.0
  %4124 = vmatprep.subr.mxu0 0.0
  %4125 = vmatpush2.msra.mxu0 0.0
  %4126 = vmatprep.subr.mxu0 0.0
  %4127 = vmatpush2.msra.mxu0 0.0
  %4128 = vmatprep.subr.mxu0 0.0
  %4129 = vmatpush2.msra.mxu0 0.0
  %4130 = vmatprep.subr.mxu0 0.0
  %4131 = vmatpush2.msra.mxu0 0.0
  %4132 = vmatprep.subr.mxu0 0.0
  %4133 = vmatpush2.msra.mxu0 0.0
  %4134 = vmatprep.subr.mxu0 0.0
  %4135 = vmatpush2.msra.mxu0 0.0
  %4136 = vmatprep.subr.mxu0 0.0
  %4137 = vmatpush2.msra.mxu0 0.0
  %4138 = vmatprep.subr.mxu0 0.0
  %4139 = vmatpush2.msra.mxu0 0.0
  %4140 = vmatprep.subr.mxu0 0.0
  %4141 = vmatpush2.msra.mxu0 0.0
  %4142 = vmatprep.subr.mxu0 0.0
  %4143 = vmatpush2.msra.mxu0 0.0
  %4144 = vmatprep.subr.mxu0 0.0
  %4145 = vmatpush2.msra.mxu0 0.0
  %4146 = vmatprep.subr.mxu0 0.0
  %4147 = vmatpush2.msra.mxu0 0.0
  %4148 = vmatprep.subr.mxu0 0.0
  %4149 = vmatpush2.msra.mxu0 0.0
  %4150 = vmatprep.subr.mxu0 0.0
  %4151 = vmatpush2.msra.mxu0 0.0
  %4152 = vmatprep.subr.mxu0 0.0
  %4153 = vmatpush2.msra.mxu0 0.0
  %4154 = vmatprep.mubr.f32.mxu0 0.0
  %4155 = vmatmul.mubr.f32.gmra.mxu0 %v3960
  %v4156 = vpop.f32.mrf.mxu0
  %v4157 = vadd.f32 0.0, %v4156
  %v4158 = vpop.f32.mrf.mxu0
  %v4159 = vadd.f32 0.0, %v4158
  %4160 = vmatprep.mubr.f32.mxu0 0.0
  %4161 = vmatmul.mubr.f32.gmra.mxu0 %v3963
  %v4162 = vpop.f32.mrf.mxu0
  %v4163 = vadd.f32 0.0, %v4162
  %v4164 = vpop.f32.mrf.mxu0
  %v4165 = vadd.f32 0.0, %v4164
  %4166 = vdwg.mxu0
  %4167 = vmatprep.subr.mxu0 0.0
  %4168 = vmatpush1.msra.mxu0 0.0
  %4169 = vmatprep.subr.mxu0 0.0
  %4170 = vmatpush1.msra.mxu0 0.0
  %4171 = vmatprep.subr.mxu0 0.0
  %4172 = vmatpush1.msra.mxu0 0.0
  %4173 = vmatprep.subr.mxu0 0.0
  %4174 = vmatpush1.msra.mxu0 0.0
  %4175 = vmatprep.subr.mxu0 0.0
  %4176 = vmatpush1.msra.mxu0 0.0
  %4177 = vmatprep.subr.mxu0 0.0
  %4178 = vmatpush1.msra.mxu0 0.0
  %4179 = vmatprep.subr.mxu0 0.0
  %4180 = vmatpush1.msra.mxu0 0.0
  %4181 = vmatprep.subr.mxu0 0.0
  %4182 = vmatpush1.msra.mxu0 0.0
  %4183 = vmatprep.subr.mxu0 0.0
  %4184 = vmatpush1.msra.mxu0 0.0
  %4185 = vmatprep.subr.mxu0 0.0
  %4186 = vmatpush1.msra.mxu0 0.0
  %4187 = vmatprep.subr.mxu0 0.0
  %4188 = vmatpush1.msra.mxu0 0.0
  %4189 = vmatprep.subr.mxu0 0.0
  %4190 = vmatpush1.msra.mxu0 0.0
  %4191 = vmatprep.subr.mxu0 0.0
  %4192 = vmatpush1.msra.mxu0 0.0
  %4193 = vmatprep.subr.mxu0 0.0
  %4194 = vmatpush1.msra.mxu0 0.0
  %4195 = vmatprep.subr.mxu0 0.0
  %4196 = vmatpush1.msra.mxu0 0.0
  %4197 = vmatprep.subr.mxu0 %v3981
  %4198 = vmatpush1.msra.mxu0 %v3978
  %4199 = vmatprep.subr.mxu0 0.0
  %4200 = vmatpush2.msra.mxu0 0.0
  %4201 = vmatprep.subr.mxu0 0.0
  %4202 = vmatpush2.msra.mxu0 0.0
  %4203 = vmatprep.subr.mxu0 0.0
  %4204 = vmatpush2.msra.mxu0 0.0
  %4205 = vmatprep.subr.mxu0 0.0
  %4206 = vmatpush2.msra.mxu0 0.0
  %4207 = vmatprep.subr.mxu0 0.0
  %4208 = vmatpush2.msra.mxu0 0.0
  %4209 = vmatprep.subr.mxu0 0.0
  %4210 = vmatpush2.msra.mxu0 0.0
  %4211 = vmatprep.subr.mxu0 0.0
  %4212 = vmatpush2.msra.mxu0 0.0
  %4213 = vmatprep.subr.mxu0 0.0
  %4214 = vmatpush2.msra.mxu0 0.0
  %4215 = vmatprep.subr.mxu0 0.0
  %4216 = vmatpush2.msra.mxu0 0.0
  %4217 = vmatprep.subr.mxu0 0.0
  %4218 = vmatpush2.msra.mxu0 0.0
  %4219 = vmatprep.subr.mxu0 0.0
  %4220 = vmatpush2.msra.mxu0 0.0
  %4221 = vmatprep.subr.mxu0 0.0
  %4222 = vmatpush2.msra.mxu0 0.0
  %4223 = vmatprep.subr.mxu0 0.0
  %4224 = vmatpush2.msra.mxu0 0.0
  %4225 = vmatprep.subr.mxu0 0.0
  %4226 = vmatpush2.msra.mxu0 0.0
  %4227 = vmatprep.subr.mxu0 0.0
  %4228 = vmatpush2.msra.mxu0 0.0
  %4229 = vmatprep.subr.mxu0 0.0
  %4230 = vmatpush2.msra.mxu0 0.0
  %4231 = vmatprep.mubr.f32.mxu0 0.0
  %4232 = vmatmul.mubr.f32.gmra.mxu0 %v3960
  %v4233 = vpop.f32.mrf.mxu0
  %v4234 = vadd.f32 0.0, %v4233
  %v4235 = vpop.f32.mrf.mxu0
  %v4236 = vadd.f32 0.0, %v4235
  %4237 = vmatprep.mubr.f32.mxu0 0.0
  %4238 = vmatmul.mubr.f32.gmra.mxu0 %v3963
  %v4239 = vpop.f32.mrf.mxu0
  %v4240 = vadd.f32 0.0, %v4239
  %v4241 = vpop.f32.mrf.mxu0
  %v4242 = vadd.f32 0.0, %v4241
  %4243 = vdwg.mxu0
  %4244 = vmatprep.subr.mxu0 0.0
  %4245 = vmatpush1.msra.mxu0 0.0
  %4246 = vmatprep.subr.mxu0 0.0
  %4247 = vmatpush1.msra.mxu0 0.0
  %4248 = vmatprep.subr.mxu0 0.0
  %4249 = vmatpush1.msra.mxu0 0.0
  %4250 = vmatprep.subr.mxu0 0.0
  %4251 = vmatpush1.msra.mxu0 0.0
  %4252 = vmatprep.subr.mxu0 0.0
  %4253 = vmatpush1.msra.mxu0 0.0
  %4254 = vmatprep.subr.mxu0 0.0
  %4255 = vmatpush1.msra.mxu0 0.0
  %4256 = vmatprep.subr.mxu0 0.0
  %4257 = vmatpush1.msra.mxu0 0.0
  %4258 = vmatprep.subr.mxu0 0.0
  %4259 = vmatpush1.msra.mxu0 0.0
  %4260 = vmatprep.subr.mxu0 0.0
  %4261 = vmatpush1.msra.mxu0 0.0
  %4262 = vmatprep.subr.mxu0 0.0
  %4263 = vmatpush1.msra.mxu0 0.0
  %4264 = vmatprep.subr.mxu0 0.0
  %4265 = vmatpush1.msra.mxu0 0.0
  %4266 = vmatprep.subr.mxu0 0.0
  %4267 = vmatpush1.msra.mxu0 0.0
  %4268 = vmatprep.subr.mxu0 0.0
  %4269 = vmatpush1.msra.mxu0 0.0
  %4270 = vmatprep.subr.mxu0 0.0
  %4271 = vmatpush1.msra.mxu0 0.0
  %4272 = vmatprep.subr.mxu0 0.0
  %4273 = vmatpush1.msra.mxu0 0.0
  %4274 = vmatprep.subr.mxu0 %v3987
  %4275 = vmatpush1.msra.mxu0 %v3984
  %4276 = vmatprep.subr.mxu0 0.0
  %4277 = vmatpush2.msra.mxu0 0.0
  %4278 = vmatprep.subr.mxu0 0.0
  %4279 = vmatpush2.msra.mxu0 0.0
  %4280 = vmatprep.subr.mxu0 0.0
  %4281 = vmatpush2.msra.mxu0 0.0
  %4282 = vmatprep.subr.mxu0 0.0
  %4283 = vmatpush2.msra.mxu0 0.0
  %4284 = vmatprep.subr.mxu0 0.0
  %4285 = vmatpush2.msra.mxu0 0.0
  %4286 = vmatprep.subr.mxu0 0.0
  %4287 = vmatpush2.msra.mxu0 0.0
  %4288 = vmatprep.subr.mxu0 0.0
  %4289 = vmatpush2.msra.mxu0 0.0
  %4290 = vmatprep.subr.mxu0 0.0
  %4291 = vmatpush2.msra.mxu0 0.0
  %4292 = vmatprep.subr.mxu0 0.0
  %4293 = vmatpush2.msra.mxu0 0.0
  %4294 = vmatprep.subr.mxu0 0.0
  %4295 = vmatpush2.msra.mxu0 0.0
  %4296 = vmatprep.subr.mxu0 0.0
  %4297 = vmatpush2.msra.mxu0 0.0
  %4298 = vmatprep.subr.mxu0 0.0
  %4299 = vmatpush2.msra.mxu0 0.0
  %4300 = vmatprep.subr.mxu0 0.0
  %4301 = vmatpush2.msra.mxu0 0.0
  %4302 = vmatprep.subr.mxu0 0.0
  %4303 = vmatpush2.msra.mxu0 0.0
  %4304 = vmatprep.subr.mxu0 0.0
  %4305 = vmatpush2.msra.mxu0 0.0
  %4306 = vmatprep.subr.mxu0 0.0
  %4307 = vmatpush2.msra.mxu0 0.0
  %4308 = vmatprep.mubr.f32.mxu0 0.0
  %4309 = vmatmul.mubr.f32.gmra.mxu0 %v3960
  %v4310 = vpop.f32.mrf.mxu0
  %v4311 = vadd.f32 0.0, %v4310
  %v4312 = vpop.f32.mrf.mxu0
  %v4313 = vadd.f32 0.0, %v4312
  %4314 = vmatprep.mubr.f32.mxu0 0.0
  %4315 = vmatmul.mubr.f32.gmra.mxu0 %v3963
  %v4316 = vpop.f32.mrf.mxu0
  %v4317 = vadd.f32 0.0, %v4316
  %v4318 = vpop.f32.mrf.mxu0
  %v4319 = vadd.f32 0.0, %v4318
  %4320 = vdwg.mxu0
  %4321 = vmatprep.subr.mxu0 0.0
  %4322 = vmatpush1.msra.mxu0 0.0
  %4323 = vmatprep.subr.mxu0 0.0
  %4324 = vmatpush1.msra.mxu0 0.0
  %4325 = vmatprep.subr.mxu0 0.0
  %4326 = vmatpush1.msra.mxu0 0.0
  %4327 = vmatprep.subr.mxu0 0.0
  %4328 = vmatpush1.msra.mxu0 0.0
  %4329 = vmatprep.subr.mxu0 0.0
  %4330 = vmatpush1.msra.mxu0 0.0
  %4331 = vmatprep.subr.mxu0 0.0
  %4332 = vmatpush1.msra.mxu0 0.0
  %4333 = vmatprep.subr.mxu0 0.0
  %4334 = vmatpush1.msra.mxu0 0.0
  %4335 = vmatprep.subr.mxu0 0.0
  %4336 = vmatpush1.msra.mxu0 0.0
  %4337 = vmatprep.subr.mxu0 0.0
  %4338 = vmatpush1.msra.mxu0 0.0
  %4339 = vmatprep.subr.mxu0 0.0
  %4340 = vmatpush1.msra.mxu0 0.0
  %4341 = vmatprep.subr.mxu0 0.0
  %4342 = vmatpush1.msra.mxu0 0.0
  %4343 = vmatprep.subr.mxu0 0.0
  %4344 = vmatpush1.msra.mxu0 0.0
  %4345 = vmatprep.subr.mxu0 0.0
  %4346 = vmatpush1.msra.mxu0 0.0
  %4347 = vmatprep.subr.mxu0 0.0
  %4348 = vmatpush1.msra.mxu0 0.0
  %4349 = vmatprep.subr.mxu0 0.0
  %4350 = vmatpush1.msra.mxu0 0.0
  %4351 = vmatprep.subr.mxu0 %v3993
  %4352 = vmatpush1.msra.mxu0 %v3990
  %4353 = vmatprep.subr.mxu0 0.0
  %4354 = vmatpush2.msra.mxu0 0.0
  %4355 = vmatprep.subr.mxu0 0.0
  %4356 = vmatpush2.msra.mxu0 0.0
  %4357 = vmatprep.subr.mxu0 0.0
  %4358 = vmatpush2.msra.mxu0 0.0
  %4359 = vmatprep.subr.mxu0 0.0
  %4360 = vmatpush2.msra.mxu0 0.0
  %4361 = vmatprep.subr.mxu0 0.0
  %4362 = vmatpush2.msra.mxu0 0.0
  %4363 = vmatprep.subr.mxu0 0.0
  %4364 = vmatpush2.msra.mxu0 0.0
  %4365 = vmatprep.subr.mxu0 0.0
  %4366 = vmatpush2.msra.mxu0 0.0
  %4367 = vmatprep.subr.mxu0 0.0
  %4368 = vmatpush2.msra.mxu0 0.0
  %4369 = vmatprep.subr.mxu0 0.0
  %4370 = vmatpush2.msra.mxu0 0.0
  %4371 = vmatprep.subr.mxu0 0.0
  %4372 = vmatpush2.msra.mxu0 0.0
  %4373 = vmatprep.subr.mxu0 0.0
  %4374 = vmatpush2.msra.mxu0 0.0
  %4375 = vmatprep.subr.mxu0 0.0
  %4376 = vmatpush2.msra.mxu0 0.0
  %4377 = vmatprep.subr.mxu0 0.0
  %4378 = vmatpush2.msra.mxu0 0.0
  %4379 = vmatprep.subr.mxu0 0.0
  %4380 = vmatpush2.msra.mxu0 0.0
  %4381 = vmatprep.subr.mxu0 0.0
  %4382 = vmatpush2.msra.mxu0 0.0
  %4383 = vmatprep.subr.mxu0 0.0
  %4384 = vmatpush2.msra.mxu0 0.0
  %4385 = vmatprep.mubr.f32.mxu0 0.0
  %4386 = vmatmul.mubr.f32.gmra.mxu0 %v3960
  %v4387 = vpop.f32.mrf.mxu0
  %v4388 = vadd.f32 0.0, %v4387
  %v4389 = vpop.f32.mrf.mxu0
  %v4390 = vadd.f32 0.0, %v4389
  %4391 = vmatprep.mubr.f32.mxu0 0.0
  %4392 = vmatmul.mubr.f32.gmra.mxu0 %v3963
  %v4393 = vpop.f32.mrf.mxu0
  %v4394 = vadd.f32 0.0, %v4393
  %v4395 = vpop.f32.mrf.mxu0
  %v4396 = vadd.f32 0.0, %v4395
  %4397 = vdwg.mxu0
  %4398 = vmatprep.subr.mxu0 0.0
  %4399 = vmatpush1.msra.mxu0 0.0
  %4400 = vmatprep.subr.mxu0 0.0
  %4401 = vmatpush1.msra.mxu0 0.0
  %4402 = vmatprep.subr.mxu0 0.0
  %4403 = vmatpush1.msra.mxu0 0.0
  %4404 = vmatprep.subr.mxu0 0.0
  %4405 = vmatpush1.msra.mxu0 0.0
  %4406 = vmatprep.subr.mxu0 0.0
  %4407 = vmatpush1.msra.mxu0 0.0
  %4408 = vmatprep.subr.mxu0 0.0
  %4409 = vmatpush1.msra.mxu0 0.0
  %4410 = vmatprep.subr.mxu0 0.0
  %4411 = vmatpush1.msra.mxu0 0.0
  %4412 = vmatprep.subr.mxu0 0.0
  %4413 = vmatpush1.msra.mxu0 0.0
  %4414 = vmatprep.subr.mxu0 0.0
  %4415 = vmatpush1.msra.mxu0 0.0
  %4416 = vmatprep.subr.mxu0 0.0
  %4417 = vmatpush1.msra.mxu0 0.0
  %4418 = vmatprep.subr.mxu0 0.0
  %4419 = vmatpush1.msra.mxu0 0.0
  %4420 = vmatprep.subr.mxu0 0.0
  %4421 = vmatpush1.msra.mxu0 0.0
  %4422 = vmatprep.subr.mxu0 0.0
  %4423 = vmatpush1.msra.mxu0 0.0
  %4424 = vmatprep.subr.mxu0 0.0
  %4425 = vmatpush1.msra.mxu0 0.0
  %4426 = vmatprep.subr.mxu0 0.0
  %4427 = vmatpush1.msra.mxu0 0.0
  %4428 = vmatprep.subr.mxu0 %v3999
  %4429 = vmatpush1.msra.mxu0 %v3996
  %4430 = vmatprep.subr.mxu0 0.0
  %4431 = vmatpush2.msra.mxu0 0.0
  %4432 = vmatprep.subr.mxu0 0.0
  %4433 = vmatpush2.msra.mxu0 0.0
  %4434 = vmatprep.subr.mxu0 0.0
  %4435 = vmatpush2.msra.mxu0 0.0
  %4436 = vmatprep.subr.mxu0 0.0
  %4437 = vmatpush2.msra.mxu0 0.0
  %4438 = vmatprep.subr.mxu0 0.0
  %4439 = vmatpush2.msra.mxu0 0.0
  %4440 = vmatprep.subr.mxu0 0.0
  %4441 = vmatpush2.msra.mxu0 0.0
  %4442 = vmatprep.subr.mxu0 0.0
  %4443 = vmatpush2.msra.mxu0 0.0
  %4444 = vmatprep.subr.mxu0 0.0
  %4445 = vmatpush2.msra.mxu0 0.0
  %4446 = vmatprep.subr.mxu0 0.0
  %4447 = vmatpush2.msra.mxu0 0.0
  %4448 = vmatprep.subr.mxu0 0.0
  %4449 = vmatpush2.msra.mxu0 0.0
  %4450 = vmatprep.subr.mxu0 0.0
  %4451 = vmatpush2.msra.mxu0 0.0
  %4452 = vmatprep.subr.mxu0 0.0
  %4453 = vmatpush2.msra.mxu0 0.0
  %4454 = vmatprep.subr.mxu0 0.0
  %4455 = vmatpush2.msra.mxu0 0.0
  %4456 = vmatprep.subr.mxu0 0.0
  %4457 = vmatpush2.msra.mxu0 0.0
  %4458 = vmatprep.subr.mxu0 0.0
  %4459 = vmatpush2.msra.mxu0 0.0
  %4460 = vmatprep.subr.mxu0 0.0
  %4461 = vmatpush2.msra.mxu0 0.0
  %4462 = vmatprep.mubr.f32.mxu0 0.0
  %4463 = vmatmul.mubr.f32.gmra.mxu0 %v3960
  %v4464 = vpop.f32.mrf.mxu0
  %v4465 = vadd.f32 0.0, %v4464
  %v4466 = vpop.f32.mrf.mxu0
  %v4467 = vadd.f32 0.0, %v4466
  %4468 = vmatprep.mubr.f32.mxu0 0.0
  %4469 = vmatmul.mubr.f32.gmra.mxu0 %v3963
  %v4470 = vpop.f32.mrf.mxu0
  %v4471 = vadd.f32 0.0, %v4470
  %v4472 = vpop.f32.mrf.mxu0
  %v4473 = vadd.f32 0.0, %v4472
  %4474 = vdwg.mxu0
  %4475 = vmatprep.subr.mxu0 0.0
  %4476 = vmatpush1.msra.mxu0 0.0
  %4477 = vmatprep.subr.mxu0 0.0
  %4478 = vmatpush1.msra.mxu0 0.0
  %4479 = vmatprep.subr.mxu0 0.0
  %4480 = vmatpush1.msra.mxu0 0.0
  %4481 = vmatprep.subr.mxu0 0.0
  %4482 = vmatpush1.msra.mxu0 0.0
  %4483 = vmatprep.subr.mxu0 0.0
  %4484 = vmatpush1.msra.mxu0 0.0
  %4485 = vmatprep.subr.mxu0 0.0
  %4486 = vmatpush1.msra.mxu0 0.0
  %4487 = vmatprep.subr.mxu0 0.0
  %4488 = vmatpush1.msra.mxu0 0.0
  %4489 = vmatprep.subr.mxu0 0.0
  %4490 = vmatpush1.msra.mxu0 0.0
  %4491 = vmatprep.subr.mxu0 0.0
  %4492 = vmatpush1.msra.mxu0 0.0
  %4493 = vmatprep.subr.mxu0 0.0
  %4494 = vmatpush1.msra.mxu0 0.0
  %4495 = vmatprep.subr.mxu0 0.0
  %4496 = vmatpush1.msra.mxu0 0.0
  %4497 = vmatprep.subr.mxu0 0.0
  %4498 = vmatpush1.msra.mxu0 0.0
  %4499 = vmatprep.subr.mxu0 0.0
  %4500 = vmatpush1.msra.mxu0 0.0
  %4501 = vmatprep.subr.mxu0 0.0
  %4502 = vmatpush1.msra.mxu0 0.0
  %4503 = vmatprep.subr.mxu0 0.0
  %4504 = vmatpush1.msra.mxu0 0.0
  %4505 = vmatprep.subr.mxu0 %v4005
  %4506 = vmatpush1.msra.mxu0 %v4002
  %4507 = vmatprep.subr.mxu0 0.0
  %4508 = vmatpush2.msra.mxu0 0.0
  %4509 = vmatprep.subr.mxu0 0.0
  %4510 = vmatpush2.msra.mxu0 0.0
  %4511 = vmatprep.subr.mxu0 0.0
  %4512 = vmatpush2.msra.mxu0 0.0
  %4513 = vmatprep.subr.mxu0 0.0
  %4514 = vmatpush2.msra.mxu0 0.0
  %4515 = vmatprep.subr.mxu0 0.0
  %4516 = vmatpush2.msra.mxu0 0.0
  %4517 = vmatprep.subr.mxu0 0.0
  %4518 = vmatpush2.msra.mxu0 0.0
  %4519 = vmatprep.subr.mxu0 0.0
  %4520 = vmatpush2.msra.mxu0 0.0
  %4521 = vmatprep.subr.mxu0 0.0
  %4522 = vmatpush2.msra.mxu0 0.0
  %4523 = vmatprep.subr.mxu0 0.0
  %4524 = vmatpush2.msra.mxu0 0.0
  %4525 = vmatprep.subr.mxu0 0.0
  %4526 = vmatpush2.msra.mxu0 0.0
  %4527 = vmatprep.subr.mxu0 0.0
  %4528 = vmatpush2.msra.mxu0 0.0
  %4529 = vmatprep.subr.mxu0 0.0
  %4530 = vmatpush2.msra.mxu0 0.0
  %4531 = vmatprep.subr.mxu0 0.0
  %4532 = vmatpush2.msra.mxu0 0.0
  %4533 = vmatprep.subr.mxu0 0.0
  %4534 = vmatpush2.msra.mxu0 0.0
  %4535 = vmatprep.subr.mxu0 0.0
  %4536 = vmatpush2.msra.mxu0 0.0
  %4537 = vmatprep.subr.mxu0 0.0
  %4538 = vmatpush2.msra.mxu0 0.0
  %4539 = vmatprep.mubr.f32.mxu0 0.0
  %4540 = vmatmul.mubr.f32.gmra.mxu0 %v3960
  %v4541 = vpop.f32.mrf.mxu0
  %v4542 = vadd.f32 0.0, %v4541
  %v4543 = vpop.f32.mrf.mxu0
  %v4544 = vadd.f32 0.0, %v4543
  %4545 = vmatprep.mubr.f32.mxu0 0.0
  %4546 = vmatmul.mubr.f32.gmra.mxu0 %v3963
  %v4547 = vpop.f32.mrf.mxu0
  %v4548 = vadd.f32 0.0, %v4547
  %v4549 = vpop.f32.mrf.mxu0
  %v4550 = vadd.f32 0.0, %v4549
  %4551 = vdwg.mxu0
  %4552 = vmatprep.subr.mxu0 0.0
  %4553 = vmatpush1.msra.mxu0 0.0
  %4554 = vmatprep.subr.mxu0 0.0
  %4555 = vmatpush1.msra.mxu0 0.0
  %4556 = vmatprep.subr.mxu0 0.0
  %4557 = vmatpush1.msra.mxu0 0.0
  %4558 = vmatprep.subr.mxu0 0.0
  %4559 = vmatpush1.msra.mxu0 0.0
  %4560 = vmatprep.subr.mxu0 0.0
  %4561 = vmatpush1.msra.mxu0 0.0
  %4562 = vmatprep.subr.mxu0 0.0
  %4563 = vmatpush1.msra.mxu0 0.0
  %4564 = vmatprep.subr.mxu0 0.0
  %4565 = vmatpush1.msra.mxu0 0.0
  %4566 = vmatprep.subr.mxu0 0.0
  %4567 = vmatpush1.msra.mxu0 0.0
  %4568 = vmatprep.subr.mxu0 0.0
  %4569 = vmatpush1.msra.mxu0 0.0
  %4570 = vmatprep.subr.mxu0 0.0
  %4571 = vmatpush1.msra.mxu0 0.0
  %4572 = vmatprep.subr.mxu0 0.0
  %4573 = vmatpush1.msra.mxu0 0.0
  %4574 = vmatprep.subr.mxu0 0.0
  %4575 = vmatpush1.msra.mxu0 0.0
  %4576 = vmatprep.subr.mxu0 0.0
  %4577 = vmatpush1.msra.mxu0 0.0
  %4578 = vmatprep.subr.mxu0 0.0
  %4579 = vmatpush1.msra.mxu0 0.0
  %4580 = vmatprep.subr.mxu0 0.0
  %4581 = vmatpush1.msra.mxu0 0.0
  %4582 = vmatprep.subr.mxu0 %v4011
  %4583 = vmatpush1.msra.mxu0 %v4008
  %4584 = vmatprep.subr.mxu0 0.0
  %4585 = vmatpush2.msra.mxu0 0.0
  %4586 = vmatprep.subr.mxu0 0.0
  %4587 = vmatpush2.msra.mxu0 0.0
  %4588 = vmatprep.subr.mxu0 0.0
  %4589 = vmatpush2.msra.mxu0 0.0
  %4590 = vmatprep.subr.mxu0 0.0
  %4591 = vmatpush2.msra.mxu0 0.0
  %4592 = vmatprep.subr.mxu0 0.0
  %4593 = vmatpush2.msra.mxu0 0.0
  %4594 = vmatprep.subr.mxu0 0.0
  %4595 = vmatpush2.msra.mxu0 0.0
  %4596 = vmatprep.subr.mxu0 0.0
  %4597 = vmatpush2.msra.mxu0 0.0
  %4598 = vmatprep.subr.mxu0 0.0
  %4599 = vmatpush2.msra.mxu0 0.0
  %4600 = vmatprep.subr.mxu0 0.0
  %4601 = vmatpush2.msra.mxu0 0.0
  %4602 = vmatprep.subr.mxu0 0.0
  %4603 = vmatpush2.msra.mxu0 0.0
  %4604 = vmatprep.subr.mxu0 0.0
  %4605 = vmatpush2.msra.mxu0 0.0
  %4606 = vmatprep.subr.mxu0 0.0
  %4607 = vmatpush2.msra.mxu0 0.0
  %4608 = vmatprep.subr.mxu0 0.0
  %4609 = vmatpush2.msra.mxu0 0.0
  %4610 = vmatprep.subr.mxu0 0.0
  %4611 = vmatpush2.msra.mxu0 0.0
  %4612 = vmatprep.subr.mxu0 0.0
  %4613 = vmatpush2.msra.mxu0 0.0
  %4614 = vmatprep.subr.mxu0 0.0
  %4615 = vmatpush2.msra.mxu0 0.0
  %4616 = vmatprep.mubr.f32.mxu0 0.0
  %4617 = vmatmul.mubr.f32.gmra.mxu0 %v3960
  %v4618 = vpop.f32.mrf.mxu0
  %v4619 = vadd.f32 0.0, %v4618
  %v4620 = vpop.f32.mrf.mxu0
  %v4621 = vadd.f32 0.0, %v4620
  %4622 = vmatprep.mubr.f32.mxu0 0.0
  %4623 = vmatmul.mubr.f32.gmra.mxu0 %v3963
  %v4624 = vpop.f32.mrf.mxu0
  %v4625 = vadd.f32 0.0, %v4624
  %v4626 = vpop.f32.mrf.mxu0
  %v4627 = vadd.f32 0.0, %v4626
  %4628 = vdwg.mxu0
  %v4629 = vmax.f32 %v4080, 0.0
  %v4630 = vmax.f32 %v4082, 0.0
  %v4631 = vmax.f32 %v4157, 0.0
  %v4632 = vmax.f32 %v4159, 0.0
  %v4633 = vmax.f32 %v4234, 0.0
  %v4634 = vmax.f32 %v4236, 0.0
  %v4635 = vmax.f32 %v4311, 0.0
  %v4636 = vmax.f32 %v4313, 0.0
  %v4637 = vmax.f32 %v4388, 0.0
  %v4638 = vmax.f32 %v4390, 0.0
  %v4639 = vmax.f32 %v4465, 0.0
  %v4640 = vmax.f32 %v4467, 0.0
  %v4641 = vmax.f32 %v4542, 0.0
  %v4642 = vmax.f32 %v4544, 0.0
  %v4643 = vmax.f32 %v4619, 0.0
  %v4644 = vmax.f32 %v4621, 0.0
  %v4645 = vmax.f32 %v4086, 0.0
  %v4646 = vmax.f32 %v4088, 0.0
  %v4647 = vmax.f32 %v4163, 0.0
  %v4648 = vmax.f32 %v4165, 0.0
  %v4649 = vmax.f32 %v4240, 0.0
  %v4650 = vmax.f32 %v4242, 0.0
  %v4651 = vmax.f32 %v4317, 0.0
  %v4652 = vmax.f32 %v4319, 0.0
  %v4653 = vmax.f32 %v4394, 0.0
  %v4654 = vmax.f32 %v4396, 0.0
  %v4655 = vmax.f32 %v4471, 0.0
  %v4656 = vmax.f32 %v4473, 0.0
  %v4657 = vmax.f32 %v4548, 0.0
  %v4658 = vmax.f32 %v4550, 0.0
  %v4659 = vmax.f32 %v4625, 0.0
  %v4660 = vmax.f32 %v4627, 0.0
  %v4661 = vld [vmem:[%s4] sm:$0x7f]
  %v4662 = vld [vmem:[%s4 + $0x8] sm:$0x7f]
  %v4663 = vld [vmem:[%s4 + $0x10] sm:$0x7f]
  %v4664 = vld [vmem:[%s4 + $0x18] sm:$0x7f]
  %v4665 = vld [vmem:[%s4 + $0x20] sm:$0x7f]
  %v4666 = vld [vmem:[%s4 + $0x28] sm:$0x7f]
  %v4667 = vld [vmem:[%s4 + $0x30] sm:$0x7f]
  %v4668 = vld [vmem:[%s4 + $0x38] sm:$0x7f]
  %v4669 = vld [vmem:[%s4 + $0x40] sm:$0x7f]
  %v4670 = vld [vmem:[%s4 + $0x48] sm:$0x7f]
  %v4671 = vld [vmem:[%s4 + $0x50] sm:$0x7f]
  %v4672 = vld [vmem:[%s4 + $0x58] sm:$0x7f]
  %v4673 = vld [vmem:[%s4 + $0x60] sm:$0x7f]
  %v4674 = vld [vmem:[%s4 + $0x68] sm:$0x7f]
  %v4675 = vld [vmem:[%s4 + $0x70] sm:$0x7f]
  %v4676 = vld [vmem:[%s4 + $0x78] sm:$0x7f]
  %4677 = vmatprep.subr.mxu0 0.0
  %4678 = vmatpush1.xpose.msra.mxu0 0.0
  %4679 = vmatprep.subr.mxu0 0.0
  %4680 = vmatpush1.xpose.msra.mxu0 0.0
  %4681 = vmatprep.subr.mxu0 0.0
  %4682 = vmatpush1.xpose.msra.mxu0 0.0
  %4683 = vmatprep.subr.mxu0 0.0
  %4684 = vmatpush1.xpose.msra.mxu0 0.0
  %4685 = vmatprep.subr.mxu0 0.0
  %4686 = vmatpush1.xpose.msra.mxu0 0.0
  %4687 = vmatprep.subr.mxu0 0.0
  %4688 = vmatpush1.xpose.msra.mxu0 0.0
  %4689 = vmatprep.subr.mxu0 0.0
  %4690 = vmatpush1.xpose.msra.mxu0 0.0
  %4691 = vmatprep.subr.mxu0 0.0
  %4692 = vmatpush1.xpose.msra.mxu0 0.0
  %4693 = vmatprep.subr.mxu0 0.0
  %4694 = vmatpush1.xpose.msra.mxu0 0.0
  %4695 = vmatprep.subr.mxu0 0.0
  %4696 = vmatpush1.xpose.msra.mxu0 0.0
  %4697 = vmatprep.subr.mxu0 0.0
  %4698 = vmatpush1.xpose.msra.mxu0 0.0
  %4699 = vmatprep.subr.mxu0 0.0
  %4700 = vmatpush1.xpose.msra.mxu0 0.0
  %4701 = vmatprep.subr.mxu0 0.0
  %4702 = vmatpush1.xpose.msra.mxu0 0.0
  %4703 = vmatprep.subr.mxu0 0.0
  %4704 = vmatpush1.xpose.msra.mxu0 0.0
  %4705 = vmatprep.subr.mxu0 0.0
  %4706 = vmatpush1.xpose.msra.mxu0 0.0
  %4707 = vmatprep.subr.mxu0 %v4662
  %4708 = vmatpush1.xpose.msra.mxu0 %v4661
  %4709 = vmatprep.subr.mxu0 0.0
  %4710 = vmatpush2.xpose.msra.mxu0 0.0
  %4711 = vmatprep.subr.mxu0 0.0
  %4712 = vmatpush2.xpose.msra.mxu0 0.0
  %4713 = vmatprep.subr.mxu0 0.0
  %4714 = vmatpush2.xpose.msra.mxu0 0.0
  %4715 = vmatprep.subr.mxu0 0.0
  %4716 = vmatpush2.xpose.msra.mxu0 0.0
  %4717 = vmatprep.subr.mxu0 0.0
  %4718 = vmatpush2.xpose.msra.mxu0 0.0
  %4719 = vmatprep.subr.mxu0 0.0
  %4720 = vmatpush2.xpose.msra.mxu0 0.0
  %4721 = vmatprep.subr.mxu0 0.0
  %4722 = vmatpush2.xpose.msra.mxu0 0.0
  %4723 = vmatprep.subr.mxu0 0.0
  %4724 = vmatpush2.xpose.msra.mxu0 0.0
  %4725 = vmatprep.subr.mxu0 0.0
  %4726 = vmatpush2.xpose.msra.mxu0 0.0
  %4727 = vmatprep.subr.mxu0 0.0
  %4728 = vmatpush2.xpose.msra.mxu0 0.0
  %4729 = vmatprep.subr.mxu0 0.0
  %4730 = vmatpush2.xpose.msra.mxu0 0.0
  %4731 = vmatprep.subr.mxu0 0.0
  %4732 = vmatpush2.xpose.msra.mxu0 0.0
  %4733 = vmatprep.subr.mxu0 0.0
  %4734 = vmatpush2.xpose.msra.mxu0 0.0
  %4735 = vmatprep.subr.mxu0 0.0
  %4736 = vmatpush2.xpose.msra.mxu0 0.0
  %4737 = vmatprep.subr.mxu0 0.0
  %4738 = vmatpush2.xpose.msra.mxu0 0.0
  %4739 = vmatprep.subr.mxu0 0.0
  %4740 = vmatpush2.xpose.msra.mxu0 0.0
  %4741 = vmatprep.mubr.f32.mxu0 %v4630
  %4742 = vmatmul.mubr.f32.gmra.mxu0 %v4629
  %v4743 = vpop.f32.mrf.mxu0
  %v4744 = vadd.f32 %v3941, %v4743
  %v4745 = vpop.f32.mrf.mxu0
  %4746 = vmatprep.mubr.f32.mxu0 %v4646
  %4747 = vmatmul.mubr.f32.gmra.mxu0 %v4645
  %v4748 = vpop.f32.mrf.mxu0
  %v4749 = vadd.f32 %v3942, %v4748
  %v4750 = vpop.f32.mrf.mxu0
  %4751 = vdwg.mxu0
  %4752 = vmatprep.subr.mxu0 0.0
  %4753 = vmatpush1.xpose.msra.mxu0 0.0
  %4754 = vmatprep.subr.mxu0 0.0
  %4755 = vmatpush1.xpose.msra.mxu0 0.0
  %4756 = vmatprep.subr.mxu0 0.0
  %4757 = vmatpush1.xpose.msra.mxu0 0.0
  %4758 = vmatprep.subr.mxu0 0.0
  %4759 = vmatpush1.xpose.msra.mxu0 0.0
  %4760 = vmatprep.subr.mxu0 0.0
  %4761 = vmatpush1.xpose.msra.mxu0 0.0
  %4762 = vmatprep.subr.mxu0 0.0
  %4763 = vmatpush1.xpose.msra.mxu0 0.0
  %4764 = vmatprep.subr.mxu0 0.0
  %4765 = vmatpush1.xpose.msra.mxu0 0.0
  %4766 = vmatprep.subr.mxu0 0.0
  %4767 = vmatpush1.xpose.msra.mxu0 0.0
  %4768 = vmatprep.subr.mxu0 0.0
  %4769 = vmatpush1.xpose.msra.mxu0 0.0
  %4770 = vmatprep.subr.mxu0 0.0
  %4771 = vmatpush1.xpose.msra.mxu0 0.0
  %4772 = vmatprep.subr.mxu0 0.0
  %4773 = vmatpush1.xpose.msra.mxu0 0.0
  %4774 = vmatprep.subr.mxu0 0.0
  %4775 = vmatpush1.xpose.msra.mxu0 0.0
  %4776 = vmatprep.subr.mxu0 0.0
  %4777 = vmatpush1.xpose.msra.mxu0 0.0
  %4778 = vmatprep.subr.mxu0 0.0
  %4779 = vmatpush1.xpose.msra.mxu0 0.0
  %4780 = vmatprep.subr.mxu0 0.0
  %4781 = vmatpush1.xpose.msra.mxu0 0.0
  %4782 = vmatprep.subr.mxu0 %v4664
  %4783 = vmatpush1.xpose.msra.mxu0 %v4663
  %4784 = vmatprep.subr.mxu0 0.0
  %4785 = vmatpush2.xpose.msra.mxu0 0.0
  %4786 = vmatprep.subr.mxu0 0.0
  %4787 = vmatpush2.xpose.msra.mxu0 0.0
  %4788 = vmatprep.subr.mxu0 0.0
  %4789 = vmatpush2.xpose.msra.mxu0 0.0
  %4790 = vmatprep.subr.mxu0 0.0
  %4791 = vmatpush2.xpose.msra.mxu0 0.0
  %4792 = vmatprep.subr.mxu0 0.0
  %4793 = vmatpush2.xpose.msra.mxu0 0.0
  %4794 = vmatprep.subr.mxu0 0.0
  %4795 = vmatpush2.xpose.msra.mxu0 0.0
  %4796 = vmatprep.subr.mxu0 0.0
  %4797 = vmatpush2.xpose.msra.mxu0 0.0
  %4798 = vmatprep.subr.mxu0 0.0
  %4799 = vmatpush2.xpose.msra.mxu0 0.0
  %4800 = vmatprep.subr.mxu0 0.0
  %4801 = vmatpush2.xpose.msra.mxu0 0.0
  %4802 = vmatprep.subr.mxu0 0.0
  %4803 = vmatpush2.xpose.msra.mxu0 0.0
  %4804 = vmatprep.subr.mxu0 0.0
  %4805 = vmatpush2.xpose.msra.mxu0 0.0
  %4806 = vmatprep.subr.mxu0 0.0
  %4807 = vmatpush2.xpose.msra.mxu0 0.0
  %4808 = vmatprep.subr.mxu0 0.0
  %4809 = vmatpush2.xpose.msra.mxu0 0.0
  %4810 = vmatprep.subr.mxu0 0.0
  %4811 = vmatpush2.xpose.msra.mxu0 0.0
  %4812 = vmatprep.subr.mxu0 0.0
  %4813 = vmatpush2.xpose.msra.mxu0 0.0
  %4814 = vmatprep.subr.mxu0 0.0
  %4815 = vmatpush2.xpose.msra.mxu0 0.0
  %4816 = vmatprep.mubr.f32.mxu0 %v4632
  %4817 = vmatmul.mubr.f32.gmra.mxu0 %v4631
  %v4818 = vpop.f32.mrf.mxu0
  %v4819 = vadd.f32 %v4744, %v4818
  %v4820 = vpop.f32.mrf.mxu0
  %4821 = vmatprep.mubr.f32.mxu0 %v4648
  %4822 = vmatmul.mubr.f32.gmra.mxu0 %v4647
  %v4823 = vpop.f32.mrf.mxu0
  %v4824 = vadd.f32 %v4749, %v4823
  %v4825 = vpop.f32.mrf.mxu0
  %4826 = vdwg.mxu0
  %4827 = vmatprep.subr.mxu0 0.0
  %4828 = vmatpush1.xpose.msra.mxu0 0.0
  %4829 = vmatprep.subr.mxu0 0.0
  %4830 = vmatpush1.xpose.msra.mxu0 0.0
  %4831 = vmatprep.subr.mxu0 0.0
  %4832 = vmatpush1.xpose.msra.mxu0 0.0
  %4833 = vmatprep.subr.mxu0 0.0
  %4834 = vmatpush1.xpose.msra.mxu0 0.0
  %4835 = vmatprep.subr.mxu0 0.0
  %4836 = vmatpush1.xpose.msra.mxu0 0.0
  %4837 = vmatprep.subr.mxu0 0.0
  %4838 = vmatpush1.xpose.msra.mxu0 0.0
  %4839 = vmatprep.subr.mxu0 0.0
  %4840 = vmatpush1.xpose.msra.mxu0 0.0
  %4841 = vmatprep.subr.mxu0 0.0
  %4842 = vmatpush1.xpose.msra.mxu0 0.0
  %4843 = vmatprep.subr.mxu0 0.0
  %4844 = vmatpush1.xpose.msra.mxu0 0.0
  %4845 = vmatprep.subr.mxu0 0.0
  %4846 = vmatpush1.xpose.msra.mxu0 0.0
  %4847 = vmatprep.subr.mxu0 0.0
  %4848 = vmatpush1.xpose.msra.mxu0 0.0
  %4849 = vmatprep.subr.mxu0 0.0
  %4850 = vmatpush1.xpose.msra.mxu0 0.0
  %4851 = vmatprep.subr.mxu0 0.0
  %4852 = vmatpush1.xpose.msra.mxu0 0.0
  %4853 = vmatprep.subr.mxu0 0.0
  %4854 = vmatpush1.xpose.msra.mxu0 0.0
  %4855 = vmatprep.subr.mxu0 0.0
  %4856 = vmatpush1.xpose.msra.mxu0 0.0
  %4857 = vmatprep.subr.mxu0 %v4666
  %4858 = vmatpush1.xpose.msra.mxu0 %v4665
  %4859 = vmatprep.subr.mxu0 0.0
  %4860 = vmatpush2.xpose.msra.mxu0 0.0
  %4861 = vmatprep.subr.mxu0 0.0
  %4862 = vmatpush2.xpose.msra.mxu0 0.0
  %4863 = vmatprep.subr.mxu0 0.0
  %4864 = vmatpush2.xpose.msra.mxu0 0.0
  %4865 = vmatprep.subr.mxu0 0.0
  %4866 = vmatpush2.xpose.msra.mxu0 0.0
  %4867 = vmatprep.subr.mxu0 0.0
  %4868 = vmatpush2.xpose.msra.mxu0 0.0
  %4869 = vmatprep.subr.mxu0 0.0
  %4870 = vmatpush2.xpose.msra.mxu0 0.0
  %4871 = vmatprep.subr.mxu0 0.0
  %4872 = vmatpush2.xpose.msra.mxu0 0.0
  %4873 = vmatprep.subr.mxu0 0.0
  %4874 = vmatpush2.xpose.msra.mxu0 0.0
  %4875 = vmatprep.subr.mxu0 0.0
  %4876 = vmatpush2.xpose.msra.mxu0 0.0
  %4877 = vmatprep.subr.mxu0 0.0
  %4878 = vmatpush2.xpose.msra.mxu0 0.0
  %4879 = vmatprep.subr.mxu0 0.0
  %4880 = vmatpush2.xpose.msra.mxu0 0.0
  %4881 = vmatprep.subr.mxu0 0.0
  %4882 = vmatpush2.xpose.msra.mxu0 0.0
  %4883 = vmatprep.subr.mxu0 0.0
  %4884 = vmatpush2.xpose.msra.mxu0 0.0
  %4885 = vmatprep.subr.mxu0 0.0
  %4886 = vmatpush2.xpose.msra.mxu0 0.0
  %4887 = vmatprep.subr.mxu0 0.0
  %4888 = vmatpush2.xpose.msra.mxu0 0.0
  %4889 = vmatprep.subr.mxu0 0.0
  %4890 = vmatpush2.xpose.msra.mxu0 0.0
  %4891 = vmatprep.mubr.f32.mxu0 %v4634
  %4892 = vmatmul.mubr.f32.gmra.mxu0 %v4633
  %v4893 = vpop.f32.mrf.mxu0
  %v4894 = vadd.f32 %v4819, %v4893
  %v4895 = vpop.f32.mrf.mxu0
  %4896 = vmatprep.mubr.f32.mxu0 %v4650
  %4897 = vmatmul.mubr.f32.gmra.mxu0 %v4649
  %v4898 = vpop.f32.mrf.mxu0
  %v4899 = vadd.f32 %v4824, %v4898
  %v4900 = vpop.f32.mrf.mxu0
  %4901 = vdwg.mxu0
  %4902 = vmatprep.subr.mxu0 0.0
  %4903 = vmatpush1.xpose.msra.mxu0 0.0
  %4904 = vmatprep.subr.mxu0 0.0
  %4905 = vmatpush1.xpose.msra.mxu0 0.0
  %4906 = vmatprep.subr.mxu0 0.0
  %4907 = vmatpush1.xpose.msra.mxu0 0.0
  %4908 = vmatprep.subr.mxu0 0.0
  %4909 = vmatpush1.xpose.msra.mxu0 0.0
  %4910 = vmatprep.subr.mxu0 0.0
  %4911 = vmatpush1.xpose.msra.mxu0 0.0
  %4912 = vmatprep.subr.mxu0 0.0
  %4913 = vmatpush1.xpose.msra.mxu0 0.0
  %4914 = vmatprep.subr.mxu0 0.0
  %4915 = vmatpush1.xpose.msra.mxu0 0.0
  %4916 = vmatprep.subr.mxu0 0.0
  %4917 = vmatpush1.xpose.msra.mxu0 0.0
  %4918 = vmatprep.subr.mxu0 0.0
  %4919 = vmatpush1.xpose.msra.mxu0 0.0
  %4920 = vmatprep.subr.mxu0 0.0
  %4921 = vmatpush1.xpose.msra.mxu0 0.0
  %4922 = vmatprep.subr.mxu0 0.0
  %4923 = vmatpush1.xpose.msra.mxu0 0.0
  %4924 = vmatprep.subr.mxu0 0.0
  %4925 = vmatpush1.xpose.msra.mxu0 0.0
  %4926 = vmatprep.subr.mxu0 0.0
  %4927 = vmatpush1.xpose.msra.mxu0 0.0
  %4928 = vmatprep.subr.mxu0 0.0
  %4929 = vmatpush1.xpose.msra.mxu0 0.0
  %4930 = vmatprep.subr.mxu0 0.0
  %4931 = vmatpush1.xpose.msra.mxu0 0.0
  %4932 = vmatprep.subr.mxu0 %v4668
  %4933 = vmatpush1.xpose.msra.mxu0 %v4667
  %4934 = vmatprep.subr.mxu0 0.0
  %4935 = vmatpush2.xpose.msra.mxu0 0.0
  %4936 = vmatprep.subr.mxu0 0.0
  %4937 = vmatpush2.xpose.msra.mxu0 0.0
  %4938 = vmatprep.subr.mxu0 0.0
  %4939 = vmatpush2.xpose.msra.mxu0 0.0
  %4940 = vmatprep.subr.mxu0 0.0
  %4941 = vmatpush2.xpose.msra.mxu0 0.0
  %4942 = vmatprep.subr.mxu0 0.0
  %4943 = vmatpush2.xpose.msra.mxu0 0.0
  %4944 = vmatprep.subr.mxu0 0.0
  %4945 = vmatpush2.xpose.msra.mxu0 0.0
  %4946 = vmatprep.subr.mxu0 0.0
  %4947 = vmatpush2.xpose.msra.mxu0 0.0
  %4948 = vmatprep.subr.mxu0 0.0
  %4949 = vmatpush2.xpose.msra.mxu0 0.0
  %4950 = vmatprep.subr.mxu0 0.0
  %4951 = vmatpush2.xpose.msra.mxu0 0.0
  %4952 = vmatprep.subr.mxu0 0.0
  %4953 = vmatpush2.xpose.msra.mxu0 0.0
  %4954 = vmatprep.subr.mxu0 0.0
  %4955 = vmatpush2.xpose.msra.mxu0 0.0
  %4956 = vmatprep.subr.mxu0 0.0
  %4957 = vmatpush2.xpose.msra.mxu0 0.0
  %4958 = vmatprep.subr.mxu0 0.0
  %4959 = vmatpush2.xpose.msra.mxu0 0.0
  %4960 = vmatprep.subr.mxu0 0.0
  %4961 = vmatpush2.xpose.msra.mxu0 0.0
  %4962 = vmatprep.subr.mxu0 0.0
  %4963 = vmatpush2.xpose.msra.mxu0 0.0
  %4964 = vmatprep.subr.mxu0 0.0
  %4965 = vmatpush2.xpose.msra.mxu0 0.0
  %4966 = vmatprep.mubr.f32.mxu0 %v4636
  %4967 = vmatmul.mubr.f32.gmra.mxu0 %v4635
  %v4968 = vpop.f32.mrf.mxu0
  %v4969 = vadd.f32 %v4894, %v4968
  %v4970 = vpop.f32.mrf.mxu0
  %4971 = vmatprep.mubr.f32.mxu0 %v4652
  %4972 = vmatmul.mubr.f32.gmra.mxu0 %v4651
  %v4973 = vpop.f32.mrf.mxu0
  %v4974 = vadd.f32 %v4899, %v4973
  %v4975 = vpop.f32.mrf.mxu0
  %4976 = vdwg.mxu0
  %4977 = vmatprep.subr.mxu0 0.0
  %4978 = vmatpush1.xpose.msra.mxu0 0.0
  %4979 = vmatprep.subr.mxu0 0.0
  %4980 = vmatpush1.xpose.msra.mxu0 0.0
  %4981 = vmatprep.subr.mxu0 0.0
  %4982 = vmatpush1.xpose.msra.mxu0 0.0
  %4983 = vmatprep.subr.mxu0 0.0
  %4984 = vmatpush1.xpose.msra.mxu0 0.0
  %4985 = vmatprep.subr.mxu0 0.0
  %4986 = vmatpush1.xpose.msra.mxu0 0.0
  %4987 = vmatprep.subr.mxu0 0.0
  %4988 = vmatpush1.xpose.msra.mxu0 0.0
  %4989 = vmatprep.subr.mxu0 0.0
  %4990 = vmatpush1.xpose.msra.mxu0 0.0
  %4991 = vmatprep.subr.mxu0 0.0
  %4992 = vmatpush1.xpose.msra.mxu0 0.0
  %4993 = vmatprep.subr.mxu0 0.0
  %4994 = vmatpush1.xpose.msra.mxu0 0.0
  %4995 = vmatprep.subr.mxu0 0.0
  %4996 = vmatpush1.xpose.msra.mxu0 0.0
  %4997 = vmatprep.subr.mxu0 0.0
  %4998 = vmatpush1.xpose.msra.mxu0 0.0
  %4999 = vmatprep.subr.mxu0 0.0
  %5000 = vmatpush1.xpose.msra.mxu0 0.0
  %5001 = vmatprep.subr.mxu0 0.0
  %5002 = vmatpush1.xpose.msra.mxu0 0.0
  %5003 = vmatprep.subr.mxu0 0.0
  %5004 = vmatpush1.xpose.msra.mxu0 0.0
  %5005 = vmatprep.subr.mxu0 0.0
  %5006 = vmatpush1.xpose.msra.mxu0 0.0
  %5007 = vmatprep.subr.mxu0 %v4670
  %5008 = vmatpush1.xpose.msra.mxu0 %v4669
  %5009 = vmatprep.subr.mxu0 0.0
  %5010 = vmatpush2.xpose.msra.mxu0 0.0
  %5011 = vmatprep.subr.mxu0 0.0
  %5012 = vmatpush2.xpose.msra.mxu0 0.0
  %5013 = vmatprep.subr.mxu0 0.0
  %5014 = vmatpush2.xpose.msra.mxu0 0.0
  %5015 = vmatprep.subr.mxu0 0.0
  %5016 = vmatpush2.xpose.msra.mxu0 0.0
  %5017 = vmatprep.subr.mxu0 0.0
  %5018 = vmatpush2.xpose.msra.mxu0 0.0
  %5019 = vmatprep.subr.mxu0 0.0
  %5020 = vmatpush2.xpose.msra.mxu0 0.0
  %5021 = vmatprep.subr.mxu0 0.0
  %5022 = vmatpush2.xpose.msra.mxu0 0.0
  %5023 = vmatprep.subr.mxu0 0.0
  %5024 = vmatpush2.xpose.msra.mxu0 0.0
  %5025 = vmatprep.subr.mxu0 0.0
  %5026 = vmatpush2.xpose.msra.mxu0 0.0
  %5027 = vmatprep.subr.mxu0 0.0
  %5028 = vmatpush2.xpose.msra.mxu0 0.0
  %5029 = vmatprep.subr.mxu0 0.0
  %5030 = vmatpush2.xpose.msra.mxu0 0.0
  %5031 = vmatprep.subr.mxu0 0.0
  %5032 = vmatpush2.xpose.msra.mxu0 0.0
  %5033 = vmatprep.subr.mxu0 0.0
  %5034 = vmatpush2.xpose.msra.mxu0 0.0
  %5035 = vmatprep.subr.mxu0 0.0
  %5036 = vmatpush2.xpose.msra.mxu0 0.0
  %5037 = vmatprep.subr.mxu0 0.0
  %5038 = vmatpush2.xpose.msra.mxu0 0.0
  %5039 = vmatprep.subr.mxu0 0.0
  %5040 = vmatpush2.xpose.msra.mxu0 0.0
  %5041 = vmatprep.mubr.f32.mxu0 %v4638
  %5042 = vmatmul.mubr.f32.gmra.mxu0 %v4637
  %v5043 = vpop.f32.mrf.mxu0
  %v5044 = vadd.f32 %v4969, %v5043
  %v5045 = vpop.f32.mrf.mxu0
  %5046 = vmatprep.mubr.f32.mxu0 %v4654
  %5047 = vmatmul.mubr.f32.gmra.mxu0 %v4653
  %v5048 = vpop.f32.mrf.mxu0
  %v5049 = vadd.f32 %v4974, %v5048
  %v5050 = vpop.f32.mrf.mxu0
  %5051 = vdwg.mxu0
  %5052 = vmatprep.subr.mxu0 0.0
  %5053 = vmatpush1.xpose.msra.mxu0 0.0
  %5054 = vmatprep.subr.mxu0 0.0
  %5055 = vmatpush1.xpose.msra.mxu0 0.0
  %5056 = vmatprep.subr.mxu0 0.0
  %5057 = vmatpush1.xpose.msra.mxu0 0.0
  %5058 = vmatprep.subr.mxu0 0.0
  %5059 = vmatpush1.xpose.msra.mxu0 0.0
  %5060 = vmatprep.subr.mxu0 0.0
  %5061 = vmatpush1.xpose.msra.mxu0 0.0
  %5062 = vmatprep.subr.mxu0 0.0
  %5063 = vmatpush1.xpose.msra.mxu0 0.0
  %5064 = vmatprep.subr.mxu0 0.0
  %5065 = vmatpush1.xpose.msra.mxu0 0.0
  %5066 = vmatprep.subr.mxu0 0.0
  %5067 = vmatpush1.xpose.msra.mxu0 0.0
  %5068 = vmatprep.subr.mxu0 0.0
  %5069 = vmatpush1.xpose.msra.mxu0 0.0
  %5070 = vmatprep.subr.mxu0 0.0
  %5071 = vmatpush1.xpose.msra.mxu0 0.0
  %5072 = vmatprep.subr.mxu0 0.0
  %5073 = vmatpush1.xpose.msra.mxu0 0.0
  %5074 = vmatprep.subr.mxu0 0.0
  %5075 = vmatpush1.xpose.msra.mxu0 0.0
  %5076 = vmatprep.subr.mxu0 0.0
  %5077 = vmatpush1.xpose.msra.mxu0 0.0
  %5078 = vmatprep.subr.mxu0 0.0
  %5079 = vmatpush1.xpose.msra.mxu0 0.0
  %5080 = vmatprep.subr.mxu0 0.0
  %5081 = vmatpush1.xpose.msra.mxu0 0.0
  %5082 = vmatprep.subr.mxu0 %v4672
  %5083 = vmatpush1.xpose.msra.mxu0 %v4671
  %5084 = vmatprep.subr.mxu0 0.0
  %5085 = vmatpush2.xpose.msra.mxu0 0.0
  %5086 = vmatprep.subr.mxu0 0.0
  %5087 = vmatpush2.xpose.msra.mxu0 0.0
  %5088 = vmatprep.subr.mxu0 0.0
  %5089 = vmatpush2.xpose.msra.mxu0 0.0
  %5090 = vmatprep.subr.mxu0 0.0
  %5091 = vmatpush2.xpose.msra.mxu0 0.0
  %5092 = vmatprep.subr.mxu0 0.0
  %5093 = vmatpush2.xpose.msra.mxu0 0.0
  %5094 = vmatprep.subr.mxu0 0.0
  %5095 = vmatpush2.xpose.msra.mxu0 0.0
  %5096 = vmatprep.subr.mxu0 0.0
  %5097 = vmatpush2.xpose.msra.mxu0 0.0
  %5098 = vmatprep.subr.mxu0 0.0
  %5099 = vmatpush2.xpose.msra.mxu0 0.0
  %5100 = vmatprep.subr.mxu0 0.0
  %5101 = vmatpush2.xpose.msra.mxu0 0.0
  %5102 = vmatprep.subr.mxu0 0.0
  %5103 = vmatpush2.xpose.msra.mxu0 0.0
  %5104 = vmatprep.subr.mxu0 0.0
  %5105 = vmatpush2.xpose.msra.mxu0 0.0
  %5106 = vmatprep.subr.mxu0 0.0
  %5107 = vmatpush2.xpose.msra.mxu0 0.0
  %5108 = vmatprep.subr.mxu0 0.0
  %5109 = vmatpush2.xpose.msra.mxu0 0.0
  %5110 = vmatprep.subr.mxu0 0.0
  %5111 = vmatpush2.xpose.msra.mxu0 0.0
  %5112 = vmatprep.subr.mxu0 0.0
  %5113 = vmatpush2.xpose.msra.mxu0 0.0
  %5114 = vmatprep.subr.mxu0 0.0
  %5115 = vmatpush2.xpose.msra.mxu0 0.0
  %5116 = vmatprep.mubr.f32.mxu0 %v4640
  %5117 = vmatmul.mubr.f32.gmra.mxu0 %v4639
  %v5118 = vpop.f32.mrf.mxu0
  %v5119 = vadd.f32 %v5044, %v5118
  %v5120 = vpop.f32.mrf.mxu0
  %5121 = vmatprep.mubr.f32.mxu0 %v4656
  %5122 = vmatmul.mubr.f32.gmra.mxu0 %v4655
  %v5123 = vpop.f32.mrf.mxu0
  %v5124 = vadd.f32 %v5049, %v5123
  %v5125 = vpop.f32.mrf.mxu0
  %5126 = vdwg.mxu0
  %5127 = vmatprep.subr.mxu0 0.0
  %5128 = vmatpush1.xpose.msra.mxu0 0.0
  %5129 = vmatprep.subr.mxu0 0.0
  %5130 = vmatpush1.xpose.msra.mxu0 0.0
  %5131 = vmatprep.subr.mxu0 0.0
  %5132 = vmatpush1.xpose.msra.mxu0 0.0
  %5133 = vmatprep.subr.mxu0 0.0
  %5134 = vmatpush1.xpose.msra.mxu0 0.0
  %5135 = vmatprep.subr.mxu0 0.0
  %5136 = vmatpush1.xpose.msra.mxu0 0.0
  %5137 = vmatprep.subr.mxu0 0.0
  %5138 = vmatpush1.xpose.msra.mxu0 0.0
  %5139 = vmatprep.subr.mxu0 0.0
  %5140 = vmatpush1.xpose.msra.mxu0 0.0
  %5141 = vmatprep.subr.mxu0 0.0
  %5142 = vmatpush1.xpose.msra.mxu0 0.0
  %5143 = vmatprep.subr.mxu0 0.0
  %5144 = vmatpush1.xpose.msra.mxu0 0.0
  %5145 = vmatprep.subr.mxu0 0.0
  %5146 = vmatpush1.xpose.msra.mxu0 0.0
  %5147 = vmatprep.subr.mxu0 0.0
  %5148 = vmatpush1.xpose.msra.mxu0 0.0
  %5149 = vmatprep.subr.mxu0 0.0
  %5150 = vmatpush1.xpose.msra.mxu0 0.0
  %5151 = vmatprep.subr.mxu0 0.0
  %5152 = vmatpush1.xpose.msra.mxu0 0.0
  %5153 = vmatprep.subr.mxu0 0.0
  %5154 = vmatpush1.xpose.msra.mxu0 0.0
  %5155 = vmatprep.subr.mxu0 0.0
  %5156 = vmatpush1.xpose.msra.mxu0 0.0
  %5157 = vmatprep.subr.mxu0 %v4674
  %5158 = vmatpush1.xpose.msra.mxu0 %v4673
  %5159 = vmatprep.subr.mxu0 0.0
  %5160 = vmatpush2.xpose.msra.mxu0 0.0
  %5161 = vmatprep.subr.mxu0 0.0
  %5162 = vmatpush2.xpose.msra.mxu0 0.0
  %5163 = vmatprep.subr.mxu0 0.0
  %5164 = vmatpush2.xpose.msra.mxu0 0.0
  %5165 = vmatprep.subr.mxu0 0.0
  %5166 = vmatpush2.xpose.msra.mxu0 0.0
  %5167 = vmatprep.subr.mxu0 0.0
  %5168 = vmatpush2.xpose.msra.mxu0 0.0
  %5169 = vmatprep.subr.mxu0 0.0
  %5170 = vmatpush2.xpose.msra.mxu0 0.0
  %5171 = vmatprep.subr.mxu0 0.0
  %5172 = vmatpush2.xpose.msra.mxu0 0.0
  %5173 = vmatprep.subr.mxu0 0.0
  %5174 = vmatpush2.xpose.msra.mxu0 0.0
  %5175 = vmatprep.subr.mxu0 0.0
  %5176 = vmatpush2.xpose.msra.mxu0 0.0
  %5177 = vmatprep.subr.mxu0 0.0
  %5178 = vmatpush2.xpose.msra.mxu0 0.0
  %5179 = vmatprep.subr.mxu0 0.0
  %5180 = vmatpush2.xpose.msra.mxu0 0.0
  %5181 = vmatprep.subr.mxu0 0.0
  %5182 = vmatpush2.xpose.msra.mxu0 0.0
  %5183 = vmatprep.subr.mxu0 0.0
  %5184 = vmatpush2.xpose.msra.mxu0 0.0
  %5185 = vmatprep.subr.mxu0 0.0
  %5186 = vmatpush2.xpose.msra.mxu0 0.0
  %5187 = vmatprep.subr.mxu0 0.0
  %5188 = vmatpush2.xpose.msra.mxu0 0.0
  %5189 = vmatprep.subr.mxu0 0.0
  %5190 = vmatpush2.xpose.msra.mxu0 0.0
  %5191 = vmatprep.mubr.f32.mxu0 %v4642
  %5192 = vmatmul.mubr.f32.gmra.mxu0 %v4641
  %v5193 = vpop.f32.mrf.mxu0
  %v5194 = vadd.f32 %v5119, %v5193
  %v5195 = vpop.f32.mrf.mxu0
  %5196 = vmatprep.mubr.f32.mxu0 %v4658
  %5197 = vmatmul.mubr.f32.gmra.mxu0 %v4657
  %v5198 = vpop.f32.mrf.mxu0
  %v5199 = vadd.f32 %v5124, %v5198
  %v5200 = vpop.f32.mrf.mxu0
  %5201 = vdwg.mxu0
  %5202 = vmatprep.subr.mxu0 0.0
  %5203 = vmatpush1.xpose.msra.mxu0 0.0
  %5204 = vmatprep.subr.mxu0 0.0
  %5205 = vmatpush1.xpose.msra.mxu0 0.0
  %5206 = vmatprep.subr.mxu0 0.0
  %5207 = vmatpush1.xpose.msra.mxu0 0.0
  %5208 = vmatprep.subr.mxu0 0.0
  %5209 = vmatpush1.xpose.msra.mxu0 0.0
  %5210 = vmatprep.subr.mxu0 0.0
  %5211 = vmatpush1.xpose.msra.mxu0 0.0
  %5212 = vmatprep.subr.mxu0 0.0
  %5213 = vmatpush1.xpose.msra.mxu0 0.0
  %5214 = vmatprep.subr.mxu0 0.0
  %5215 = vmatpush1.xpose.msra.mxu0 0.0
  %5216 = vmatprep.subr.mxu0 0.0
  %5217 = vmatpush1.xpose.msra.mxu0 0.0
  %5218 = vmatprep.subr.mxu0 0.0
  %5219 = vmatpush1.xpose.msra.mxu0 0.0
  %5220 = vmatprep.subr.mxu0 0.0
  %5221 = vmatpush1.xpose.msra.mxu0 0.0
  %5222 = vmatprep.subr.mxu0 0.0
  %5223 = vmatpush1.xpose.msra.mxu0 0.0
  %5224 = vmatprep.subr.mxu0 0.0
  %5225 = vmatpush1.xpose.msra.mxu0 0.0
  %5226 = vmatprep.subr.mxu0 0.0
  %5227 = vmatpush1.xpose.msra.mxu0 0.0
  %5228 = vmatprep.subr.mxu0 0.0
  %5229 = vmatpush1.xpose.msra.mxu0 0.0
  %5230 = vmatprep.subr.mxu0 0.0
  %5231 = vmatpush1.xpose.msra.mxu0 0.0
  %5232 = vmatprep.subr.mxu0 %v4676
  %5233 = vmatpush1.xpose.msra.mxu0 %v4675
  %5234 = vmatprep.subr.mxu0 0.0
  %5235 = vmatpush2.xpose.msra.mxu0 0.0
  %5236 = vmatprep.subr.mxu0 0.0
  %5237 = vmatpush2.xpose.msra.mxu0 0.0
  %5238 = vmatprep.subr.mxu0 0.0
  %5239 = vmatpush2.xpose.msra.mxu0 0.0
  %5240 = vmatprep.subr.mxu0 0.0
  %5241 = vmatpush2.xpose.msra.mxu0 0.0
  %5242 = vmatprep.subr.mxu0 0.0
  %5243 = vmatpush2.xpose.msra.mxu0 0.0
  %5244 = vmatprep.subr.mxu0 0.0
  %5245 = vmatpush2.xpose.msra.mxu0 0.0
  %5246 = vmatprep.subr.mxu0 0.0
  %5247 = vmatpush2.xpose.msra.mxu0 0.0
  %5248 = vmatprep.subr.mxu0 0.0
  %5249 = vmatpush2.xpose.msra.mxu0 0.0
  %5250 = vmatprep.subr.mxu0 0.0
  %5251 = vmatpush2.xpose.msra.mxu0 0.0
  %5252 = vmatprep.subr.mxu0 0.0
  %5253 = vmatpush2.xpose.msra.mxu0 0.0
  %5254 = vmatprep.subr.mxu0 0.0
  %5255 = vmatpush2.xpose.msra.mxu0 0.0
  %5256 = vmatprep.subr.mxu0 0.0
  %5257 = vmatpush2.xpose.msra.mxu0 0.0
  %5258 = vmatprep.subr.mxu0 0.0
  %5259 = vmatpush2.xpose.msra.mxu0 0.0
  %5260 = vmatprep.subr.mxu0 0.0
  %5261 = vmatpush2.xpose.msra.mxu0 0.0
  %5262 = vmatprep.subr.mxu0 0.0
  %5263 = vmatpush2.xpose.msra.mxu0 0.0
  %5264 = vmatprep.subr.mxu0 0.0
  %5265 = vmatpush2.xpose.msra.mxu0 0.0
  %5266 = vmatprep.mubr.f32.mxu0 %v4644
  %5267 = vmatmul.mubr.f32.gmra.mxu0 %v4643
  %v5268 = vpop.f32.mrf.mxu0
  %v5269 = vadd.f32 %v5194, %v5268
  %v5270 = vpop.f32.mrf.mxu0
  %5271 = vmatprep.mubr.f32.mxu0 %v4660
  %5272 = vmatmul.mubr.f32.gmra.mxu0 %v4659
  %v5273 = vpop.f32.mrf.mxu0
  %v5274 = vadd.f32 %v5199, %v5273
  %v5275 = vpop.f32.mrf.mxu0
  %5276 = vdwg.mxu0
  %v5277 = vsel %vm48, %v5269, 0.0
  %5278 = vadd.xlane.f32.xlu0 %v5277
  %v5279 = vpop.xlane.xlu0 %5278
  %v5280 = vsel %vm48, %v5274, 0.0
  %5281 = vadd.xlane.f32.xlu0 %v5280
  %v5282 = vpop.xlane.xlu0 %5281
  %v5283 = vmul.f32 %v5279, %v3922
  %v5284 = vmul.f32 %v5282, %v3922
  %v5285 = vsub.f32 %v5269, %v5283
  %v5286 = vsub.f32 %v5274, %v5284
  %v5287 = vmul.f32 %v5285, %v5285
  %v5288 = vmul.f32 %v5286, %v5286
  %v5289 = vsel %vm48, %v5287, 0.0
  %5290 = vadd.xlane.f32.xlu0 %v5289
  %v5291 = vpop.xlane.xlu0 %5290
  %v5292 = vsel %vm48, %v5288, 0.0
  %5293 = vadd.xlane.f32.xlu0 %v5292
  %v5294 = vpop.xlane.xlu0 %5293
  %v5295 = vmul.f32 %v5291, %v3922
  %v5296 = vmul.f32 %v5294, %v3922
  %v5297 = vadd.f32 %v5295, 1e-05
  %v5298 = vadd.f32 %v5296, 1e-05
  %v5299 = vrsqrt.pop %v5297
  %v5300 = vrsqrt.pop %v5298
  %v5301 = vmul.f32 %v5285, %v5299
  %v5302 = vmul.f32 %v5286, %v5300
  %5303 = vst.msk [vmem:[%s5] sm:$0xff] %vm48, %v5301
  %5304 = vst.msk [vmem:[%s5 + $0x8] sm:$0xff] %vm48, %v5302
  // Predicated region
  $region22: #{encoder_layer.1} parent=0 // pred_check
    _
  $region23: #{encoder_layer.1} parent=0 // pred_check_branch
    %5306 = sbr.rel (0) target = $region25
  $region24: #{encoder_layer.1} parent=0 // pred_region
    _
  $region25: #{encoder_layer.1} parent=0 // pred_fallthru
    _
  // Predicated region
  $region26: #{encoder_layer.1} parent=0 // pred_check
    _
  $region27: #{encoder_layer.1} parent=0 // pred_check_branch
    %5308 = sbr.rel (0) target = $region29
  $region28: #{encoder_layer.1} parent=0 // pred_region
    _
  $region29: #{encoder_layer.1} parent=0 // pred_fallthru
    _
  // Predicated region
  $region30: #{encoder_layer.1} parent=0 // pred_check
    _
  $region31: #{encoder_layer.1} parent=0 // pred_check_branch
    %5310 = sbr.rel (0) target = $region33
  $region32: #{encoder_layer.1} parent=0 // pred_region
    _
  $region33: #{encoder_layer.1} parent=0 // pred_fallthru
    _
  // Predicated region
  $region34: #{encoder_layer.1} parent=0 // pred_check
    _
  $region35: #{encoder_layer.1} parent=0 // pred_check_branch
    %5312 = sbr.rel (0) target = $region37
  $region36: #{encoder_layer.1} parent=0 // pred_region
    _
  $region37: #{encoder_layer.1} parent=0 // pred_fallthru
    _

</llo_original>
